<compile_context>
chip_gen: v7x
topology: tpu7x:2x2x1
jax: 0.10.0
libtpu: 0.0.40
codegen_flags: <defaults>
</compile_context>

<pallas_src>
import math

import jax
import jax.numpy as jnp
from jax.experimental import pallas as pl
from jax.experimental.pallas import tpu as pltpu

LATENT_DIM = 512
N_LAYERS = 4
LR_MUL = 0.01
NEG_SLOPE = 0.2
FLRELU_SCALE = math.sqrt(2.0)
TB_DEFAULT = 128  # batch tile (rows per grid step)


def _mapper_kernel(x_ref, w_ref, b_ref, o_ref):
    # x_ref: [TB, D] fp32     w_ref: [4, D, D] bf16 (pre-scaled, [in,out])
    # b_ref: [4, 1, D] fp32 (already * lr_mul)      o_ref: [TB, D] fp32
    x = x_ref[...].astype(jnp.float32)

    # PixelNorm over the feature dim.
    msq = jnp.mean(x * x, axis=-1, keepdims=True)
    x = x * jax.lax.rsqrt(msq + 1e-8)

    # 4x EqualLinear + fused leaky relu.  bf16 MXU operands, fp32 accumulate,
    # fp32 elementwise epilogue with folded constants.
    pos = jnp.float32(FLRELU_SCALE)
    neg = jnp.float32(NEG_SLOPE * FLRELU_SCALE)
    for l in range(N_LAYERS):
        y = jnp.dot(x.astype(jnp.bfloat16), w_ref[l],
                    preferred_element_type=jnp.float32)
        y = y + b_ref[l]
        x = jnp.where(y >= 0.0, pos * y, neg * y)

    o_ref[...] = x.astype(o_ref.dtype)


def single_mapper_forward(x, w_stacked, b_stacked, *, tb=TB_DEFAULT):
    """x: [B, D] f32.  w_stacked: [4, D, D] bf16 (pre-scaled, [in,out]).
    b_stacked: [4, 1, D] f32 (bias * lr_mul).  Returns [B, D] f32."""
    B, D = x.shape

    # Pad batch to a multiple of the batch tile (fills sublanes / MXU rows).
    n_tiles = max(1, pl.cdiv(B, tb))
    Bp = n_tiles * tb
    if Bp != B:
        x = jnp.pad(x, ((0, Bp - B), (0, 0)))

    out = pl.pallas_call(
        _mapper_kernel,
        out_shape=jax.ShapeDtypeStruct((Bp, D), jnp.float32),
        grid=(n_tiles,),
        in_specs=[
            pl.BlockSpec((tb, D), lambda i: (i, 0)),                 # activations: tiled over batch
            pl.BlockSpec((N_LAYERS, D, D), lambda i: (0, 0, 0)),     # weights: resident across steps
            pl.BlockSpec((N_LAYERS, 1, D), lambda i: (0, 0, 0)),     # biases: resident across steps
        ],
        out_specs=pl.BlockSpec((tb, D), lambda i: (i, 0)),
        compiler_params=pltpu.CompilerParams(
            dimension_semantics=("parallel",)),                       # shards across TCs on v7x
    )(x, w_stacked, b_stacked)

    return out[:B]


def init_params(key, latent_dim=LATENT_DIM, lr_mul=LR_MUL):
    """Deterministic synthetic init mirroring EqualLinear.__init__ shapes."""
    scale = (1.0 / math.sqrt(latent_dim)) * lr_mul
    ws, bs = [], []
    for i in range(N_LAYERS):
        k = jax.random.fold_in(key, i)
        # stored parameter: randn(out, in) / lr_mul
        w_stored = jax.random.normal(k, (latent_dim, latent_dim), jnp.float32) / lr_mul
        # effective weight used in F.linear: W * scale ; transpose to [in, out];
        # store in bf16 (halves HBM traffic; fp32 accumulation in-kernel).
        w_eff = (w_stored * scale).T.astype(jnp.bfloat16)
        # bias_init = 0; effective bias = bias * lr_mul
        b_eff = jnp.zeros((1, latent_dim), jnp.float32) * lr_mul
        ws.append(w_eff)
        bs.append(b_eff)
    return jnp.stack(ws, axis=0), jnp.stack(bs, axis=0)


def _reference(x, w_stacked, b_stacked):
    """Pure-JAX reference with the same bf16-operand / fp32-accumulate math."""
    x = x * jax.lax.rsqrt(jnp.mean(x * x, axis=-1, keepdims=True) + 1e-8)
    for l in range(N_LAYERS):
        y = jnp.dot(x.astype(jnp.bfloat16), w_stacked[l],
                    preferred_element_type=jnp.float32) + b_stacked[l]
        x = jnp.where(y >= 0.0, FLRELU_SCALE * y, (NEG_SLOPE * FLRELU_SCALE) * y)
    return x


if __name__ == "__main__":
    key = jax.random.PRNGKey(0)
    kx, kp = jax.random.split(key)

    B = 2
    x = jax.random.normal(kx, (B, LATENT_DIM), jnp.float32)

    w_stacked, b_stacked = init_params(kp)

    out = single_mapper_forward(x, w_stacked, b_stacked)
    out = jax.block_until_ready(out)

    ref = _reference(x, w_stacked, b_stacked)
    assert out.shape == (B, LATENT_DIM)
    assert jnp.allclose(out, ref, atol=2e-3, rtol=2e-3), (
        float(jnp.max(jnp.abs(out - ref))))

    print("KERNEL_OK")
</pallas_src>

<mosaic_0001>
module attributes {stable_mosaic.version = 11 : i64} {
  func.func @_mapper_kernel(%arg0: i32, %arg1: memref<128x512xf32, #tpu.memory_space<vmem>>, %arg2: memref<4x512x512xbf16, #tpu.memory_space<vmem>>, %arg3: memref<4x1x512xf32, #tpu.memory_space<vmem>>, %arg4: memref<128x512xf32, #tpu.memory_space<vmem>>) attributes {dimension_semantics = [#tpu.dimension_semantics<parallel>], iteration_bounds = array<i64: 1>, scalar_prefetch = 0 : i64, scratch_operands = 0 : i64, tpu.core_type = #tpu.core_type<tc>, window_params = [{transform_indices = @transform_0, window_bounds = array<i64: 128, 512>}, {pipeline_mode = #tpu.pipeline_mode<synchronous>, transform_indices = @transform_1, window_bounds = array<i64: 4, 512, 512>}, {pipeline_mode = #tpu.pipeline_mode<synchronous>, transform_indices = @transform_2, window_bounds = array<i64: 4, 1, 512>}, {transform_indices = @transform_3, window_bounds = array<i64: 128, 512>}]} {
    %c0 = arith.constant 0 : index
    %c0_0 = arith.constant 0 : index
    %0 = vector.load %arg1[%c0, %c0_0] : memref<128x512xf32, #tpu.memory_space<vmem>>, vector<128x512xf32>
    %1 = arith.mulf %0, %0 : vector<128x512xf32>
    %cst = arith.constant dense<0.000000e+00> : vector<128xf32>
    %2 = vector.multi_reduction <add>, %1, %cst [1] : vector<128x512xf32> to vector<128xf32>
    %3 = vector.shape_cast %2 : vector<128xf32> to vector<128x1xf32>
    %cst_1 = arith.constant 5.120000e+02 : f32
    %4 = vector.broadcast %cst_1 : f32 to vector<128x1xf32>
    %5 = arith.divf %3, %4 : vector<128x1xf32>
    %cst_2 = arith.constant 9.99999993E-9 : f32
    %6 = vector.broadcast %cst_2 : f32 to vector<128x1xf32>
    %7 = arith.addf %5, %6 : vector<128x1xf32>
    %8 = math.rsqrt %7 : vector<128x1xf32>
    %9 = vector.broadcast %8 : vector<128x1xf32> to vector<128x512xf32>
    %10 = arith.mulf %0, %9 : vector<128x512xf32>
    %11 = arith.truncf %10 : vector<128x512xf32> to vector<128x512xbf16>
    %c0_3 = arith.constant 0 : index
    %c0_4 = arith.constant 0 : index
    %c0_5 = arith.constant 0 : index
    %12 = vector.load %arg2[%c0_3, %c0_4, %c0_5] : memref<4x512x512xbf16, #tpu.memory_space<vmem>>, vector<1x512x512xbf16>
    %13 = vector.shape_cast %12 : vector<1x512x512xbf16> to vector<512x512xbf16>
    %cst_6 = arith.constant dense<0.000000e+00> : vector<128x512xf32>
    %14 = tpu.matmul %11, %13, %cst_6 {dimension_numbers = #tpu.dot_dimension_numbers<[1], [0], [0], [1], [0, 0, 1, 1], [], []>} : vector<128x512xbf16>, vector<512x512xbf16>, vector<128x512xf32> -> vector<128x512xf32>
    %c0_7 = arith.constant 0 : index
    %c0_8 = arith.constant 0 : index
    %c0_9 = arith.constant 0 : index
    %15 = vector.load %arg3[%c0_7, %c0_8, %c0_9] : memref<4x1x512xf32, #tpu.memory_space<vmem>>, vector<1x1x512xf32>
    %16 = vector.shape_cast %15 : vector<1x1x512xf32> to vector<1x512xf32>
    %17 = vector.broadcast %16 : vector<1x512xf32> to vector<128x512xf32>
    %18 = arith.addf %14, %17 : vector<128x512xf32>
    %cst_10 = arith.constant 0.000000e+00 : f32
    %19 = vector.broadcast %cst_10 : f32 to vector<128x512xf32>
    %20 = arith.cmpf oge, %18, %19 : vector<128x512xf32>
    %cst_11 = arith.constant 1.41421354 : f32
    %21 = vector.broadcast %cst_11 : f32 to vector<128x512xf32>
    %22 = arith.mulf %21, %18 : vector<128x512xf32>
    %cst_12 = arith.constant 0.282842726 : f32
    %23 = vector.broadcast %cst_12 : f32 to vector<128x512xf32>
    %24 = arith.mulf %23, %18 : vector<128x512xf32>
    %25 = arith.select %20, %22, %24 : vector<128x512xi1>, vector<128x512xf32>
    %26 = arith.truncf %25 : vector<128x512xf32> to vector<128x512xbf16>
    %c1 = arith.constant 1 : index
    %c0_13 = arith.constant 0 : index
    %c0_14 = arith.constant 0 : index
    %27 = vector.load %arg2[%c1, %c0_13, %c0_14] : memref<4x512x512xbf16, #tpu.memory_space<vmem>>, vector<1x512x512xbf16>
    %28 = vector.shape_cast %27 : vector<1x512x512xbf16> to vector<512x512xbf16>
    %cst_15 = arith.constant dense<0.000000e+00> : vector<128x512xf32>
    %29 = tpu.matmul %26, %28, %cst_15 {dimension_numbers = #tpu.dot_dimension_numbers<[1], [0], [0], [1], [0, 0, 1, 1], [], []>} : vector<128x512xbf16>, vector<512x512xbf16>, vector<128x512xf32> -> vector<128x512xf32>
    %c1_16 = arith.constant 1 : index
    %c0_17 = arith.constant 0 : index
    %c0_18 = arith.constant 0 : index
    %30 = vector.load %arg3[%c1_16, %c0_17, %c0_18] : memref<4x1x512xf32, #tpu.memory_space<vmem>>, vector<1x1x512xf32>
    %31 = vector.shape_cast %30 : vector<1x1x512xf32> to vector<1x512xf32>
    %32 = vector.broadcast %31 : vector<1x512xf32> to vector<128x512xf32>
    %33 = arith.addf %29, %32 : vector<128x512xf32>
    %cst_19 = arith.constant 0.000000e+00 : f32
    %34 = vector.broadcast %cst_19 : f32 to vector<128x512xf32>
    %35 = arith.cmpf oge, %33, %34 : vector<128x512xf32>
    %cst_20 = arith.constant 1.41421354 : f32
    %36 = vector.broadcast %cst_20 : f32 to vector<128x512xf32>
    %37 = arith.mulf %36, %33 : vector<128x512xf32>
    %cst_21 = arith.constant 0.282842726 : f32
    %38 = vector.broadcast %cst_21 : f32 to vector<128x512xf32>
    %39 = arith.mulf %38, %33 : vector<128x512xf32>
    %40 = arith.select %35, %37, %39 : vector<128x512xi1>, vector<128x512xf32>
    %41 = arith.truncf %40 : vector<128x512xf32> to vector<128x512xbf16>
    %c2 = arith.constant 2 : index
    %c0_22 = arith.constant 0 : index
    %c0_23 = arith.constant 0 : index
    %42 = vector.load %arg2[%c2, %c0_22, %c0_23] : memref<4x512x512xbf16, #tpu.memory_space<vmem>>, vector<1x512x512xbf16>
    %43 = vector.shape_cast %42 : vector<1x512x512xbf16> to vector<512x512xbf16>
    %cst_24 = arith.constant dense<0.000000e+00> : vector<128x512xf32>
    %44 = tpu.matmul %41, %43, %cst_24 {dimension_numbers = #tpu.dot_dimension_numbers<[1], [0], [0], [1], [0, 0, 1, 1], [], []>} : vector<128x512xbf16>, vector<512x512xbf16>, vector<128x512xf32> -> vector<128x512xf32>
    %c2_25 = arith.constant 2 : index
    %c0_26 = arith.constant 0 : index
    %c0_27 = arith.constant 0 : index
    %45 = vector.load %arg3[%c2_25, %c0_26, %c0_27] : memref<4x1x512xf32, #tpu.memory_space<vmem>>, vector<1x1x512xf32>
    %46 = vector.shape_cast %45 : vector<1x1x512xf32> to vector<1x512xf32>
    %47 = vector.broadcast %46 : vector<1x512xf32> to vector<128x512xf32>
    %48 = arith.addf %44, %47 : vector<128x512xf32>
    %cst_28 = arith.constant 0.000000e+00 : f32
    %49 = vector.broadcast %cst_28 : f32 to vector<128x512xf32>
    %50 = arith.cmpf oge, %48, %49 : vector<128x512xf32>
    %cst_29 = arith.constant 1.41421354 : f32
    %51 = vector.broadcast %cst_29 : f32 to vector<128x512xf32>
    %52 = arith.mulf %51, %48 : vector<128x512xf32>
    %cst_30 = arith.constant 0.282842726 : f32
    %53 = vector.broadcast %cst_30 : f32 to vector<128x512xf32>
    %54 = arith.mulf %53, %48 : vector<128x512xf32>
    %55 = arith.select %50, %52, %54 : vector<128x512xi1>, vector<128x512xf32>
    %56 = arith.truncf %55 : vector<128x512xf32> to vector<128x512xbf16>
    %c3 = arith.constant 3 : index
    %c0_31 = arith.constant 0 : index
    %c0_32 = arith.constant 0 : index
    %57 = vector.load %arg2[%c3, %c0_31, %c0_32] : memref<4x512x512xbf16, #tpu.memory_space<vmem>>, vector<1x512x512xbf16>
    %58 = vector.shape_cast %57 : vector<1x512x512xbf16> to vector<512x512xbf16>
    %cst_33 = arith.constant dense<0.000000e+00> : vector<128x512xf32>
    %59 = tpu.matmul %56, %58, %cst_33 {dimension_numbers = #tpu.dot_dimension_numbers<[1], [0], [0], [1], [0, 0, 1, 1], [], []>} : vector<128x512xbf16>, vector<512x512xbf16>, vector<128x512xf32> -> vector<128x512xf32>
    %c3_34 = arith.constant 3 : index
    %c0_35 = arith.constant 0 : index
    %c0_36 = arith.constant 0 : index
    %60 = vector.load %arg3[%c3_34, %c0_35, %c0_36] : memref<4x1x512xf32, #tpu.memory_space<vmem>>, vector<1x1x512xf32>
    %61 = vector.shape_cast %60 : vector<1x1x512xf32> to vector<1x512xf32>
    %62 = vector.broadcast %61 : vector<1x512xf32> to vector<128x512xf32>
    %63 = arith.addf %59, %62 : vector<128x512xf32>
    %cst_37 = arith.constant 0.000000e+00 : f32
    %64 = vector.broadcast %cst_37 : f32 to vector<128x512xf32>
    %65 = arith.cmpf oge, %63, %64 : vector<128x512xf32>
    %cst_38 = arith.constant 1.41421354 : f32
    %66 = vector.broadcast %cst_38 : f32 to vector<128x512xf32>
    %67 = arith.mulf %66, %63 : vector<128x512xf32>
    %cst_39 = arith.constant 0.282842726 : f32
    %68 = vector.broadcast %cst_39 : f32 to vector<128x512xf32>
    %69 = arith.mulf %68, %63 : vector<128x512xf32>
    %70 = arith.select %65, %67, %69 : vector<128x512xi1>, vector<128x512xf32>
    %c0_40 = arith.constant 0 : index
    %c0_41 = arith.constant 0 : index
    %71 = vector.load %arg4[%c0_40, %c0_41] : memref<128x512xf32, #tpu.memory_space<vmem>>, vector<128x512xf32>
    tpu.vector_store %arg4[%c0_40, %c0_41], %70 {strides = array<i32>} : memref<128x512xf32, #tpu.memory_space<vmem>>, vector<128x512xf32>,
    return
  }
  func.func @transform_0(%arg0: i32) -> (i32, i32) {
    %c0_i32 = arith.constant 0 : i32
    %c0_i32_0 = arith.constant 0 : i32
    return %arg0, %c0_i32 : i32, i32
  }
  func.func @transform_1(%arg0: i32) -> (i32, i32, i32) {
    %c0_i32 = arith.constant 0 : i32
    %c0_i32_0 = arith.constant 0 : i32
    %c0_i32_1 = arith.constant 0 : i32
    %c0_i32_2 = arith.constant 0 : i32
    return %c0_i32, %c0_i32_0, %c0_i32_1 : i32, i32, i32
  }
  func.func @transform_2(%arg0: i32) -> (i32, i32, i32) {
    %c0_i32 = arith.constant 0 : i32
    %c0_i32_0 = arith.constant 0 : i32
    %c0_i32_1 = arith.constant 0 : i32
    %c0_i32_2 = arith.constant 0 : i32
    return %c0_i32, %c0_i32_0, %c0_i32_1 : i32, i32, i32
  }
  func.func @transform_3(%arg0: i32) -> (i32, i32) {
    %c0_i32 = arith.constant 0 : i32
    %c0_i32_0 = arith.constant 0 : i32
    return %arg0, %c0_i32 : i32, i32
  }
}

</mosaic_0001>

<llo_original>
// kernel: tpu_custom_call.1
$region0: #{tpu_custom_call.1}
  #allocation0 [shape = 'u32[]', space=smem, size = 0x4, offset = 0x4, fixed_abs, tag = 'smem constant byte address 0x4 - core index']
  #allocation1 [shape = 'u32[144,128]{1,0:T(1,128)}', space=vmem, size = 0x12000, scoped, tag = 'internal scratch']
  %s0 = inlined_call_operand.hbm [shape: f32[128,512], index: 0, kind: input, shape index: {}]
  %s1 = inlined_call_operand.hbm [shape: bf16[4,512,512], index: 1, kind: input, shape index: {}]
  %s2 = inlined_call_operand.hbm [shape: f32[4,1,512], index: 2, kind: input, shape index: {}]
  %s3 = inlined_call_operand.hbm [shape: f32[128,512], index: 3, kind: output, shape index: {}]
  %s4 = sld [smem:[#allocation0]]
  $region34: #{tpu_custom_call.1} parent=0
    _
  %s6 = ssub.s32 1, %s4
  %s7 = scalar_select 0, %s6, %s4
  $region1: #{tpu_custom_call.1} parent=0
    #allocation2 [shape = 'u8[262144]{0}', space=vmem, size = 0x40000, scoped, tag = 'input window, operand 0, single buffered']
    #allocation3 [shape = 's32[1]{0}', space=sflag, size = 0x4, scoped, tag = 'scoped memory for tpu_custom_call.1']
    #allocation4 [shape = 's32[1]{0}', space=sflag, size = 0x4, scoped, tag = 'scoped memory for tpu_custom_call.1']
    #allocation5 [shape = 'u8[2097152]{0}', space=vmem, size = 0x200000, scoped, tag = 'input window, operand 1, single buffered']
    #allocation6 [shape = 's32[1]{0}', space=sflag, size = 0x4, scoped, tag = 'scoped memory for tpu_custom_call.1']
    #allocation7 [shape = 'u8[8192]{0}', space=vmem, size = 0x2000, scoped, tag = 'input window, operand 2, single buffered']
    #allocation8 [shape = 'u8[262144]{0}', space=vmem, size = 0x40000, scoped, tag = 'output window, operand 0, single buffered']
    %8 = vsyncpa [#allocation3], 0
    %9 = vsyncpa [#allocation6], 0
    %10 = vsyncpa [#allocation4], 0
    // Predicated region
    $region2: #{tpu_custom_call.1} parent=1 // pred_check
      _
    $region3: #{tpu_custom_call.1} parent=1 // pred_check_branch
      %12 = sbr.rel (0) target = $region5
    $region4: #{tpu_custom_call.1} parent=1 // pred_region
      %s14 = ssub.s32 8192, 8192
      %15 = vsyncadd [#allocation3], %s14
      %s16 = sshll.u32 [#allocation2], 4
      %s17 = int_to_ptr.vmem [resolvable:$true] %s16
      %22 = dma.hbm_to_vmem [thread:$0]  %s0, 8192, %s17, [#allocation3], 512, 512, 32
    $region5: #{tpu_custom_call.1} parent=1 // pred_fallthru
      _
    // Predicated region
    $region6: #{tpu_custom_call.1} parent=1 // pred_check
      _
    $region7: #{tpu_custom_call.1} parent=1 // pred_check_branch
      %24 = sbr.rel (0) target = $region9
    $region8: #{tpu_custom_call.1} parent=1 // pred_region
      %s26 = ssub.s32 65536, 65536
      %27 = vsyncadd [#allocation6], %s26
      %s28 = sshll.u32 [#allocation5], 4
      %s29 = int_to_ptr.vmem [resolvable:$true] %s28
      %34 = dma.hbm_to_vmem [thread:$0]  %s1, 65536, %s29, [#allocation6], 256, 256, 16
    $region9: #{tpu_custom_call.1} parent=1 // pred_fallthru
      _
    // Predicated region
    $region10: #{tpu_custom_call.1} parent=1 // pred_check
      _
    $region11: #{tpu_custom_call.1} parent=1 // pred_check_branch
      %36 = sbr.rel (0) target = $region13
    $region12: #{tpu_custom_call.1} parent=1 // pred_region
      %s38 = ssub.s32 256, 256
      %39 = vsyncadd [#allocation6], %s38
      %s40 = sshll.u32 [#allocation7], 4
      %s41 = int_to_ptr.vmem [resolvable:$true] %s40
      %46 = dma.hbm_to_vmem [thread:$0]  %s2, 256, %s41, [#allocation6], 64, 64, 4
    $region13: #{tpu_custom_call.1} parent=1 // pred_fallthru
      _
    // Predicated region
    $region14: #{tpu_custom_call.1} parent=1 // pred_check
      _
    $region15: #{tpu_custom_call.1} parent=1 // pred_check_branch
      %48 = sbr.rel (0) target = $region17
    $region16: #{tpu_custom_call.1} parent=1 // pred_region
      %49 = dma.done [#allocation3], 8192
    $region17: #{tpu_custom_call.1} parent=1 // pred_fallthru
      _
    // Predicated region
    $region18: #{tpu_custom_call.1} parent=1 // pred_check
      _
    $region19: #{tpu_custom_call.1} parent=1 // pred_check_branch
      %51 = sbr.rel (0) target = $region21
    $region20: #{tpu_custom_call.1} parent=1 // pred_region
      %52 = dma.done [#allocation6], 65536
    $region21: #{tpu_custom_call.1} parent=1 // pred_fallthru
      _
    // Predicated region
    $region22: #{tpu_custom_call.1} parent=1 // pred_check
      _
    $region23: #{tpu_custom_call.1} parent=1 // pred_check_branch
      %54 = sbr.rel (0) target = $region25
    $region24: #{tpu_custom_call.1} parent=1 // pred_region
      %55 = dma.done [#allocation6], 256
    $region25: #{tpu_custom_call.1} parent=1 // pred_fallthru
      _
    %v56 = vld [vmem:[#allocation2] sm:$0xff]
    %v57 = vld [vmem:[#allocation2 + $0x8] sm:$0xff]
    %v58 = vld [vmem:[#allocation2 + $0x10] sm:$0xff]
    %v59 = vld [vmem:[#allocation2 + $0x18] sm:$0xff]
    %v60 = vld [vmem:[#allocation2 + $0x20] sm:$0xff]
    %v61 = vld [vmem:[#allocation2 + $0x28] sm:$0xff]
    %v62 = vld [vmem:[#allocation2 + $0x30] sm:$0xff]
    %v63 = vld [vmem:[#allocation2 + $0x38] sm:$0xff]
    %v64 = vld [vmem:[#allocation2 + $0x40] sm:$0xff]
    %v65 = vld [vmem:[#allocation2 + $0x48] sm:$0xff]
    %v66 = vld [vmem:[#allocation2 + $0x50] sm:$0xff]
    %v67 = vld [vmem:[#allocation2 + $0x58] sm:$0xff]
    %v68 = vld [vmem:[#allocation2 + $0x60] sm:$0xff]
    %v69 = vld [vmem:[#allocation2 + $0x68] sm:$0xff]
    %v70 = vld [vmem:[#allocation2 + $0x70] sm:$0xff]
    %v71 = vld [vmem:[#allocation2 + $0x78] sm:$0xff]
    %v72 = vld [vmem:[#allocation2 + $0x80] sm:$0xff]
    %v73 = vld [vmem:[#allocation2 + $0x88] sm:$0xff]
    %v74 = vld [vmem:[#allocation2 + $0x90] sm:$0xff]
    %v75 = vld [vmem:[#allocation2 + $0x98] sm:$0xff]
    %v76 = vld [vmem:[#allocation2 + $0xa0] sm:$0xff]
    %v77 = vld [vmem:[#allocation2 + $0xa8] sm:$0xff]
    %v78 = vld [vmem:[#allocation2 + $0xb0] sm:$0xff]
    %v79 = vld [vmem:[#allocation2 + $0xb8] sm:$0xff]
    %v80 = vld [vmem:[#allocation2 + $0xc0] sm:$0xff]
    %v81 = vld [vmem:[#allocation2 + $0xc8] sm:$0xff]
    %v82 = vld [vmem:[#allocation2 + $0xd0] sm:$0xff]
    %v83 = vld [vmem:[#allocation2 + $0xd8] sm:$0xff]
    %v84 = vld [vmem:[#allocation2 + $0xe0] sm:$0xff]
    %v85 = vld [vmem:[#allocation2 + $0xe8] sm:$0xff]
    %v86 = vld [vmem:[#allocation2 + $0xf0] sm:$0xff]
    %v87 = vld [vmem:[#allocation2 + $0xf8] sm:$0xff]
    %v88 = vld [vmem:[#allocation2 + $0x100] sm:$0xff]
    %v89 = vld [vmem:[#allocation2 + $0x108] sm:$0xff]
    %v90 = vld [vmem:[#allocation2 + $0x110] sm:$0xff]
    %v91 = vld [vmem:[#allocation2 + $0x118] sm:$0xff]
    %v92 = vld [vmem:[#allocation2 + $0x120] sm:$0xff]
    %v93 = vld [vmem:[#allocation2 + $0x128] sm:$0xff]
    %v94 = vld [vmem:[#allocation2 + $0x130] sm:$0xff]
    %v95 = vld [vmem:[#allocation2 + $0x138] sm:$0xff]
    %v96 = vld [vmem:[#allocation2 + $0x140] sm:$0xff]
    %v97 = vld [vmem:[#allocation2 + $0x148] sm:$0xff]
    %v98 = vld [vmem:[#allocation2 + $0x150] sm:$0xff]
    %v99 = vld [vmem:[#allocation2 + $0x158] sm:$0xff]
    %v100 = vld [vmem:[#allocation2 + $0x160] sm:$0xff]
    %v101 = vld [vmem:[#allocation2 + $0x168] sm:$0xff]
    %v102 = vld [vmem:[#allocation2 + $0x170] sm:$0xff]
    %v103 = vld [vmem:[#allocation2 + $0x178] sm:$0xff]
    %v104 = vld [vmem:[#allocation2 + $0x180] sm:$0xff]
    %v105 = vld [vmem:[#allocation2 + $0x188] sm:$0xff]
    %v106 = vld [vmem:[#allocation2 + $0x190] sm:$0xff]
    %v107 = vld [vmem:[#allocation2 + $0x198] sm:$0xff]
    %v108 = vld [vmem:[#allocation2 + $0x1a0] sm:$0xff]
    %v109 = vld [vmem:[#allocation2 + $0x1a8] sm:$0xff]
    %v110 = vld [vmem:[#allocation2 + $0x1b0] sm:$0xff]
    %v111 = vld [vmem:[#allocation2 + $0x1b8] sm:$0xff]
    %v112 = vld [vmem:[#allocation2 + $0x1c0] sm:$0xff]
    %v113 = vld [vmem:[#allocation2 + $0x1c8] sm:$0xff]
    %v114 = vld [vmem:[#allocation2 + $0x1d0] sm:$0xff]
    %v115 = vld [vmem:[#allocation2 + $0x1d8] sm:$0xff]
    %v116 = vld [vmem:[#allocation2 + $0x1e0] sm:$0xff]
    %v117 = vld [vmem:[#allocation2 + $0x1e8] sm:$0xff]
    %v118 = vld [vmem:[#allocation2 + $0x1f0] sm:$0xff]
    %v119 = vld [vmem:[#allocation2 + $0x1f8] sm:$0xff]
    %v120 = vmul.f32 %v56, %v56
    %v121 = vmul.f32 %v57, %v57
    %v122 = vmul.f32 %v58, %v58
    %v123 = vmul.f32 %v59, %v59
    %v124 = vmul.f32 %v60, %v60
    %v125 = vmul.f32 %v61, %v61
    %v126 = vmul.f32 %v62, %v62
    %v127 = vmul.f32 %v63, %v63
    %v128 = vmul.f32 %v64, %v64
    %v129 = vmul.f32 %v65, %v65
    %v130 = vmul.f32 %v66, %v66
    %v131 = vmul.f32 %v67, %v67
    %v132 = vmul.f32 %v68, %v68
    %v133 = vmul.f32 %v69, %v69
    %v134 = vmul.f32 %v70, %v70
    %v135 = vmul.f32 %v71, %v71
    %v136 = vmul.f32 %v72, %v72
    %v137 = vmul.f32 %v73, %v73
    %v138 = vmul.f32 %v74, %v74
    %v139 = vmul.f32 %v75, %v75
    %v140 = vmul.f32 %v76, %v76
    %v141 = vmul.f32 %v77, %v77
    %v142 = vmul.f32 %v78, %v78
    %v143 = vmul.f32 %v79, %v79
    %v144 = vmul.f32 %v80, %v80
    %v145 = vmul.f32 %v81, %v81
    %v146 = vmul.f32 %v82, %v82
    %v147 = vmul.f32 %v83, %v83
    %v148 = vmul.f32 %v84, %v84
    %v149 = vmul.f32 %v85, %v85
    %v150 = vmul.f32 %v86, %v86
    %v151 = vmul.f32 %v87, %v87
    %v152 = vmul.f32 %v88, %v88
    %v153 = vmul.f32 %v89, %v89
    %v154 = vmul.f32 %v90, %v90
    %v155 = vmul.f32 %v91, %v91
    %v156 = vmul.f32 %v92, %v92
    %v157 = vmul.f32 %v93, %v93
    %v158 = vmul.f32 %v94, %v94
    %v159 = vmul.f32 %v95, %v95
    %v160 = vmul.f32 %v96, %v96
    %v161 = vmul.f32 %v97, %v97
    %v162 = vmul.f32 %v98, %v98
    %v163 = vmul.f32 %v99, %v99
    %v164 = vmul.f32 %v100, %v100
    %v165 = vmul.f32 %v101, %v101
    %v166 = vmul.f32 %v102, %v102
    %v167 = vmul.f32 %v103, %v103
    %v168 = vmul.f32 %v104, %v104
    %v169 = vmul.f32 %v105, %v105
    %v170 = vmul.f32 %v106, %v106
    %v171 = vmul.f32 %v107, %v107
    %v172 = vmul.f32 %v108, %v108
    %v173 = vmul.f32 %v109, %v109
    %v174 = vmul.f32 %v110, %v110
    %v175 = vmul.f32 %v111, %v111
    %v176 = vmul.f32 %v112, %v112
    %v177 = vmul.f32 %v113, %v113
    %v178 = vmul.f32 %v114, %v114
    %v179 = vmul.f32 %v115, %v115
    %v180 = vmul.f32 %v116, %v116
    %v181 = vmul.f32 %v117, %v117
    %v182 = vmul.f32 %v118, %v118
    %v183 = vmul.f32 %v119, %v119
    %v184 = vadd.f32 %v120, %v121
    %v185 = vadd.f32 %v184, %v122
    %v186 = vadd.f32 %v185, %v123
    %187 = vadd.xlane.f32.xlu0 %v186
    %v188 = vpop.xlane.xlu0 %187
    %v189 = vadd.f32 %v124, %v125
    %v190 = vadd.f32 %v189, %v126
    %v191 = vadd.f32 %v190, %v127
    %192 = vadd.xlane.f32.xlu0 %v191
    %v193 = vpop.xlane.xlu0 %192
    %v194 = vadd.f32 %v128, %v129
    %v195 = vadd.f32 %v194, %v130
    %v196 = vadd.f32 %v195, %v131
    %197 = vadd.xlane.f32.xlu0 %v196
    %v198 = vpop.xlane.xlu0 %197
    %v199 = vadd.f32 %v132, %v133
    %v200 = vadd.f32 %v199, %v134
    %v201 = vadd.f32 %v200, %v135
    %202 = vadd.xlane.f32.xlu0 %v201
    %v203 = vpop.xlane.xlu0 %202
    %v204 = vadd.f32 %v136, %v137
    %v205 = vadd.f32 %v204, %v138
    %v206 = vadd.f32 %v205, %v139
    %207 = vadd.xlane.f32.xlu0 %v206
    %v208 = vpop.xlane.xlu0 %207
    %v209 = vadd.f32 %v140, %v141
    %v210 = vadd.f32 %v209, %v142
    %v211 = vadd.f32 %v210, %v143
    %212 = vadd.xlane.f32.xlu0 %v211
    %v213 = vpop.xlane.xlu0 %212
    %v214 = vadd.f32 %v144, %v145
    %v215 = vadd.f32 %v214, %v146
    %v216 = vadd.f32 %v215, %v147
    %217 = vadd.xlane.f32.xlu0 %v216
    %v218 = vpop.xlane.xlu0 %217
    %v219 = vadd.f32 %v148, %v149
    %v220 = vadd.f32 %v219, %v150
    %v221 = vadd.f32 %v220, %v151
    %222 = vadd.xlane.f32.xlu0 %v221
    %v223 = vpop.xlane.xlu0 %222
    %v224 = vadd.f32 %v152, %v153
    %v225 = vadd.f32 %v224, %v154
    %v226 = vadd.f32 %v225, %v155
    %227 = vadd.xlane.f32.xlu0 %v226
    %v228 = vpop.xlane.xlu0 %227
    %v229 = vadd.f32 %v156, %v157
    %v230 = vadd.f32 %v229, %v158
    %v231 = vadd.f32 %v230, %v159
    %232 = vadd.xlane.f32.xlu0 %v231
    %v233 = vpop.xlane.xlu0 %232
    %v234 = vadd.f32 %v160, %v161
    %v235 = vadd.f32 %v234, %v162
    %v236 = vadd.f32 %v235, %v163
    %237 = vadd.xlane.f32.xlu0 %v236
    %v238 = vpop.xlane.xlu0 %237
    %v239 = vadd.f32 %v164, %v165
    %v240 = vadd.f32 %v239, %v166
    %v241 = vadd.f32 %v240, %v167
    %242 = vadd.xlane.f32.xlu0 %v241
    %v243 = vpop.xlane.xlu0 %242
    %v244 = vadd.f32 %v168, %v169
    %v245 = vadd.f32 %v244, %v170
    %v246 = vadd.f32 %v245, %v171
    %247 = vadd.xlane.f32.xlu0 %v246
    %v248 = vpop.xlane.xlu0 %247
    %v249 = vadd.f32 %v172, %v173
    %v250 = vadd.f32 %v249, %v174
    %v251 = vadd.f32 %v250, %v175
    %252 = vadd.xlane.f32.xlu0 %v251
    %v253 = vpop.xlane.xlu0 %252
    %v254 = vadd.f32 %v176, %v177
    %v255 = vadd.f32 %v254, %v178
    %v256 = vadd.f32 %v255, %v179
    %257 = vadd.xlane.f32.xlu0 %v256
    %v258 = vpop.xlane.xlu0 %257
    %v259 = vadd.f32 %v180, %v181
    %v260 = vadd.f32 %v259, %v182
    %v261 = vadd.f32 %v260, %v183
    %262 = vadd.xlane.f32.xlu0 %v261
    %v263 = vpop.xlane.xlu0 %262
    %v264 = vrcp.pop 512.0
    %v265 = vmul.f32 %v188, %v264
    %v266 = vmul.f32 %v193, %v264
    %v267 = vmul.f32 %v198, %v264
    %v268 = vmul.f32 %v203, %v264
    %v269 = vmul.f32 %v208, %v264
    %v270 = vmul.f32 %v213, %v264
    %v271 = vmul.f32 %v218, %v264
    %v272 = vmul.f32 %v223, %v264
    %v273 = vmul.f32 %v228, %v264
    %v274 = vmul.f32 %v233, %v264
    %v275 = vmul.f32 %v238, %v264
    %v276 = vmul.f32 %v243, %v264
    %v277 = vmul.f32 %v248, %v264
    %v278 = vmul.f32 %v253, %v264
    %v279 = vmul.f32 %v258, %v264
    %v280 = vmul.f32 %v263, %v264
    %v281 = vadd.f32 %v265, 1e-08
    %v282 = vadd.f32 %v266, 1e-08
    %v283 = vadd.f32 %v267, 1e-08
    %v284 = vadd.f32 %v268, 1e-08
    %v285 = vadd.f32 %v269, 1e-08
    %v286 = vadd.f32 %v270, 1e-08
    %v287 = vadd.f32 %v271, 1e-08
    %v288 = vadd.f32 %v272, 1e-08
    %v289 = vadd.f32 %v273, 1e-08
    %v290 = vadd.f32 %v274, 1e-08
    %v291 = vadd.f32 %v275, 1e-08
    %v292 = vadd.f32 %v276, 1e-08
    %v293 = vadd.f32 %v277, 1e-08
    %v294 = vadd.f32 %v278, 1e-08
    %v295 = vadd.f32 %v279, 1e-08
    %v296 = vadd.f32 %v280, 1e-08
    %v297 = vrsqrt.pop %v281
    %v298 = vrsqrt.pop %v282
    %v299 = vrsqrt.pop %v283
    %v300 = vrsqrt.pop %v284
    %v301 = vrsqrt.pop %v285
    %v302 = vrsqrt.pop %v286
    %v303 = vrsqrt.pop %v287
    %v304 = vrsqrt.pop %v288
    %v305 = vrsqrt.pop %v289
    %v306 = vrsqrt.pop %v290
    %v307 = vrsqrt.pop %v291
    %v308 = vrsqrt.pop %v292
    %v309 = vrsqrt.pop %v293
    %v310 = vrsqrt.pop %v294
    %v311 = vrsqrt.pop %v295
    %v312 = vrsqrt.pop %v296
    %v313 = vmul.f32 %v56, %v297
    %v314 = vmul.f32 %v57, %v297
    %v315 = vmul.f32 %v58, %v297
    %v316 = vmul.f32 %v59, %v297
    %v317 = vmul.f32 %v60, %v298
    %v318 = vmul.f32 %v61, %v298
    %v319 = vmul.f32 %v62, %v298
    %v320 = vmul.f32 %v63, %v298
    %v321 = vmul.f32 %v64, %v299
    %v322 = vmul.f32 %v65, %v299
    %v323 = vmul.f32 %v66, %v299
    %v324 = vmul.f32 %v67, %v299
    %v325 = vmul.f32 %v68, %v300
    %v326 = vmul.f32 %v69, %v300
    %v327 = vmul.f32 %v70, %v300
    %v328 = vmul.f32 %v71, %v300
    %v329 = vmul.f32 %v72, %v301
    %v330 = vmul.f32 %v73, %v301
    %v331 = vmul.f32 %v74, %v301
    %v332 = vmul.f32 %v75, %v301
    %v333 = vmul.f32 %v76, %v302
    %v334 = vmul.f32 %v77, %v302
    %v335 = vmul.f32 %v78, %v302
    %v336 = vmul.f32 %v79, %v302
    %v337 = vmul.f32 %v80, %v303
    %v338 = vmul.f32 %v81, %v303
    %v339 = vmul.f32 %v82, %v303
    %v340 = vmul.f32 %v83, %v303
    %v341 = vmul.f32 %v84, %v304
    %v342 = vmul.f32 %v85, %v304
    %v343 = vmul.f32 %v86, %v304
    %v344 = vmul.f32 %v87, %v304
    %v345 = vmul.f32 %v88, %v305
    %v346 = vmul.f32 %v89, %v305
    %v347 = vmul.f32 %v90, %v305
    %v348 = vmul.f32 %v91, %v305
    %v349 = vmul.f32 %v92, %v306
    %v350 = vmul.f32 %v93, %v306
    %v351 = vmul.f32 %v94, %v306
    %v352 = vmul.f32 %v95, %v306
    %v353 = vmul.f32 %v96, %v307
    %v354 = vmul.f32 %v97, %v307
    %v355 = vmul.f32 %v98, %v307
    %v356 = vmul.f32 %v99, %v307
    %v357 = vmul.f32 %v100, %v308
    %v358 = vmul.f32 %v101, %v308
    %v359 = vmul.f32 %v102, %v308
    %v360 = vmul.f32 %v103, %v308
    %v361 = vmul.f32 %v104, %v309
    %v362 = vmul.f32 %v105, %v309
    %v363 = vmul.f32 %v106, %v309
    %v364 = vmul.f32 %v107, %v309
    %v365 = vmul.f32 %v108, %v310
    %v366 = vmul.f32 %v109, %v310
    %v367 = vmul.f32 %v110, %v310
    %v368 = vmul.f32 %v111, %v310
    %v369 = vmul.f32 %v112, %v311
    %v370 = vmul.f32 %v113, %v311
    %v371 = vmul.f32 %v114, %v311
    %v372 = vmul.f32 %v115, %v311
    %v373 = vmul.f32 %v116, %v312
    %v374 = vmul.f32 %v117, %v312
    %v375 = vmul.f32 %v118, %v312
    %v376 = vmul.f32 %v119, %v312
    %v377 = vpack.c.bf16 %v317, %v313
    %v378 = vpack.c.bf16 %v318, %v314
    %v379 = vpack.c.bf16 %v319, %v315
    %v380 = vpack.c.bf16 %v320, %v316
    %v381 = vpack.c.bf16 %v325, %v321
    %v382 = vpack.c.bf16 %v326, %v322
    %v383 = vpack.c.bf16 %v327, %v323
    %v384 = vpack.c.bf16 %v328, %v324
    %v385 = vpack.c.bf16 %v333, %v329
    %v386 = vpack.c.bf16 %v334, %v330
    %v387 = vpack.c.bf16 %v335, %v331
    %v388 = vpack.c.bf16 %v336, %v332
    %v389 = vpack.c.bf16 %v341, %v337
    %v390 = vpack.c.bf16 %v342, %v338
    %v391 = vpack.c.bf16 %v343, %v339
    %v392 = vpack.c.bf16 %v344, %v340
    %v393 = vpack.c.bf16 %v349, %v345
    %v394 = vpack.c.bf16 %v350, %v346
    %v395 = vpack.c.bf16 %v351, %v347
    %v396 = vpack.c.bf16 %v352, %v348
    %v397 = vpack.c.bf16 %v357, %v353
    %v398 = vpack.c.bf16 %v358, %v354
    %v399 = vpack.c.bf16 %v359, %v355
    %v400 = vpack.c.bf16 %v360, %v356
    %v401 = vpack.c.bf16 %v365, %v361
    %v402 = vpack.c.bf16 %v366, %v362
    %v403 = vpack.c.bf16 %v367, %v363
    %v404 = vpack.c.bf16 %v368, %v364
    %v405 = vpack.c.bf16 %v373, %v369
    %v406 = vpack.c.bf16 %v374, %v370
    %v407 = vpack.c.bf16 %v375, %v371
    %v408 = vpack.c.bf16 %v376, %v372
    %v409 = vld [vmem:[#allocation5] sm:$0xff]
    %v410 = vld [vmem:[#allocation5 + $0x8] sm:$0xff]
    %v411 = vld [vmem:[#allocation5 + $0x10] sm:$0xff]
    %v412 = vld [vmem:[#allocation5 + $0x18] sm:$0xff]
    %v413 = vld [vmem:[#allocation5 + $0x20] sm:$0xff]
    %v414 = vld [vmem:[#allocation5 + $0x28] sm:$0xff]
    %v415 = vld [vmem:[#allocation5 + $0x30] sm:$0xff]
    %v416 = vld [vmem:[#allocation5 + $0x38] sm:$0xff]
    %v417 = vld [vmem:[#allocation5 + $0x40] sm:$0xff]
    %v418 = vld [vmem:[#allocation5 + $0x48] sm:$0xff]
    %v419 = vld [vmem:[#allocation5 + $0x50] sm:$0xff]
    %v420 = vld [vmem:[#allocation5 + $0x58] sm:$0xff]
    %v421 = vld [vmem:[#allocation5 + $0x60] sm:$0xff]
    %v422 = vld [vmem:[#allocation5 + $0x68] sm:$0xff]
    %v423 = vld [vmem:[#allocation5 + $0x70] sm:$0xff]
    %v424 = vld [vmem:[#allocation5 + $0x78] sm:$0xff]
    %v425 = vld [vmem:[#allocation5 + $0x80] sm:$0xff]
    %v426 = vld [vmem:[#allocation5 + $0x88] sm:$0xff]
    %v427 = vld [vmem:[#allocation5 + $0x90] sm:$0xff]
    %v428 = vld [vmem:[#allocation5 + $0x98] sm:$0xff]
    %v429 = vld [vmem:[#allocation5 + $0xa0] sm:$0xff]
    %v430 = vld [vmem:[#allocation5 + $0xa8] sm:$0xff]
    %v431 = vld [vmem:[#allocation5 + $0xb0] sm:$0xff]
    %v432 = vld [vmem:[#allocation5 + $0xb8] sm:$0xff]
    %v433 = vld [vmem:[#allocation5 + $0xc0] sm:$0xff]
    %v434 = vld [vmem:[#allocation5 + $0xc8] sm:$0xff]
    %v435 = vld [vmem:[#allocation5 + $0xd0] sm:$0xff]
    %v436 = vld [vmem:[#allocation5 + $0xd8] sm:$0xff]
    %v437 = vld [vmem:[#allocation5 + $0xe0] sm:$0xff]
    %v438 = vld [vmem:[#allocation5 + $0xe8] sm:$0xff]
    %v439 = vld [vmem:[#allocation5 + $0xf0] sm:$0xff]
    %v440 = vld [vmem:[#allocation5 + $0xf8] sm:$0xff]
    %v441 = vld [vmem:[#allocation5 + $0x100] sm:$0xff]
    %v442 = vld [vmem:[#allocation5 + $0x108] sm:$0xff]
    %v443 = vld [vmem:[#allocation5 + $0x110] sm:$0xff]
    %v444 = vld [vmem:[#allocation5 + $0x118] sm:$0xff]
    %v445 = vld [vmem:[#allocation5 + $0x120] sm:$0xff]
    %v446 = vld [vmem:[#allocation5 + $0x128] sm:$0xff]
    %v447 = vld [vmem:[#allocation5 + $0x130] sm:$0xff]
    %v448 = vld [vmem:[#allocation5 + $0x138] sm:$0xff]
    %v449 = vld [vmem:[#allocation5 + $0x140] sm:$0xff]
    %v450 = vld [vmem:[#allocation5 + $0x148] sm:$0xff]
    %v451 = vld [vmem:[#allocation5 + $0x150] sm:$0xff]
    %v452 = vld [vmem:[#allocation5 + $0x158] sm:$0xff]
    %v453 = vld [vmem:[#allocation5 + $0x160] sm:$0xff]
    %v454 = vld [vmem:[#allocation5 + $0x168] sm:$0xff]
    %v455 = vld [vmem:[#allocation5 + $0x170] sm:$0xff]
    %v456 = vld [vmem:[#allocation5 + $0x178] sm:$0xff]
    %v457 = vld [vmem:[#allocation5 + $0x180] sm:$0xff]
    %v458 = vld [vmem:[#allocation5 + $0x188] sm:$0xff]
    %v459 = vld [vmem:[#allocation5 + $0x190] sm:$0xff]
    %v460 = vld [vmem:[#allocation5 + $0x198] sm:$0xff]
    %v461 = vld [vmem:[#allocation5 + $0x1a0] sm:$0xff]
    %v462 = vld [vmem:[#allocation5 + $0x1a8] sm:$0xff]
    %v463 = vld [vmem:[#allocation5 + $0x1b0] sm:$0xff]
    %v464 = vld [vmem:[#allocation5 + $0x1b8] sm:$0xff]
    %v465 = vld [vmem:[#allocation5 + $0x1c0] sm:$0xff]
    %v466 = vld [vmem:[#allocation5 + $0x1c8] sm:$0xff]
    %v467 = vld [vmem:[#allocation5 + $0x1d0] sm:$0xff]
    %v468 = vld [vmem:[#allocation5 + $0x1d8] sm:$0xff]
    %v469 = vld [vmem:[#allocation5 + $0x1e0] sm:$0xff]
    %v470 = vld [vmem:[#allocation5 + $0x1e8] sm:$0xff]
    %v471 = vld [vmem:[#allocation5 + $0x1f0] sm:$0xff]
    %v472 = vld [vmem:[#allocation5 + $0x1f8] sm:$0xff]
    %v473 = vld [vmem:[#allocation5 + $0x200] sm:$0xff]
    %v474 = vld [vmem:[#allocation5 + $0x208] sm:$0xff]
    %v475 = vld [vmem:[#allocation5 + $0x210] sm:$0xff]
    %v476 = vld [vmem:[#allocation5 + $0x218] sm:$0xff]
    %v477 = vld [vmem:[#allocation5 + $0x220] sm:$0xff]
    %v478 = vld [vmem:[#allocation5 + $0x228] sm:$0xff]
    %v479 = vld [vmem:[#allocation5 + $0x230] sm:$0xff]
    %v480 = vld [vmem:[#allocation5 + $0x238] sm:$0xff]
    %v481 = vld [vmem:[#allocation5 + $0x240] sm:$0xff]
    %v482 = vld [vmem:[#allocation5 + $0x248] sm:$0xff]
    %v483 = vld [vmem:[#allocation5 + $0x250] sm:$0xff]
    %v484 = vld [vmem:[#allocation5 + $0x258] sm:$0xff]
    %v485 = vld [vmem:[#allocation5 + $0x260] sm:$0xff]
    %v486 = vld [vmem:[#allocation5 + $0x268] sm:$0xff]
    %v487 = vld [vmem:[#allocation5 + $0x270] sm:$0xff]
    %v488 = vld [vmem:[#allocation5 + $0x278] sm:$0xff]
    %v489 = vld [vmem:[#allocation5 + $0x280] sm:$0xff]
    %v490 = vld [vmem:[#allocation5 + $0x288] sm:$0xff]
    %v491 = vld [vmem:[#allocation5 + $0x290] sm:$0xff]
    %v492 = vld [vmem:[#allocation5 + $0x298] sm:$0xff]
    %v493 = vld [vmem:[#allocation5 + $0x2a0] sm:$0xff]
    %v494 = vld [vmem:[#allocation5 + $0x2a8] sm:$0xff]
    %v495 = vld [vmem:[#allocation5 + $0x2b0] sm:$0xff]
    %v496 = vld [vmem:[#allocation5 + $0x2b8] sm:$0xff]
    %v497 = vld [vmem:[#allocation5 + $0x2c0] sm:$0xff]
    %v498 = vld [vmem:[#allocation5 + $0x2c8] sm:$0xff]
    %v499 = vld [vmem:[#allocation5 + $0x2d0] sm:$0xff]
    %v500 = vld [vmem:[#allocation5 + $0x2d8] sm:$0xff]
    %v501 = vld [vmem:[#allocation5 + $0x2e0] sm:$0xff]
    %v502 = vld [vmem:[#allocation5 + $0x2e8] sm:$0xff]
    %v503 = vld [vmem:[#allocation5 + $0x2f0] sm:$0xff]
    %v504 = vld [vmem:[#allocation5 + $0x2f8] sm:$0xff]
    %v505 = vld [vmem:[#allocation5 + $0x300] sm:$0xff]
    %v506 = vld [vmem:[#allocation5 + $0x308] sm:$0xff]
    %v507 = vld [vmem:[#allocation5 + $0x310] sm:$0xff]
    %v508 = vld [vmem:[#allocation5 + $0x318] sm:$0xff]
    %v509 = vld [vmem:[#allocation5 + $0x320] sm:$0xff]
    %v510 = vld [vmem:[#allocation5 + $0x328] sm:$0xff]
    %v511 = vld [vmem:[#allocation5 + $0x330] sm:$0xff]
    %v512 = vld [vmem:[#allocation5 + $0x338] sm:$0xff]
    %v513 = vld [vmem:[#allocation5 + $0x340] sm:$0xff]
    %v514 = vld [vmem:[#allocation5 + $0x348] sm:$0xff]
    %v515 = vld [vmem:[#allocation5 + $0x350] sm:$0xff]
    %v516 = vld [vmem:[#allocation5 + $0x358] sm:$0xff]
    %v517 = vld [vmem:[#allocation5 + $0x360] sm:$0xff]
    %v518 = vld [vmem:[#allocation5 + $0x368] sm:$0xff]
    %v519 = vld [vmem:[#allocation5 + $0x370] sm:$0xff]
    %v520 = vld [vmem:[#allocation5 + $0x378] sm:$0xff]
    %v521 = vld [vmem:[#allocation5 + $0x380] sm:$0xff]
    %v522 = vld [vmem:[#allocation5 + $0x388] sm:$0xff]
    %v523 = vld [vmem:[#allocation5 + $0x390] sm:$0xff]
    %v524 = vld [vmem:[#allocation5 + $0x398] sm:$0xff]
    %v525 = vld [vmem:[#allocation5 + $0x3a0] sm:$0xff]
    %v526 = vld [vmem:[#allocation5 + $0x3a8] sm:$0xff]
    %v527 = vld [vmem:[#allocation5 + $0x3b0] sm:$0xff]
    %v528 = vld [vmem:[#allocation5 + $0x3b8] sm:$0xff]
    %v529 = vld [vmem:[#allocation5 + $0x3c0] sm:$0xff]
    %v530 = vld [vmem:[#allocation5 + $0x3c8] sm:$0xff]
    %v531 = vld [vmem:[#allocation5 + $0x3d0] sm:$0xff]
    %v532 = vld [vmem:[#allocation5 + $0x3d8] sm:$0xff]
    %v533 = vld [vmem:[#allocation5 + $0x3e0] sm:$0xff]
    %v534 = vld [vmem:[#allocation5 + $0x3e8] sm:$0xff]
    %v535 = vld [vmem:[#allocation5 + $0x3f0] sm:$0xff]
    %v536 = vld [vmem:[#allocation5 + $0x3f8] sm:$0xff]
    %v537 = vld [vmem:[#allocation7] sm:$0xf]
    %v539 = vlaneseq
    %v540 = vshrl.u32 %v539, 7
    %v541 = vsub.s32 0, %v540
    %v542 = vrot.slane %v537, %v541
    %v543 = vlaneseq
    %v544 = vshrl.u32 %v543, 7
    %v545 = vsub.s32 1, %v544
    %v546 = vrot.slane %v537, %v545
    %v547 = vlaneseq
    %v548 = vshrl.u32 %v547, 7
    %v549 = vsub.s32 2, %v548
    %v550 = vrot.slane %v537, %v549
    %v551 = vlaneseq
    %v552 = vshrl.u32 %v551, 7
    %v553 = vsub.s32 3, %v552
    %v554 = vrot.slane %v537, %v553
    %v687 = vunpack.c.l.b16 %v409
    %v688 = vunpack.c.h.b16 %v409
    %v689 = vunpack.c.l.b16 %v410
    %v690 = vunpack.c.h.b16 %v410
    %v691 = vunpack.c.l.b16 %v411
    %v692 = vunpack.c.h.b16 %v411
    %v693 = vunpack.c.l.b16 %v412
    %v694 = vunpack.c.h.b16 %v412
    %v695 = vunpack.c.l.b16 %v413
    %v696 = vunpack.c.h.b16 %v413
    %v697 = vunpack.c.l.b16 %v414
    %v698 = vunpack.c.h.b16 %v414
    %v699 = vunpack.c.l.b16 %v415
    %v700 = vunpack.c.h.b16 %v415
    %v701 = vunpack.c.l.b16 %v416
    %v702 = vunpack.c.h.b16 %v416
    %v703 = vunpack.c.l.b16 %v417
    %v704 = vunpack.c.h.b16 %v417
    %v705 = vunpack.c.l.b16 %v418
    %v706 = vunpack.c.h.b16 %v418
    %v707 = vunpack.c.l.b16 %v419
    %v708 = vunpack.c.h.b16 %v419
    %v709 = vunpack.c.l.b16 %v420
    %v710 = vunpack.c.h.b16 %v420
    %v711 = vunpack.c.l.b16 %v421
    %v712 = vunpack.c.h.b16 %v421
    %v713 = vunpack.c.l.b16 %v422
    %v714 = vunpack.c.h.b16 %v422
    %v715 = vunpack.c.l.b16 %v423
    %v716 = vunpack.c.h.b16 %v423
    %v717 = vunpack.c.l.b16 %v424
    %v718 = vunpack.c.h.b16 %v424
    %v719 = vunpack.c.l.b16 %v425
    %v720 = vunpack.c.h.b16 %v425
    %v721 = vunpack.c.l.b16 %v426
    %v722 = vunpack.c.h.b16 %v426
    %v723 = vunpack.c.l.b16 %v427
    %v724 = vunpack.c.h.b16 %v427
    %v725 = vunpack.c.l.b16 %v428
    %v726 = vunpack.c.h.b16 %v428
    %v727 = vunpack.c.l.b16 %v429
    %v728 = vunpack.c.h.b16 %v429
    %v729 = vunpack.c.l.b16 %v430
    %v730 = vunpack.c.h.b16 %v430
    %v731 = vunpack.c.l.b16 %v431
    %v732 = vunpack.c.h.b16 %v431
    %v733 = vunpack.c.l.b16 %v432
    %v734 = vunpack.c.h.b16 %v432
    %v735 = vunpack.c.l.b16 %v433
    %v736 = vunpack.c.h.b16 %v433
    %v737 = vunpack.c.l.b16 %v434
    %v738 = vunpack.c.h.b16 %v434
    %v739 = vunpack.c.l.b16 %v435
    %v740 = vunpack.c.h.b16 %v435
    %v741 = vunpack.c.l.b16 %v436
    %v742 = vunpack.c.h.b16 %v436
    %v743 = vunpack.c.l.b16 %v437
    %v744 = vunpack.c.h.b16 %v437
    %v745 = vunpack.c.l.b16 %v438
    %v746 = vunpack.c.h.b16 %v438
    %v747 = vunpack.c.l.b16 %v439
    %v748 = vunpack.c.h.b16 %v439
    %v749 = vunpack.c.l.b16 %v440
    %v750 = vunpack.c.h.b16 %v440
    %v751 = vunpack.c.l.b16 %v441
    %v752 = vunpack.c.h.b16 %v441
    %v753 = vunpack.c.l.b16 %v442
    %v754 = vunpack.c.h.b16 %v442
    %v755 = vunpack.c.l.b16 %v443
    %v756 = vunpack.c.h.b16 %v443
    %v757 = vunpack.c.l.b16 %v444
    %v758 = vunpack.c.h.b16 %v444
    %v759 = vunpack.c.l.b16 %v445
    %v760 = vunpack.c.h.b16 %v445
    %v761 = vunpack.c.l.b16 %v446
    %v762 = vunpack.c.h.b16 %v446
    %v763 = vunpack.c.l.b16 %v447
    %v764 = vunpack.c.h.b16 %v447
    %v765 = vunpack.c.l.b16 %v448
    %v766 = vunpack.c.h.b16 %v448
    %v767 = vunpack.c.l.b16 %v449
    %v768 = vunpack.c.h.b16 %v449
    %v769 = vunpack.c.l.b16 %v450
    %v770 = vunpack.c.h.b16 %v450
    %v771 = vunpack.c.l.b16 %v451
    %v772 = vunpack.c.h.b16 %v451
    %v773 = vunpack.c.l.b16 %v452
    %v774 = vunpack.c.h.b16 %v452
    %v775 = vunpack.c.l.b16 %v453
    %v776 = vunpack.c.h.b16 %v453
    %v777 = vunpack.c.l.b16 %v454
    %v778 = vunpack.c.h.b16 %v454
    %v779 = vunpack.c.l.b16 %v455
    %v780 = vunpack.c.h.b16 %v455
    %v781 = vunpack.c.l.b16 %v456
    %v782 = vunpack.c.h.b16 %v456
    %v783 = vunpack.c.l.b16 %v457
    %v784 = vunpack.c.h.b16 %v457
    %v785 = vunpack.c.l.b16 %v458
    %v786 = vunpack.c.h.b16 %v458
    %v787 = vunpack.c.l.b16 %v459
    %v788 = vunpack.c.h.b16 %v459
    %v789 = vunpack.c.l.b16 %v460
    %v790 = vunpack.c.h.b16 %v460
    %v791 = vunpack.c.l.b16 %v461
    %v792 = vunpack.c.h.b16 %v461
    %v793 = vunpack.c.l.b16 %v462
    %v794 = vunpack.c.h.b16 %v462
    %v795 = vunpack.c.l.b16 %v463
    %v796 = vunpack.c.h.b16 %v463
    %v797 = vunpack.c.l.b16 %v464
    %v798 = vunpack.c.h.b16 %v464
    %v799 = vunpack.c.l.b16 %v465
    %v800 = vunpack.c.h.b16 %v465
    %v801 = vunpack.c.l.b16 %v466
    %v802 = vunpack.c.h.b16 %v466
    %v803 = vunpack.c.l.b16 %v467
    %v804 = vunpack.c.h.b16 %v467
    %v805 = vunpack.c.l.b16 %v468
    %v806 = vunpack.c.h.b16 %v468
    %v807 = vunpack.c.l.b16 %v469
    %v808 = vunpack.c.h.b16 %v469
    %v809 = vunpack.c.l.b16 %v470
    %v810 = vunpack.c.h.b16 %v470
    %v811 = vunpack.c.l.b16 %v471
    %v812 = vunpack.c.h.b16 %v471
    %v813 = vunpack.c.l.b16 %v472
    %v814 = vunpack.c.h.b16 %v472
    %v815 = vunpack.c.l.b16 %v473
    %v816 = vunpack.c.h.b16 %v473
    %v817 = vunpack.c.l.b16 %v474
    %v818 = vunpack.c.h.b16 %v474
    %v819 = vunpack.c.l.b16 %v475
    %v820 = vunpack.c.h.b16 %v475
    %v821 = vunpack.c.l.b16 %v476
    %v822 = vunpack.c.h.b16 %v476
    %v823 = vunpack.c.l.b16 %v477
    %v824 = vunpack.c.h.b16 %v477
    %v825 = vunpack.c.l.b16 %v478
    %v826 = vunpack.c.h.b16 %v478
    %v827 = vunpack.c.l.b16 %v479
    %v828 = vunpack.c.h.b16 %v479
    %v829 = vunpack.c.l.b16 %v480
    %v830 = vunpack.c.h.b16 %v480
    %v831 = vunpack.c.l.b16 %v481
    %v832 = vunpack.c.h.b16 %v481
    %v833 = vunpack.c.l.b16 %v482
    %v834 = vunpack.c.h.b16 %v482
    %v835 = vunpack.c.l.b16 %v483
    %v836 = vunpack.c.h.b16 %v483
    %v837 = vunpack.c.l.b16 %v484
    %v838 = vunpack.c.h.b16 %v484
    %v839 = vunpack.c.l.b16 %v485
    %v840 = vunpack.c.h.b16 %v485
    %v841 = vunpack.c.l.b16 %v486
    %v842 = vunpack.c.h.b16 %v486
    %v843 = vunpack.c.l.b16 %v487
    %v844 = vunpack.c.h.b16 %v487
    %v845 = vunpack.c.l.b16 %v488
    %v846 = vunpack.c.h.b16 %v488
    %v847 = vunpack.c.l.b16 %v489
    %v848 = vunpack.c.h.b16 %v489
    %v849 = vunpack.c.l.b16 %v490
    %v850 = vunpack.c.h.b16 %v490
    %v851 = vunpack.c.l.b16 %v491
    %v852 = vunpack.c.h.b16 %v491
    %v853 = vunpack.c.l.b16 %v492
    %v854 = vunpack.c.h.b16 %v492
    %v855 = vunpack.c.l.b16 %v493
    %v856 = vunpack.c.h.b16 %v493
    %v857 = vunpack.c.l.b16 %v494
    %v858 = vunpack.c.h.b16 %v494
    %v859 = vunpack.c.l.b16 %v495
    %v860 = vunpack.c.h.b16 %v495
    %v861 = vunpack.c.l.b16 %v496
    %v862 = vunpack.c.h.b16 %v496
    %v863 = vunpack.c.l.b16 %v497
    %v864 = vunpack.c.h.b16 %v497
    %v865 = vunpack.c.l.b16 %v498
    %v866 = vunpack.c.h.b16 %v498
    %v867 = vunpack.c.l.b16 %v499
    %v868 = vunpack.c.h.b16 %v499
    %v869 = vunpack.c.l.b16 %v500
    %v870 = vunpack.c.h.b16 %v500
    %v871 = vunpack.c.l.b16 %v501
    %v872 = vunpack.c.h.b16 %v501
    %v873 = vunpack.c.l.b16 %v502
    %v874 = vunpack.c.h.b16 %v502
    %v875 = vunpack.c.l.b16 %v503
    %v876 = vunpack.c.h.b16 %v503
    %v877 = vunpack.c.l.b16 %v504
    %v878 = vunpack.c.h.b16 %v504
    %v879 = vunpack.c.l.b16 %v505
    %v880 = vunpack.c.h.b16 %v505
    %v881 = vunpack.c.l.b16 %v506
    %v882 = vunpack.c.h.b16 %v506
    %v883 = vunpack.c.l.b16 %v507
    %v884 = vunpack.c.h.b16 %v507
    %v885 = vunpack.c.l.b16 %v508
    %v886 = vunpack.c.h.b16 %v508
    %v887 = vunpack.c.l.b16 %v509
    %v888 = vunpack.c.h.b16 %v509
    %v889 = vunpack.c.l.b16 %v510
    %v890 = vunpack.c.h.b16 %v510
    %v891 = vunpack.c.l.b16 %v511
    %v892 = vunpack.c.h.b16 %v511
    %v893 = vunpack.c.l.b16 %v512
    %v894 = vunpack.c.h.b16 %v512
    %v895 = vunpack.c.l.b16 %v513
    %v896 = vunpack.c.h.b16 %v513
    %v897 = vunpack.c.l.b16 %v514
    %v898 = vunpack.c.h.b16 %v514
    %v899 = vunpack.c.l.b16 %v515
    %v900 = vunpack.c.h.b16 %v515
    %v901 = vunpack.c.l.b16 %v516
    %v902 = vunpack.c.h.b16 %v516
    %v903 = vunpack.c.l.b16 %v517
    %v904 = vunpack.c.h.b16 %v517
    %v905 = vunpack.c.l.b16 %v518
    %v906 = vunpack.c.h.b16 %v518
    %v907 = vunpack.c.l.b16 %v519
    %v908 = vunpack.c.h.b16 %v519
    %v909 = vunpack.c.l.b16 %v520
    %v910 = vunpack.c.h.b16 %v520
    %v911 = vunpack.c.l.b16 %v521
    %v912 = vunpack.c.h.b16 %v521
    %v913 = vunpack.c.l.b16 %v522
    %v914 = vunpack.c.h.b16 %v522
    %v915 = vunpack.c.l.b16 %v523
    %v916 = vunpack.c.h.b16 %v523
    %v917 = vunpack.c.l.b16 %v524
    %v918 = vunpack.c.h.b16 %v524
    %v919 = vunpack.c.l.b16 %v525
    %v920 = vunpack.c.h.b16 %v525
    %v921 = vunpack.c.l.b16 %v526
    %v922 = vunpack.c.h.b16 %v526
    %v923 = vunpack.c.l.b16 %v527
    %v924 = vunpack.c.h.b16 %v527
    %v925 = vunpack.c.l.b16 %v528
    %v926 = vunpack.c.h.b16 %v528
    %v927 = vunpack.c.l.b16 %v529
    %v928 = vunpack.c.h.b16 %v529
    %v929 = vunpack.c.l.b16 %v530
    %v930 = vunpack.c.h.b16 %v530
    %v931 = vunpack.c.l.b16 %v531
    %v932 = vunpack.c.h.b16 %v531
    %v933 = vunpack.c.l.b16 %v532
    %v934 = vunpack.c.h.b16 %v532
    %v935 = vunpack.c.l.b16 %v533
    %v936 = vunpack.c.h.b16 %v533
    %v937 = vunpack.c.l.b16 %v534
    %v938 = vunpack.c.h.b16 %v534
    %v939 = vunpack.c.l.b16 %v535
    %v940 = vunpack.c.h.b16 %v535
    %v941 = vunpack.c.l.b16 %v536
    %v942 = vunpack.c.h.b16 %v536
    %v943 = vpack.c.b16 %v691, %v687
    %v944 = vpack.c.b16 %v692, %v688
    %v945 = vpack.c.b16 %v693, %v689
    %v946 = vpack.c.b16 %v694, %v690
    %v947 = vpack.c.b16 %v699, %v695
    %v948 = vpack.c.b16 %v700, %v696
    %v949 = vpack.c.b16 %v701, %v697
    %v950 = vpack.c.b16 %v702, %v698
    %v951 = vpack.c.b16 %v707, %v703
    %v952 = vpack.c.b16 %v708, %v704
    %v953 = vpack.c.b16 %v709, %v705
    %v954 = vpack.c.b16 %v710, %v706
    %v955 = vpack.c.b16 %v715, %v711
    %v956 = vpack.c.b16 %v716, %v712
    %v957 = vpack.c.b16 %v717, %v713
    %v958 = vpack.c.b16 %v718, %v714
    %v959 = vpack.c.b16 %v723, %v719
    %v960 = vpack.c.b16 %v724, %v720
    %v961 = vpack.c.b16 %v725, %v721
    %v962 = vpack.c.b16 %v726, %v722
    %v963 = vpack.c.b16 %v731, %v727
    %v964 = vpack.c.b16 %v732, %v728
    %v965 = vpack.c.b16 %v733, %v729
    %v966 = vpack.c.b16 %v734, %v730
    %v967 = vpack.c.b16 %v739, %v735
    %v968 = vpack.c.b16 %v740, %v736
    %v969 = vpack.c.b16 %v741, %v737
    %v970 = vpack.c.b16 %v742, %v738
    %v971 = vpack.c.b16 %v747, %v743
    %v972 = vpack.c.b16 %v748, %v744
    %v973 = vpack.c.b16 %v749, %v745
    %v974 = vpack.c.b16 %v750, %v746
    %v975 = vpack.c.b16 %v755, %v751
    %v976 = vpack.c.b16 %v756, %v752
    %v977 = vpack.c.b16 %v757, %v753
    %v978 = vpack.c.b16 %v758, %v754
    %v979 = vpack.c.b16 %v763, %v759
    %v980 = vpack.c.b16 %v764, %v760
    %v981 = vpack.c.b16 %v765, %v761
    %v982 = vpack.c.b16 %v766, %v762
    %v983 = vpack.c.b16 %v771, %v767
    %v984 = vpack.c.b16 %v772, %v768
    %v985 = vpack.c.b16 %v773, %v769
    %v986 = vpack.c.b16 %v774, %v770
    %v987 = vpack.c.b16 %v779, %v775
    %v988 = vpack.c.b16 %v780, %v776
    %v989 = vpack.c.b16 %v781, %v777
    %v990 = vpack.c.b16 %v782, %v778
    %v991 = vpack.c.b16 %v787, %v783
    %v992 = vpack.c.b16 %v788, %v784
    %v993 = vpack.c.b16 %v789, %v785
    %v994 = vpack.c.b16 %v790, %v786
    %v995 = vpack.c.b16 %v795, %v791
    %v996 = vpack.c.b16 %v796, %v792
    %v997 = vpack.c.b16 %v797, %v793
    %v998 = vpack.c.b16 %v798, %v794
    %v999 = vpack.c.b16 %v803, %v799
    %v1000 = vpack.c.b16 %v804, %v800
    %v1001 = vpack.c.b16 %v805, %v801
    %v1002 = vpack.c.b16 %v806, %v802
    %v1003 = vpack.c.b16 %v811, %v807
    %v1004 = vpack.c.b16 %v812, %v808
    %v1005 = vpack.c.b16 %v813, %v809
    %v1006 = vpack.c.b16 %v814, %v810
    %v1007 = vpack.c.b16 %v819, %v815
    %v1008 = vpack.c.b16 %v820, %v816
    %v1009 = vpack.c.b16 %v821, %v817
    %v1010 = vpack.c.b16 %v822, %v818
    %v1011 = vpack.c.b16 %v827, %v823
    %v1012 = vpack.c.b16 %v828, %v824
    %v1013 = vpack.c.b16 %v829, %v825
    %v1014 = vpack.c.b16 %v830, %v826
    %v1015 = vpack.c.b16 %v835, %v831
    %v1016 = vpack.c.b16 %v836, %v832
    %v1017 = vpack.c.b16 %v837, %v833
    %v1018 = vpack.c.b16 %v838, %v834
    %v1019 = vpack.c.b16 %v843, %v839
    %v1020 = vpack.c.b16 %v844, %v840
    %v1021 = vpack.c.b16 %v845, %v841
    %v1022 = vpack.c.b16 %v846, %v842
    %v1023 = vpack.c.b16 %v851, %v847
    %v1024 = vpack.c.b16 %v852, %v848
    %v1025 = vpack.c.b16 %v853, %v849
    %v1026 = vpack.c.b16 %v854, %v850
    %v1027 = vpack.c.b16 %v859, %v855
    %v1028 = vpack.c.b16 %v860, %v856
    %v1029 = vpack.c.b16 %v861, %v857
    %v1030 = vpack.c.b16 %v862, %v858
    %v1031 = vpack.c.b16 %v867, %v863
    %v1032 = vpack.c.b16 %v868, %v864
    %v1033 = vpack.c.b16 %v869, %v865
    %v1034 = vpack.c.b16 %v870, %v866
    %v1035 = vpack.c.b16 %v875, %v871
    %v1036 = vpack.c.b16 %v876, %v872
    %v1037 = vpack.c.b16 %v877, %v873
    %v1038 = vpack.c.b16 %v878, %v874
    %v1039 = vpack.c.b16 %v883, %v879
    %v1040 = vpack.c.b16 %v884, %v880
    %v1041 = vpack.c.b16 %v885, %v881
    %v1042 = vpack.c.b16 %v886, %v882
    %v1043 = vpack.c.b16 %v891, %v887
    %v1044 = vpack.c.b16 %v892, %v888
    %v1045 = vpack.c.b16 %v893, %v889
    %v1046 = vpack.c.b16 %v894, %v890
    %v1047 = vpack.c.b16 %v899, %v895
    %v1048 = vpack.c.b16 %v900, %v896
    %v1049 = vpack.c.b16 %v901, %v897
    %v1050 = vpack.c.b16 %v902, %v898
    %v1051 = vpack.c.b16 %v907, %v903
    %v1052 = vpack.c.b16 %v908, %v904
    %v1053 = vpack.c.b16 %v909, %v905
    %v1054 = vpack.c.b16 %v910, %v906
    %v1055 = vpack.c.b16 %v915, %v911
    %v1056 = vpack.c.b16 %v916, %v912
    %v1057 = vpack.c.b16 %v917, %v913
    %v1058 = vpack.c.b16 %v918, %v914
    %v1059 = vpack.c.b16 %v923, %v919
    %v1060 = vpack.c.b16 %v924, %v920
    %v1061 = vpack.c.b16 %v925, %v921
    %v1062 = vpack.c.b16 %v926, %v922
    %v1063 = vpack.c.b16 %v931, %v927
    %v1064 = vpack.c.b16 %v932, %v928
    %v1065 = vpack.c.b16 %v933, %v929
    %v1066 = vpack.c.b16 %v934, %v930
    %v1067 = vpack.c.b16 %v939, %v935
    %v1068 = vpack.c.b16 %v940, %v936
    %v1069 = vpack.c.b16 %v941, %v937
    %v1070 = vpack.c.b16 %v942, %v938
    %1199 = vmatprep.subr.bf16.mxu0 %v944
    %1200 = vmatpush1.bf16.msra.mxu0 %v943
    %1201 = vmatprep.subr.bf16.mxu0 %v948
    %1202 = vmatpush1.bf16.msra.mxu0 %v947
    %1203 = vmatprep.subr.bf16.mxu0 %v952
    %1204 = vmatpush1.bf16.msra.mxu0 %v951
    %1205 = vmatprep.subr.bf16.mxu0 %v956
    %1206 = vmatpush1.bf16.msra.mxu0 %v955
    %1207 = vmatprep.subr.bf16.mxu0 %v960
    %1208 = vmatpush1.bf16.msra.mxu0 %v959
    %1209 = vmatprep.subr.bf16.mxu0 %v964
    %1210 = vmatpush1.bf16.msra.mxu0 %v963
    %1211 = vmatprep.subr.bf16.mxu0 %v968
    %1212 = vmatpush1.bf16.msra.mxu0 %v967
    %1213 = vmatprep.subr.bf16.mxu0 %v972
    %1214 = vmatpush1.bf16.msra.mxu0 %v971
    %1215 = vmatprep.subr.bf16.mxu0 %v976
    %1216 = vmatpush1.bf16.msra.mxu0 %v975
    %1217 = vmatprep.subr.bf16.mxu0 %v980
    %1218 = vmatpush1.bf16.msra.mxu0 %v979
    %1219 = vmatprep.subr.bf16.mxu0 %v984
    %1220 = vmatpush1.bf16.msra.mxu0 %v983
    %1221 = vmatprep.subr.bf16.mxu0 %v988
    %1222 = vmatpush1.bf16.msra.mxu0 %v987
    %1223 = vmatprep.subr.bf16.mxu0 %v992
    %1224 = vmatpush1.bf16.msra.mxu0 %v991
    %1225 = vmatprep.subr.bf16.mxu0 %v996
    %1226 = vmatpush1.bf16.msra.mxu0 %v995
    %1227 = vmatprep.subr.bf16.mxu0 %v1000
    %1228 = vmatpush1.bf16.msra.mxu0 %v999
    %1229 = vmatprep.subr.bf16.mxu0 %v1004
    %1230 = vmatpush1.bf16.msra.mxu0 %v1003
    %1231 = vmatprep.mubr.bf16.mxu0 %v378
    %1232 = vmatmul.mubr.bf16.gmra.mrb[0].mxu0 %v377
    %v1233 = vpop.f32.mrb[0].mxu0
    %v1234 = vadd.f32 %v542, %v1233
    %v1235 = vpop.f32.mrb[0].mxu0
    %v1236 = vadd.f32 %v546, %v1235
    %v1237 = vpop.f32.mrb[0].mxu0
    %v1238 = vadd.f32 %v542, %v1237
    %v1239 = vpop.f32.mrb[0].mxu0
    %v1240 = vadd.f32 %v546, %v1239
    %1241 = vmatprep.mubr.bf16.mxu0 %v382
    %1242 = vmatmul.mubr.bf16.gmra.mrb[0].mxu0 %v381
    %v1243 = vpop.f32.mrb[0].mxu0
    %v1244 = vadd.f32 %v542, %v1243
    %v1245 = vpop.f32.mrb[0].mxu0
    %v1246 = vadd.f32 %v546, %v1245
    %v1247 = vpop.f32.mrb[0].mxu0
    %v1248 = vadd.f32 %v542, %v1247
    %v1249 = vpop.f32.mrb[0].mxu0
    %v1250 = vadd.f32 %v546, %v1249
    %1251 = vmatprep.mubr.bf16.mxu0 %v386
    %1252 = vmatmul.mubr.bf16.gmra.mrb[0].mxu0 %v385
    %v1253 = vpop.f32.mrb[0].mxu0
    %v1254 = vadd.f32 %v542, %v1253
    %v1255 = vpop.f32.mrb[0].mxu0
    %v1256 = vadd.f32 %v546, %v1255
    %v1257 = vpop.f32.mrb[0].mxu0
    %v1258 = vadd.f32 %v542, %v1257
    %v1259 = vpop.f32.mrb[0].mxu0
    %v1260 = vadd.f32 %v546, %v1259
    %1261 = vmatprep.mubr.bf16.mxu0 %v390
    %1262 = vmatmul.mubr.bf16.gmra.mrb[0].mxu0 %v389
    %v1263 = vpop.f32.mrb[0].mxu0
    %v1264 = vadd.f32 %v542, %v1263
    %v1265 = vpop.f32.mrb[0].mxu0
    %v1266 = vadd.f32 %v546, %v1265
    %v1267 = vpop.f32.mrb[0].mxu0
    %v1268 = vadd.f32 %v542, %v1267
    %v1269 = vpop.f32.mrb[0].mxu0
    %v1270 = vadd.f32 %v546, %v1269
    %1271 = vmatprep.mubr.bf16.mxu0 %v394
    %1272 = vmatmul.mubr.bf16.gmra.mrb[0].mxu0 %v393
    %v1273 = vpop.f32.mrb[0].mxu0
    %v1274 = vadd.f32 %v542, %v1273
    %v1275 = vpop.f32.mrb[0].mxu0
    %v1276 = vadd.f32 %v546, %v1275
    %v1277 = vpop.f32.mrb[0].mxu0
    %v1278 = vadd.f32 %v542, %v1277
    %v1279 = vpop.f32.mrb[0].mxu0
    %v1280 = vadd.f32 %v546, %v1279
    %1281 = vmatprep.mubr.bf16.mxu0 %v398
    %1282 = vmatmul.mubr.bf16.gmra.mrb[0].mxu0 %v397
    %v1283 = vpop.f32.mrb[0].mxu0
    %v1284 = vadd.f32 %v542, %v1283
    %v1285 = vpop.f32.mrb[0].mxu0
    %v1286 = vadd.f32 %v546, %v1285
    %v1287 = vpop.f32.mrb[0].mxu0
    %v1288 = vadd.f32 %v542, %v1287
    %v1289 = vpop.f32.mrb[0].mxu0
    %v1290 = vadd.f32 %v546, %v1289
    %1291 = vmatprep.mubr.bf16.mxu0 %v402
    %1292 = vmatmul.mubr.bf16.gmra.mrb[0].mxu0 %v401
    %v1293 = vpop.f32.mrb[0].mxu0
    %v1294 = vadd.f32 %v542, %v1293
    %v1295 = vpop.f32.mrb[0].mxu0
    %v1296 = vadd.f32 %v546, %v1295
    %v1297 = vpop.f32.mrb[0].mxu0
    %v1298 = vadd.f32 %v542, %v1297
    %v1299 = vpop.f32.mrb[0].mxu0
    %v1300 = vadd.f32 %v546, %v1299
    %1301 = vmatprep.mubr.bf16.mxu0 %v406
    %1302 = vmatmul.mubr.bf16.gmra.mrb[0].mxu0 %v405
    %v1303 = vpop.f32.mrb[0].mxu0
    %v1304 = vadd.f32 %v542, %v1303
    %v1305 = vpop.f32.mrb[0].mxu0
    %v1306 = vadd.f32 %v546, %v1305
    %v1307 = vpop.f32.mrb[0].mxu0
    %v1308 = vadd.f32 %v542, %v1307
    %v1309 = vpop.f32.mrb[0].mxu0
    %v1310 = vadd.f32 %v546, %v1309
    %1311 = vdwg.mxu0
    %1312 = vmatprep.subr.bf16.mxu0 %v1008
    %1313 = vmatpush1.bf16.msra.mxu0 %v1007
    %1314 = vmatprep.subr.bf16.mxu0 %v1012
    %1315 = vmatpush1.bf16.msra.mxu0 %v1011
    %1316 = vmatprep.subr.bf16.mxu0 %v1016
    %1317 = vmatpush1.bf16.msra.mxu0 %v1015
    %1318 = vmatprep.subr.bf16.mxu0 %v1020
    %1319 = vmatpush1.bf16.msra.mxu0 %v1019
    %1320 = vmatprep.subr.bf16.mxu0 %v1024
    %1321 = vmatpush1.bf16.msra.mxu0 %v1023
    %1322 = vmatprep.subr.bf16.mxu0 %v1028
    %1323 = vmatpush1.bf16.msra.mxu0 %v1027
    %1324 = vmatprep.subr.bf16.mxu0 %v1032
    %1325 = vmatpush1.bf16.msra.mxu0 %v1031
    %1326 = vmatprep.subr.bf16.mxu0 %v1036
    %1327 = vmatpush1.bf16.msra.mxu0 %v1035
    %1328 = vmatprep.subr.bf16.mxu0 %v1040
    %1329 = vmatpush1.bf16.msra.mxu0 %v1039
    %1330 = vmatprep.subr.bf16.mxu0 %v1044
    %1331 = vmatpush1.bf16.msra.mxu0 %v1043
    %1332 = vmatprep.subr.bf16.mxu0 %v1048
    %1333 = vmatpush1.bf16.msra.mxu0 %v1047
    %1334 = vmatprep.subr.bf16.mxu0 %v1052
    %1335 = vmatpush1.bf16.msra.mxu0 %v1051
    %1336 = vmatprep.subr.bf16.mxu0 %v1056
    %1337 = vmatpush1.bf16.msra.mxu0 %v1055
    %1338 = vmatprep.subr.bf16.mxu0 %v1060
    %1339 = vmatpush1.bf16.msra.mxu0 %v1059
    %1340 = vmatprep.subr.bf16.mxu0 %v1064
    %1341 = vmatpush1.bf16.msra.mxu0 %v1063
    %1342 = vmatprep.subr.bf16.mxu0 %v1068
    %1343 = vmatpush1.bf16.msra.mxu0 %v1067
    %1344 = vmatprep.mubr.bf16.mxu0 %v380
    %1345 = vmatmul.mubr.bf16.gmra.mrb[0].mxu0 %v379
    %v1346 = vpop.f32.mrb[0].mxu0
    %v1347 = vadd.f32 %v1234, %v1346
    %v1348 = vpop.f32.mrb[0].mxu0
    %v1349 = vadd.f32 %v1236, %v1348
    %v1350 = vpop.f32.mrb[0].mxu0
    %v1351 = vadd.f32 %v1238, %v1350
    %v1352 = vpop.f32.mrb[0].mxu0
    %v1353 = vadd.f32 %v1240, %v1352
    %1354 = vmatprep.mubr.bf16.mxu0 %v384
    %1355 = vmatmul.mubr.bf16.gmra.mrb[0].mxu0 %v383
    %v1356 = vpop.f32.mrb[0].mxu0
    %v1357 = vadd.f32 %v1244, %v1356
    %v1358 = vpop.f32.mrb[0].mxu0
    %v1359 = vadd.f32 %v1246, %v1358
    %v1360 = vpop.f32.mrb[0].mxu0
    %v1361 = vadd.f32 %v1248, %v1360
    %v1362 = vpop.f32.mrb[0].mxu0
    %v1363 = vadd.f32 %v1250, %v1362
    %1364 = vmatprep.mubr.bf16.mxu0 %v388
    %1365 = vmatmul.mubr.bf16.gmra.mrb[0].mxu0 %v387
    %v1366 = vpop.f32.mrb[0].mxu0
    %v1367 = vadd.f32 %v1254, %v1366
    %v1368 = vpop.f32.mrb[0].mxu0
    %v1369 = vadd.f32 %v1256, %v1368
    %v1370 = vpop.f32.mrb[0].mxu0
    %v1371 = vadd.f32 %v1258, %v1370
    %v1372 = vpop.f32.mrb[0].mxu0
    %v1373 = vadd.f32 %v1260, %v1372
    %1374 = vmatprep.mubr.bf16.mxu0 %v392
    %1375 = vmatmul.mubr.bf16.gmra.mrb[0].mxu0 %v391
    %v1376 = vpop.f32.mrb[0].mxu0
    %v1377 = vadd.f32 %v1264, %v1376
    %v1378 = vpop.f32.mrb[0].mxu0
    %v1379 = vadd.f32 %v1266, %v1378
    %v1380 = vpop.f32.mrb[0].mxu0
    %v1381 = vadd.f32 %v1268, %v1380
    %v1382 = vpop.f32.mrb[0].mxu0
    %v1383 = vadd.f32 %v1270, %v1382
    %1384 = vmatprep.mubr.bf16.mxu0 %v396
    %1385 = vmatmul.mubr.bf16.gmra.mrb[0].mxu0 %v395
    %v1386 = vpop.f32.mrb[0].mxu0
    %v1387 = vadd.f32 %v1274, %v1386
    %v1388 = vpop.f32.mrb[0].mxu0
    %v1389 = vadd.f32 %v1276, %v1388
    %v1390 = vpop.f32.mrb[0].mxu0
    %v1391 = vadd.f32 %v1278, %v1390
    %v1392 = vpop.f32.mrb[0].mxu0
    %v1393 = vadd.f32 %v1280, %v1392
    %1394 = vmatprep.mubr.bf16.mxu0 %v400
    %1395 = vmatmul.mubr.bf16.gmra.mrb[0].mxu0 %v399
    %v1396 = vpop.f32.mrb[0].mxu0
    %v1397 = vadd.f32 %v1284, %v1396
    %v1398 = vpop.f32.mrb[0].mxu0
    %v1399 = vadd.f32 %v1286, %v1398
    %v1400 = vpop.f32.mrb[0].mxu0
    %v1401 = vadd.f32 %v1288, %v1400
    %v1402 = vpop.f32.mrb[0].mxu0
    %v1403 = vadd.f32 %v1290, %v1402
    %1404 = vmatprep.mubr.bf16.mxu0 %v404
    %1405 = vmatmul.mubr.bf16.gmra.mrb[0].mxu0 %v403
    %v1406 = vpop.f32.mrb[0].mxu0
    %v1407 = vadd.f32 %v1294, %v1406
    %v1408 = vpop.f32.mrb[0].mxu0
    %v1409 = vadd.f32 %v1296, %v1408
    %v1410 = vpop.f32.mrb[0].mxu0
    %v1411 = vadd.f32 %v1298, %v1410
    %v1412 = vpop.f32.mrb[0].mxu0
    %v1413 = vadd.f32 %v1300, %v1412
    %1414 = vmatprep.mubr.bf16.mxu0 %v408
    %1415 = vmatmul.mubr.bf16.gmra.mrb[0].mxu0 %v407
    %v1416 = vpop.f32.mrb[0].mxu0
    %v1417 = vadd.f32 %v1304, %v1416
    %v1418 = vpop.f32.mrb[0].mxu0
    %v1419 = vadd.f32 %v1306, %v1418
    %v1420 = vpop.f32.mrb[0].mxu0
    %v1421 = vadd.f32 %v1308, %v1420
    %v1422 = vpop.f32.mrb[0].mxu0
    %v1423 = vadd.f32 %v1310, %v1422
    %1424 = vdwg.mxu0
    %1425 = vmatprep.subr.bf16.mxu0 %v946
    %1426 = vmatpush1.bf16.msra.mxu0 %v945
    %1427 = vmatprep.subr.bf16.mxu0 %v950
    %1428 = vmatpush1.bf16.msra.mxu0 %v949
    %1429 = vmatprep.subr.bf16.mxu0 %v954
    %1430 = vmatpush1.bf16.msra.mxu0 %v953
    %1431 = vmatprep.subr.bf16.mxu0 %v958
    %1432 = vmatpush1.bf16.msra.mxu0 %v957
    %1433 = vmatprep.subr.bf16.mxu0 %v962
    %1434 = vmatpush1.bf16.msra.mxu0 %v961
    %1435 = vmatprep.subr.bf16.mxu0 %v966
    %1436 = vmatpush1.bf16.msra.mxu0 %v965
    %1437 = vmatprep.subr.bf16.mxu0 %v970
    %1438 = vmatpush1.bf16.msra.mxu0 %v969
    %1439 = vmatprep.subr.bf16.mxu0 %v974
    %1440 = vmatpush1.bf16.msra.mxu0 %v973
    %1441 = vmatprep.subr.bf16.mxu0 %v978
    %1442 = vmatpush1.bf16.msra.mxu0 %v977
    %1443 = vmatprep.subr.bf16.mxu0 %v982
    %1444 = vmatpush1.bf16.msra.mxu0 %v981
    %1445 = vmatprep.subr.bf16.mxu0 %v986
    %1446 = vmatpush1.bf16.msra.mxu0 %v985
    %1447 = vmatprep.subr.bf16.mxu0 %v990
    %1448 = vmatpush1.bf16.msra.mxu0 %v989
    %1449 = vmatprep.subr.bf16.mxu0 %v994
    %1450 = vmatpush1.bf16.msra.mxu0 %v993
    %1451 = vmatprep.subr.bf16.mxu0 %v998
    %1452 = vmatpush1.bf16.msra.mxu0 %v997
    %1453 = vmatprep.subr.bf16.mxu0 %v1002
    %1454 = vmatpush1.bf16.msra.mxu0 %v1001
    %1455 = vmatprep.subr.bf16.mxu0 %v1006
    %1456 = vmatpush1.bf16.msra.mxu0 %v1005
    %1457 = vmatprep.mubr.bf16.mxu0 %v378
    %1458 = vmatmul.mubr.bf16.gmra.mrb[0].mxu0 %v377
    %v1459 = vpop.f32.mrb[0].mxu0
    %v1460 = vadd.f32 %v550, %v1459
    %v1461 = vpop.f32.mrb[0].mxu0
    %v1462 = vadd.f32 %v554, %v1461
    %v1463 = vpop.f32.mrb[0].mxu0
    %v1464 = vadd.f32 %v550, %v1463
    %v1465 = vpop.f32.mrb[0].mxu0
    %v1466 = vadd.f32 %v554, %v1465
    %1467 = vmatprep.mubr.bf16.mxu0 %v382
    %1468 = vmatmul.mubr.bf16.gmra.mrb[0].mxu0 %v381
    %v1469 = vpop.f32.mrb[0].mxu0
    %v1470 = vadd.f32 %v550, %v1469
    %v1471 = vpop.f32.mrb[0].mxu0
    %v1472 = vadd.f32 %v554, %v1471
    %v1473 = vpop.f32.mrb[0].mxu0
    %v1474 = vadd.f32 %v550, %v1473
    %v1475 = vpop.f32.mrb[0].mxu0
    %v1476 = vadd.f32 %v554, %v1475
    %1477 = vmatprep.mubr.bf16.mxu0 %v386
    %1478 = vmatmul.mubr.bf16.gmra.mrb[0].mxu0 %v385
    %v1479 = vpop.f32.mrb[0].mxu0
    %v1480 = vadd.f32 %v550, %v1479
    %v1481 = vpop.f32.mrb[0].mxu0
    %v1482 = vadd.f32 %v554, %v1481
    %v1483 = vpop.f32.mrb[0].mxu0
    %v1484 = vadd.f32 %v550, %v1483
    %v1485 = vpop.f32.mrb[0].mxu0
    %v1486 = vadd.f32 %v554, %v1485
    %1487 = vmatprep.mubr.bf16.mxu0 %v390
    %1488 = vmatmul.mubr.bf16.gmra.mrb[0].mxu0 %v389
    %v1489 = vpop.f32.mrb[0].mxu0
    %v1490 = vadd.f32 %v550, %v1489
    %v1491 = vpop.f32.mrb[0].mxu0
    %v1492 = vadd.f32 %v554, %v1491
    %v1493 = vpop.f32.mrb[0].mxu0
    %v1494 = vadd.f32 %v550, %v1493
    %v1495 = vpop.f32.mrb[0].mxu0
    %v1496 = vadd.f32 %v554, %v1495
    %1497 = vmatprep.mubr.bf16.mxu0 %v394
    %1498 = vmatmul.mubr.bf16.gmra.mrb[0].mxu0 %v393
    %v1499 = vpop.f32.mrb[0].mxu0
    %v1500 = vadd.f32 %v550, %v1499
    %v1501 = vpop.f32.mrb[0].mxu0
    %v1502 = vadd.f32 %v554, %v1501
    %v1503 = vpop.f32.mrb[0].mxu0
    %v1504 = vadd.f32 %v550, %v1503
    %v1505 = vpop.f32.mrb[0].mxu0
    %v1506 = vadd.f32 %v554, %v1505
    %1507 = vmatprep.mubr.bf16.mxu0 %v398
    %1508 = vmatmul.mubr.bf16.gmra.mrb[0].mxu0 %v397
    %v1509 = vpop.f32.mrb[0].mxu0
    %v1510 = vadd.f32 %v550, %v1509
    %v1511 = vpop.f32.mrb[0].mxu0
    %v1512 = vadd.f32 %v554, %v1511
    %v1513 = vpop.f32.mrb[0].mxu0
    %v1514 = vadd.f32 %v550, %v1513
    %v1515 = vpop.f32.mrb[0].mxu0
    %v1516 = vadd.f32 %v554, %v1515
    %1517 = vmatprep.mubr.bf16.mxu0 %v402
    %1518 = vmatmul.mubr.bf16.gmra.mrb[0].mxu0 %v401
    %v1519 = vpop.f32.mrb[0].mxu0
    %v1520 = vadd.f32 %v550, %v1519
    %v1521 = vpop.f32.mrb[0].mxu0
    %v1522 = vadd.f32 %v554, %v1521
    %v1523 = vpop.f32.mrb[0].mxu0
    %v1524 = vadd.f32 %v550, %v1523
    %v1525 = vpop.f32.mrb[0].mxu0
    %v1526 = vadd.f32 %v554, %v1525
    %1527 = vmatprep.mubr.bf16.mxu0 %v406
    %1528 = vmatmul.mubr.bf16.gmra.mrb[0].mxu0 %v405
    %v1529 = vpop.f32.mrb[0].mxu0
    %v1530 = vadd.f32 %v550, %v1529
    %v1531 = vpop.f32.mrb[0].mxu0
    %v1532 = vadd.f32 %v554, %v1531
    %v1533 = vpop.f32.mrb[0].mxu0
    %v1534 = vadd.f32 %v550, %v1533
    %v1535 = vpop.f32.mrb[0].mxu0
    %v1536 = vadd.f32 %v554, %v1535
    %1537 = vdwg.mxu0
    %1538 = vmatprep.subr.bf16.mxu0 %v1010
    %1539 = vmatpush1.bf16.msra.mxu0 %v1009
    %1540 = vmatprep.subr.bf16.mxu0 %v1014
    %1541 = vmatpush1.bf16.msra.mxu0 %v1013
    %1542 = vmatprep.subr.bf16.mxu0 %v1018
    %1543 = vmatpush1.bf16.msra.mxu0 %v1017
    %1544 = vmatprep.subr.bf16.mxu0 %v1022
    %1545 = vmatpush1.bf16.msra.mxu0 %v1021
    %1546 = vmatprep.subr.bf16.mxu0 %v1026
    %1547 = vmatpush1.bf16.msra.mxu0 %v1025
    %1548 = vmatprep.subr.bf16.mxu0 %v1030
    %1549 = vmatpush1.bf16.msra.mxu0 %v1029
    %1550 = vmatprep.subr.bf16.mxu0 %v1034
    %1551 = vmatpush1.bf16.msra.mxu0 %v1033
    %1552 = vmatprep.subr.bf16.mxu0 %v1038
    %1553 = vmatpush1.bf16.msra.mxu0 %v1037
    %1554 = vmatprep.subr.bf16.mxu0 %v1042
    %1555 = vmatpush1.bf16.msra.mxu0 %v1041
    %1556 = vmatprep.subr.bf16.mxu0 %v1046
    %1557 = vmatpush1.bf16.msra.mxu0 %v1045
    %1558 = vmatprep.subr.bf16.mxu0 %v1050
    %1559 = vmatpush1.bf16.msra.mxu0 %v1049
    %1560 = vmatprep.subr.bf16.mxu0 %v1054
    %1561 = vmatpush1.bf16.msra.mxu0 %v1053
    %1562 = vmatprep.subr.bf16.mxu0 %v1058
    %1563 = vmatpush1.bf16.msra.mxu0 %v1057
    %1564 = vmatprep.subr.bf16.mxu0 %v1062
    %1565 = vmatpush1.bf16.msra.mxu0 %v1061
    %1566 = vmatprep.subr.bf16.mxu0 %v1066
    %1567 = vmatpush1.bf16.msra.mxu0 %v1065
    %1568 = vmatprep.subr.bf16.mxu0 %v1070
    %1569 = vmatpush1.bf16.msra.mxu0 %v1069
    %1570 = vmatprep.mubr.bf16.mxu0 %v380
    %1571 = vmatmul.mubr.bf16.gmra.mrb[0].mxu0 %v379
    %v1572 = vpop.f32.mrb[0].mxu0
    %v1573 = vadd.f32 %v1460, %v1572
    %v1574 = vpop.f32.mrb[0].mxu0
    %v1575 = vadd.f32 %v1462, %v1574
    %v1576 = vpop.f32.mrb[0].mxu0
    %v1577 = vadd.f32 %v1464, %v1576
    %v1578 = vpop.f32.mrb[0].mxu0
    %v1579 = vadd.f32 %v1466, %v1578
    %1580 = vmatprep.mubr.bf16.mxu0 %v384
    %1581 = vmatmul.mubr.bf16.gmra.mrb[0].mxu0 %v383
    %v1582 = vpop.f32.mrb[0].mxu0
    %v1583 = vadd.f32 %v1470, %v1582
    %v1584 = vpop.f32.mrb[0].mxu0
    %v1585 = vadd.f32 %v1472, %v1584
    %v1586 = vpop.f32.mrb[0].mxu0
    %v1587 = vadd.f32 %v1474, %v1586
    %v1588 = vpop.f32.mrb[0].mxu0
    %v1589 = vadd.f32 %v1476, %v1588
    %1590 = vmatprep.mubr.bf16.mxu0 %v388
    %1591 = vmatmul.mubr.bf16.gmra.mrb[0].mxu0 %v387
    %v1592 = vpop.f32.mrb[0].mxu0
    %v1593 = vadd.f32 %v1480, %v1592
    %v1594 = vpop.f32.mrb[0].mxu0
    %v1595 = vadd.f32 %v1482, %v1594
    %v1596 = vpop.f32.mrb[0].mxu0
    %v1597 = vadd.f32 %v1484, %v1596
    %v1598 = vpop.f32.mrb[0].mxu0
    %v1599 = vadd.f32 %v1486, %v1598
    %1600 = vmatprep.mubr.bf16.mxu0 %v392
    %1601 = vmatmul.mubr.bf16.gmra.mrb[0].mxu0 %v391
    %v1602 = vpop.f32.mrb[0].mxu0
    %v1603 = vadd.f32 %v1490, %v1602
    %v1604 = vpop.f32.mrb[0].mxu0
    %v1605 = vadd.f32 %v1492, %v1604
    %v1606 = vpop.f32.mrb[0].mxu0
    %v1607 = vadd.f32 %v1494, %v1606
    %v1608 = vpop.f32.mrb[0].mxu0
    %v1609 = vadd.f32 %v1496, %v1608
    %1610 = vmatprep.mubr.bf16.mxu0 %v396
    %1611 = vmatmul.mubr.bf16.gmra.mrb[0].mxu0 %v395
    %v1612 = vpop.f32.mrb[0].mxu0
    %v1613 = vadd.f32 %v1500, %v1612
    %v1614 = vpop.f32.mrb[0].mxu0
    %v1615 = vadd.f32 %v1502, %v1614
    %v1616 = vpop.f32.mrb[0].mxu0
    %v1617 = vadd.f32 %v1504, %v1616
    %v1618 = vpop.f32.mrb[0].mxu0
    %v1619 = vadd.f32 %v1506, %v1618
    %1620 = vmatprep.mubr.bf16.mxu0 %v400
    %1621 = vmatmul.mubr.bf16.gmra.mrb[0].mxu0 %v399
    %v1622 = vpop.f32.mrb[0].mxu0
    %v1623 = vadd.f32 %v1510, %v1622
    %v1624 = vpop.f32.mrb[0].mxu0
    %v1625 = vadd.f32 %v1512, %v1624
    %v1626 = vpop.f32.mrb[0].mxu0
    %v1627 = vadd.f32 %v1514, %v1626
    %v1628 = vpop.f32.mrb[0].mxu0
    %v1629 = vadd.f32 %v1516, %v1628
    %1630 = vmatprep.mubr.bf16.mxu0 %v404
    %1631 = vmatmul.mubr.bf16.gmra.mrb[0].mxu0 %v403
    %v1632 = vpop.f32.mrb[0].mxu0
    %v1633 = vadd.f32 %v1520, %v1632
    %v1634 = vpop.f32.mrb[0].mxu0
    %v1635 = vadd.f32 %v1522, %v1634
    %v1636 = vpop.f32.mrb[0].mxu0
    %v1637 = vadd.f32 %v1524, %v1636
    %v1638 = vpop.f32.mrb[0].mxu0
    %v1639 = vadd.f32 %v1526, %v1638
    %1640 = vmatprep.mubr.bf16.mxu0 %v408
    %1641 = vmatmul.mubr.bf16.gmra.mrb[0].mxu0 %v407
    %v1642 = vpop.f32.mrb[0].mxu0
    %v1643 = vadd.f32 %v1530, %v1642
    %v1644 = vpop.f32.mrb[0].mxu0
    %v1645 = vadd.f32 %v1532, %v1644
    %v1646 = vpop.f32.mrb[0].mxu0
    %v1647 = vadd.f32 %v1534, %v1646
    %v1648 = vpop.f32.mrb[0].mxu0
    %v1649 = vadd.f32 %v1536, %v1648
    %1650 = vdwg.mxu0
    %vm1651 = vcmp.ge.f32.partialorder %v1347, 0.0
    %vm1652 = vcmp.ge.f32.partialorder %v1349, 0.0
    %vm1653 = vcmp.ge.f32.partialorder %v1573, 0.0
    %vm1654 = vcmp.ge.f32.partialorder %v1575, 0.0
    %vm1655 = vcmp.ge.f32.partialorder %v1351, 0.0
    %vm1656 = vcmp.ge.f32.partialorder %v1353, 0.0
    %vm1657 = vcmp.ge.f32.partialorder %v1577, 0.0
    %vm1658 = vcmp.ge.f32.partialorder %v1579, 0.0
    %vm1659 = vcmp.ge.f32.partialorder %v1357, 0.0
    %vm1660 = vcmp.ge.f32.partialorder %v1359, 0.0
    %vm1661 = vcmp.ge.f32.partialorder %v1583, 0.0
    %vm1662 = vcmp.ge.f32.partialorder %v1585, 0.0
    %vm1663 = vcmp.ge.f32.partialorder %v1361, 0.0
    %vm1664 = vcmp.ge.f32.partialorder %v1363, 0.0
    %vm1665 = vcmp.ge.f32.partialorder %v1587, 0.0
    %vm1666 = vcmp.ge.f32.partialorder %v1589, 0.0
    %vm1667 = vcmp.ge.f32.partialorder %v1367, 0.0
    %vm1668 = vcmp.ge.f32.partialorder %v1369, 0.0
    %vm1669 = vcmp.ge.f32.partialorder %v1593, 0.0
    %vm1670 = vcmp.ge.f32.partialorder %v1595, 0.0
    %vm1671 = vcmp.ge.f32.partialorder %v1371, 0.0
    %vm1672 = vcmp.ge.f32.partialorder %v1373, 0.0
    %vm1673 = vcmp.ge.f32.partialorder %v1597, 0.0
    %vm1674 = vcmp.ge.f32.partialorder %v1599, 0.0
    %vm1675 = vcmp.ge.f32.partialorder %v1377, 0.0
    %vm1676 = vcmp.ge.f32.partialorder %v1379, 0.0
    %vm1677 = vcmp.ge.f32.partialorder %v1603, 0.0
    %vm1678 = vcmp.ge.f32.partialorder %v1605, 0.0
    %vm1679 = vcmp.ge.f32.partialorder %v1381, 0.0
    %vm1680 = vcmp.ge.f32.partialorder %v1383, 0.0
    %vm1681 = vcmp.ge.f32.partialorder %v1607, 0.0
    %vm1682 = vcmp.ge.f32.partialorder %v1609, 0.0
    %vm1683 = vcmp.ge.f32.partialorder %v1387, 0.0
    %vm1684 = vcmp.ge.f32.partialorder %v1389, 0.0
    %vm1685 = vcmp.ge.f32.partialorder %v1613, 0.0
    %vm1686 = vcmp.ge.f32.partialorder %v1615, 0.0
    %vm1687 = vcmp.ge.f32.partialorder %v1391, 0.0
    %vm1688 = vcmp.ge.f32.partialorder %v1393, 0.0
    %vm1689 = vcmp.ge.f32.partialorder %v1617, 0.0
    %vm1690 = vcmp.ge.f32.partialorder %v1619, 0.0
    %vm1691 = vcmp.ge.f32.partialorder %v1397, 0.0
    %vm1692 = vcmp.ge.f32.partialorder %v1399, 0.0
    %vm1693 = vcmp.ge.f32.partialorder %v1623, 0.0
    %vm1694 = vcmp.ge.f32.partialorder %v1625, 0.0
    %vm1695 = vcmp.ge.f32.partialorder %v1401, 0.0
    %vm1696 = vcmp.ge.f32.partialorder %v1403, 0.0
    %vm1697 = vcmp.ge.f32.partialorder %v1627, 0.0
    %vm1698 = vcmp.ge.f32.partialorder %v1629, 0.0
    %vm1699 = vcmp.ge.f32.partialorder %v1407, 0.0
    %vm1700 = vcmp.ge.f32.partialorder %v1409, 0.0
    %vm1701 = vcmp.ge.f32.partialorder %v1633, 0.0
    %vm1702 = vcmp.ge.f32.partialorder %v1635, 0.0
    %vm1703 = vcmp.ge.f32.partialorder %v1411, 0.0
    %vm1704 = vcmp.ge.f32.partialorder %v1413, 0.0
    %vm1705 = vcmp.ge.f32.partialorder %v1637, 0.0
    %vm1706 = vcmp.ge.f32.partialorder %v1639, 0.0
    %vm1707 = vcmp.ge.f32.partialorder %v1417, 0.0
    %vm1708 = vcmp.ge.f32.partialorder %v1419, 0.0
    %vm1709 = vcmp.ge.f32.partialorder %v1643, 0.0
    %vm1710 = vcmp.ge.f32.partialorder %v1645, 0.0
    %vm1711 = vcmp.ge.f32.partialorder %v1421, 0.0
    %vm1712 = vcmp.ge.f32.partialorder %v1423, 0.0
    %vm1713 = vcmp.ge.f32.partialorder %v1647, 0.0
    %vm1714 = vcmp.ge.f32.partialorder %v1649, 0.0
    %v1715 = vmul.f32 %v1347, 1.4142135
    %v1716 = vmul.f32 %v1349, 1.4142135
    %v1717 = vmul.f32 %v1573, 1.4142135
    %v1718 = vmul.f32 %v1575, 1.4142135
    %v1719 = vmul.f32 %v1351, 1.4142135
    %v1720 = vmul.f32 %v1353, 1.4142135
    %v1721 = vmul.f32 %v1577, 1.4142135
    %v1722 = vmul.f32 %v1579, 1.4142135
    %v1723 = vmul.f32 %v1357, 1.4142135
    %v1724 = vmul.f32 %v1359, 1.4142135
    %v1725 = vmul.f32 %v1583, 1.4142135
    %v1726 = vmul.f32 %v1585, 1.4142135
    %v1727 = vmul.f32 %v1361, 1.4142135
    %v1728 = vmul.f32 %v1363, 1.4142135
    %v1729 = vmul.f32 %v1587, 1.4142135
    %v1730 = vmul.f32 %v1589, 1.4142135
    %v1731 = vmul.f32 %v1367, 1.4142135
    %v1732 = vmul.f32 %v1369, 1.4142135
    %v1733 = vmul.f32 %v1593, 1.4142135
    %v1734 = vmul.f32 %v1595, 1.4142135
    %v1735 = vmul.f32 %v1371, 1.4142135
    %v1736 = vmul.f32 %v1373, 1.4142135
    %v1737 = vmul.f32 %v1597, 1.4142135
    %v1738 = vmul.f32 %v1599, 1.4142135
    %v1739 = vmul.f32 %v1377, 1.4142135
    %v1740 = vmul.f32 %v1379, 1.4142135
    %v1741 = vmul.f32 %v1603, 1.4142135
    %v1742 = vmul.f32 %v1605, 1.4142135
    %v1743 = vmul.f32 %v1381, 1.4142135
    %v1744 = vmul.f32 %v1383, 1.4142135
    %v1745 = vmul.f32 %v1607, 1.4142135
    %v1746 = vmul.f32 %v1609, 1.4142135
    %v1747 = vmul.f32 %v1387, 1.4142135
    %v1748 = vmul.f32 %v1389, 1.4142135
    %v1749 = vmul.f32 %v1613, 1.4142135
    %v1750 = vmul.f32 %v1615, 1.4142135
    %v1751 = vmul.f32 %v1391, 1.4142135
    %v1752 = vmul.f32 %v1393, 1.4142135
    %v1753 = vmul.f32 %v1617, 1.4142135
    %v1754 = vmul.f32 %v1619, 1.4142135
    %v1755 = vmul.f32 %v1397, 1.4142135
    %v1756 = vmul.f32 %v1399, 1.4142135
    %v1757 = vmul.f32 %v1623, 1.4142135
    %v1758 = vmul.f32 %v1625, 1.4142135
    %v1759 = vmul.f32 %v1401, 1.4142135
    %v1760 = vmul.f32 %v1403, 1.4142135
    %v1761 = vmul.f32 %v1627, 1.4142135
    %v1762 = vmul.f32 %v1629, 1.4142135
    %v1763 = vmul.f32 %v1407, 1.4142135
    %v1764 = vmul.f32 %v1409, 1.4142135
    %v1765 = vmul.f32 %v1633, 1.4142135
    %v1766 = vmul.f32 %v1635, 1.4142135
    %v1767 = vmul.f32 %v1411, 1.4142135
    %v1768 = vmul.f32 %v1413, 1.4142135
    %v1769 = vmul.f32 %v1637, 1.4142135
    %v1770 = vmul.f32 %v1639, 1.4142135
    %v1771 = vmul.f32 %v1417, 1.4142135
    %v1772 = vmul.f32 %v1419, 1.4142135
    %v1773 = vmul.f32 %v1643, 1.4142135
    %v1774 = vmul.f32 %v1645, 1.4142135
    %v1775 = vmul.f32 %v1421, 1.4142135
    %v1776 = vmul.f32 %v1423, 1.4142135
    %v1777 = vmul.f32 %v1647, 1.4142135
    %v1778 = vmul.f32 %v1649, 1.4142135
    %v1779 = vmul.f32 %v1347, 0.28284273
    %v1780 = vmul.f32 %v1349, 0.28284273
    %v1781 = vmul.f32 %v1573, 0.28284273
    %v1782 = vmul.f32 %v1575, 0.28284273
    %v1783 = vmul.f32 %v1351, 0.28284273
    %v1784 = vmul.f32 %v1353, 0.28284273
    %v1785 = vmul.f32 %v1577, 0.28284273
    %v1786 = vmul.f32 %v1579, 0.28284273
    %v1787 = vmul.f32 %v1357, 0.28284273
    %v1788 = vmul.f32 %v1359, 0.28284273
    %v1789 = vmul.f32 %v1583, 0.28284273
    %v1790 = vmul.f32 %v1585, 0.28284273
    %v1791 = vmul.f32 %v1361, 0.28284273
    %v1792 = vmul.f32 %v1363, 0.28284273
    %v1793 = vmul.f32 %v1587, 0.28284273
    %v1794 = vmul.f32 %v1589, 0.28284273
    %v1795 = vmul.f32 %v1367, 0.28284273
    %v1796 = vmul.f32 %v1369, 0.28284273
    %v1797 = vmul.f32 %v1593, 0.28284273
    %v1798 = vmul.f32 %v1595, 0.28284273
    %v1799 = vmul.f32 %v1371, 0.28284273
    %v1800 = vmul.f32 %v1373, 0.28284273
    %v1801 = vmul.f32 %v1597, 0.28284273
    %v1802 = vmul.f32 %v1599, 0.28284273
    %v1803 = vmul.f32 %v1377, 0.28284273
    %v1804 = vmul.f32 %v1379, 0.28284273
    %v1805 = vmul.f32 %v1603, 0.28284273
    %v1806 = vmul.f32 %v1605, 0.28284273
    %v1807 = vmul.f32 %v1381, 0.28284273
    %v1808 = vmul.f32 %v1383, 0.28284273
    %v1809 = vmul.f32 %v1607, 0.28284273
    %v1810 = vmul.f32 %v1609, 0.28284273
    %v1811 = vmul.f32 %v1387, 0.28284273
    %v1812 = vmul.f32 %v1389, 0.28284273
    %v1813 = vmul.f32 %v1613, 0.28284273
    %v1814 = vmul.f32 %v1615, 0.28284273
    %v1815 = vmul.f32 %v1391, 0.28284273
    %v1816 = vmul.f32 %v1393, 0.28284273
    %v1817 = vmul.f32 %v1617, 0.28284273
    %v1818 = vmul.f32 %v1619, 0.28284273
    %v1819 = vmul.f32 %v1397, 0.28284273
    %v1820 = vmul.f32 %v1399, 0.28284273
    %v1821 = vmul.f32 %v1623, 0.28284273
    %v1822 = vmul.f32 %v1625, 0.28284273
    %v1823 = vmul.f32 %v1401, 0.28284273
    %v1824 = vmul.f32 %v1403, 0.28284273
    %v1825 = vmul.f32 %v1627, 0.28284273
    %v1826 = vmul.f32 %v1629, 0.28284273
    %v1827 = vmul.f32 %v1407, 0.28284273
    %v1828 = vmul.f32 %v1409, 0.28284273
    %v1829 = vmul.f32 %v1633, 0.28284273
    %v1830 = vmul.f32 %v1635, 0.28284273
    %v1831 = vmul.f32 %v1411, 0.28284273
    %v1832 = vmul.f32 %v1413, 0.28284273
    %v1833 = vmul.f32 %v1637, 0.28284273
    %v1834 = vmul.f32 %v1639, 0.28284273
    %v1835 = vmul.f32 %v1417, 0.28284273
    %v1836 = vmul.f32 %v1419, 0.28284273
    %v1837 = vmul.f32 %v1643, 0.28284273
    %v1838 = vmul.f32 %v1645, 0.28284273
    %v1839 = vmul.f32 %v1421, 0.28284273
    %v1840 = vmul.f32 %v1423, 0.28284273
    %v1841 = vmul.f32 %v1647, 0.28284273
    %v1842 = vmul.f32 %v1649, 0.28284273
    %v1843 = vsel %vm1651, %v1715, %v1779
    %v1844 = vsel %vm1652, %v1716, %v1780
    %v1845 = vsel %vm1653, %v1717, %v1781
    %v1846 = vsel %vm1654, %v1718, %v1782
    %v1847 = vsel %vm1655, %v1719, %v1783
    %v1848 = vsel %vm1656, %v1720, %v1784
    %v1849 = vsel %vm1657, %v1721, %v1785
    %v1850 = vsel %vm1658, %v1722, %v1786
    %v1851 = vsel %vm1659, %v1723, %v1787
    %v1852 = vsel %vm1660, %v1724, %v1788
    %v1853 = vsel %vm1661, %v1725, %v1789
    %v1854 = vsel %vm1662, %v1726, %v1790
    %v1855 = vsel %vm1663, %v1727, %v1791
    %v1856 = vsel %vm1664, %v1728, %v1792
    %v1857 = vsel %vm1665, %v1729, %v1793
    %v1858 = vsel %vm1666, %v1730, %v1794
    %v1859 = vsel %vm1667, %v1731, %v1795
    %v1860 = vsel %vm1668, %v1732, %v1796
    %v1861 = vsel %vm1669, %v1733, %v1797
    %v1862 = vsel %vm1670, %v1734, %v1798
    %v1863 = vsel %vm1671, %v1735, %v1799
    %v1864 = vsel %vm1672, %v1736, %v1800
    %v1865 = vsel %vm1673, %v1737, %v1801
    %v1866 = vsel %vm1674, %v1738, %v1802
    %v1867 = vsel %vm1675, %v1739, %v1803
    %v1868 = vsel %vm1676, %v1740, %v1804
    %v1869 = vsel %vm1677, %v1741, %v1805
    %v1870 = vsel %vm1678, %v1742, %v1806
    %v1871 = vsel %vm1679, %v1743, %v1807
    %v1872 = vsel %vm1680, %v1744, %v1808
    %v1873 = vsel %vm1681, %v1745, %v1809
    %v1874 = vsel %vm1682, %v1746, %v1810
    %v1875 = vsel %vm1683, %v1747, %v1811
    %v1876 = vsel %vm1684, %v1748, %v1812
    %v1877 = vsel %vm1685, %v1749, %v1813
    %v1878 = vsel %vm1686, %v1750, %v1814
    %v1879 = vsel %vm1687, %v1751, %v1815
    %v1880 = vsel %vm1688, %v1752, %v1816
    %v1881 = vsel %vm1689, %v1753, %v1817
    %v1882 = vsel %vm1690, %v1754, %v1818
    %v1883 = vsel %vm1691, %v1755, %v1819
    %v1884 = vsel %vm1692, %v1756, %v1820
    %v1885 = vsel %vm1693, %v1757, %v1821
    %v1886 = vsel %vm1694, %v1758, %v1822
    %v1887 = vsel %vm1695, %v1759, %v1823
    %v1888 = vsel %vm1696, %v1760, %v1824
    %v1889 = vsel %vm1697, %v1761, %v1825
    %v1890 = vsel %vm1698, %v1762, %v1826
    %v1891 = vsel %vm1699, %v1763, %v1827
    %v1892 = vsel %vm1700, %v1764, %v1828
    %v1893 = vsel %vm1701, %v1765, %v1829
    %v1894 = vsel %vm1702, %v1766, %v1830
    %v1895 = vsel %vm1703, %v1767, %v1831
    %v1896 = vsel %vm1704, %v1768, %v1832
    %v1897 = vsel %vm1705, %v1769, %v1833
    %v1898 = vsel %vm1706, %v1770, %v1834
    %v1899 = vsel %vm1707, %v1771, %v1835
    %v1900 = vsel %vm1708, %v1772, %v1836
    %v1901 = vsel %vm1709, %v1773, %v1837
    %v1902 = vsel %vm1710, %v1774, %v1838
    %v1903 = vsel %vm1711, %v1775, %v1839
    %v1904 = vsel %vm1712, %v1776, %v1840
    %v1905 = vsel %vm1713, %v1777, %v1841
    %v1906 = vsel %vm1714, %v1778, %v1842
    %v1907 = vpack.c.bf16 %v1847, %v1843
    %v1908 = vpack.c.bf16 %v1848, %v1844
    %v1909 = vpack.c.bf16 %v1849, %v1845
    %v1910 = vpack.c.bf16 %v1850, %v1846
    %v1911 = vpack.c.bf16 %v1855, %v1851
    %v1912 = vpack.c.bf16 %v1856, %v1852
    %v1913 = vpack.c.bf16 %v1857, %v1853
    %v1914 = vpack.c.bf16 %v1858, %v1854
    %v1915 = vpack.c.bf16 %v1863, %v1859
    %v1916 = vpack.c.bf16 %v1864, %v1860
    %v1917 = vpack.c.bf16 %v1865, %v1861
    %v1918 = vpack.c.bf16 %v1866, %v1862
    %v1919 = vpack.c.bf16 %v1871, %v1867
    %v1920 = vpack.c.bf16 %v1872, %v1868
    %v1921 = vpack.c.bf16 %v1873, %v1869
    %v1922 = vpack.c.bf16 %v1874, %v1870
    %v1923 = vpack.c.bf16 %v1879, %v1875
    %v1924 = vpack.c.bf16 %v1880, %v1876
    %v1925 = vpack.c.bf16 %v1881, %v1877
    %v1926 = vpack.c.bf16 %v1882, %v1878
    %v1927 = vpack.c.bf16 %v1887, %v1883
    %v1928 = vpack.c.bf16 %v1888, %v1884
    %v1929 = vpack.c.bf16 %v1889, %v1885
    %v1930 = vpack.c.bf16 %v1890, %v1886
    %v1931 = vpack.c.bf16 %v1895, %v1891
    %v1932 = vpack.c.bf16 %v1896, %v1892
    %v1933 = vpack.c.bf16 %v1897, %v1893
    %v1934 = vpack.c.bf16 %v1898, %v1894
    %v1935 = vpack.c.bf16 %v1903, %v1899
    %v1936 = vpack.c.bf16 %v1904, %v1900
    %v1937 = vpack.c.bf16 %v1905, %v1901
    %v1938 = vpack.c.bf16 %v1906, %v1902
    %s1939 = scalar_lea.vmem [#allocation5], 1024
    %v1940 = vld [vmem:[%s1939] sm:$0xff]
    %v1941 = vld [vmem:[%s1939 + $0x8] sm:$0xff]
    %v1942 = vld [vmem:[%s1939 + $0x10] sm:$0xff]
    %v1943 = vld [vmem:[%s1939 + $0x18] sm:$0xff]
    %v1944 = vld [vmem:[%s1939 + $0x20] sm:$0xff]
    %v1945 = vld [vmem:[%s1939 + $0x28] sm:$0xff]
    %v1946 = vld [vmem:[%s1939 + $0x30] sm:$0xff]
    %v1947 = vld [vmem:[%s1939 + $0x38] sm:$0xff]
    %v1948 = vld [vmem:[%s1939 + $0x40] sm:$0xff]
    %v1949 = vld [vmem:[%s1939 + $0x48] sm:$0xff]
    %v1950 = vld [vmem:[%s1939 + $0x50] sm:$0xff]
    %v1951 = vld [vmem:[%s1939 + $0x58] sm:$0xff]
    %v1952 = vld [vmem:[%s1939 + $0x60] sm:$0xff]
    %v1953 = vld [vmem:[%s1939 + $0x68] sm:$0xff]
    %v1954 = vld [vmem:[%s1939 + $0x70] sm:$0xff]
    %v1955 = vld [vmem:[%s1939 + $0x78] sm:$0xff]
    %v1956 = vld [vmem:[%s1939 + $0x80] sm:$0xff]
    %v1957 = vld [vmem:[%s1939 + $0x88] sm:$0xff]
    %v1958 = vld [vmem:[%s1939 + $0x90] sm:$0xff]
    %v1959 = vld [vmem:[%s1939 + $0x98] sm:$0xff]
    %v1960 = vld [vmem:[%s1939 + $0xa0] sm:$0xff]
    %v1961 = vld [vmem:[%s1939 + $0xa8] sm:$0xff]
    %v1962 = vld [vmem:[%s1939 + $0xb0] sm:$0xff]
    %v1963 = vld [vmem:[%s1939 + $0xb8] sm:$0xff]
    %v1964 = vld [vmem:[%s1939 + $0xc0] sm:$0xff]
    %v1965 = vld [vmem:[%s1939 + $0xc8] sm:$0xff]
    %v1966 = vld [vmem:[%s1939 + $0xd0] sm:$0xff]
    %v1967 = vld [vmem:[%s1939 + $0xd8] sm:$0xff]
    %v1968 = vld [vmem:[%s1939 + $0xe0] sm:$0xff]
    %v1969 = vld [vmem:[%s1939 + $0xe8] sm:$0xff]
    %v1970 = vld [vmem:[%s1939 + $0xf0] sm:$0xff]
    %v1971 = vld [vmem:[%s1939 + $0xf8] sm:$0xff]
    %v1972 = vld [vmem:[%s1939 + $0x100] sm:$0xff]
    %v1973 = vld [vmem:[%s1939 + $0x108] sm:$0xff]
    %v1974 = vld [vmem:[%s1939 + $0x110] sm:$0xff]
    %v1975 = vld [vmem:[%s1939 + $0x118] sm:$0xff]
    %v1976 = vld [vmem:[%s1939 + $0x120] sm:$0xff]
    %v1977 = vld [vmem:[%s1939 + $0x128] sm:$0xff]
    %v1978 = vld [vmem:[%s1939 + $0x130] sm:$0xff]
    %v1979 = vld [vmem:[%s1939 + $0x138] sm:$0xff]
    %v1980 = vld [vmem:[%s1939 + $0x140] sm:$0xff]
    %v1981 = vld [vmem:[%s1939 + $0x148] sm:$0xff]
    %v1982 = vld [vmem:[%s1939 + $0x150] sm:$0xff]
    %v1983 = vld [vmem:[%s1939 + $0x158] sm:$0xff]
    %v1984 = vld [vmem:[%s1939 + $0x160] sm:$0xff]
    %v1985 = vld [vmem:[%s1939 + $0x168] sm:$0xff]
    %v1986 = vld [vmem:[%s1939 + $0x170] sm:$0xff]
    %v1987 = vld [vmem:[%s1939 + $0x178] sm:$0xff]
    %v1988 = vld [vmem:[%s1939 + $0x180] sm:$0xff]
    %v1989 = vld [vmem:[%s1939 + $0x188] sm:$0xff]
    %v1990 = vld [vmem:[%s1939 + $0x190] sm:$0xff]
    %v1991 = vld [vmem:[%s1939 + $0x198] sm:$0xff]
    %v1992 = vld [vmem:[%s1939 + $0x1a0] sm:$0xff]
    %v1993 = vld [vmem:[%s1939 + $0x1a8] sm:$0xff]
    %v1994 = vld [vmem:[%s1939 + $0x1b0] sm:$0xff]
    %v1995 = vld [vmem:[%s1939 + $0x1b8] sm:$0xff]
    %v1996 = vld [vmem:[%s1939 + $0x1c0] sm:$0xff]
    %v1997 = vld [vmem:[%s1939 + $0x1c8] sm:$0xff]
    %v1998 = vld [vmem:[%s1939 + $0x1d0] sm:$0xff]
    %v1999 = vld [vmem:[%s1939 + $0x1d8] sm:$0xff]
    %v2000 = vld [vmem:[%s1939 + $0x1e0] sm:$0xff]
    %v2001 = vld [vmem:[%s1939 + $0x1e8] sm:$0xff]
    %v2002 = vld [vmem:[%s1939 + $0x1f0] sm:$0xff]
    %v2003 = vld [vmem:[%s1939 + $0x1f8] sm:$0xff]
    %v2004 = vld [vmem:[%s1939 + $0x200] sm:$0xff]
    %v2005 = vld [vmem:[%s1939 + $0x208] sm:$0xff]
    %v2006 = vld [vmem:[%s1939 + $0x210] sm:$0xff]
    %v2007 = vld [vmem:[%s1939 + $0x218] sm:$0xff]
    %v2008 = vld [vmem:[%s1939 + $0x220] sm:$0xff]
    %v2009 = vld [vmem:[%s1939 + $0x228] sm:$0xff]
    %v2010 = vld [vmem:[%s1939 + $0x230] sm:$0xff]
    %v2011 = vld [vmem:[%s1939 + $0x238] sm:$0xff]
    %v2012 = vld [vmem:[%s1939 + $0x240] sm:$0xff]
    %v2013 = vld [vmem:[%s1939 + $0x248] sm:$0xff]
    %v2014 = vld [vmem:[%s1939 + $0x250] sm:$0xff]
    %v2015 = vld [vmem:[%s1939 + $0x258] sm:$0xff]
    %v2016 = vld [vmem:[%s1939 + $0x260] sm:$0xff]
    %v2017 = vld [vmem:[%s1939 + $0x268] sm:$0xff]
    %v2018 = vld [vmem:[%s1939 + $0x270] sm:$0xff]
    %v2019 = vld [vmem:[%s1939 + $0x278] sm:$0xff]
    %v2020 = vld [vmem:[%s1939 + $0x280] sm:$0xff]
    %v2021 = vld [vmem:[%s1939 + $0x288] sm:$0xff]
    %v2022 = vld [vmem:[%s1939 + $0x290] sm:$0xff]
    %v2023 = vld [vmem:[%s1939 + $0x298] sm:$0xff]
    %v2024 = vld [vmem:[%s1939 + $0x2a0] sm:$0xff]
    %v2025 = vld [vmem:[%s1939 + $0x2a8] sm:$0xff]
    %v2026 = vld [vmem:[%s1939 + $0x2b0] sm:$0xff]
    %v2027 = vld [vmem:[%s1939 + $0x2b8] sm:$0xff]
    %v2028 = vld [vmem:[%s1939 + $0x2c0] sm:$0xff]
    %v2029 = vld [vmem:[%s1939 + $0x2c8] sm:$0xff]
    %v2030 = vld [vmem:[%s1939 + $0x2d0] sm:$0xff]
    %v2031 = vld [vmem:[%s1939 + $0x2d8] sm:$0xff]
    %v2032 = vld [vmem:[%s1939 + $0x2e0] sm:$0xff]
    %v2033 = vld [vmem:[%s1939 + $0x2e8] sm:$0xff]
    %v2034 = vld [vmem:[%s1939 + $0x2f0] sm:$0xff]
    %v2035 = vld [vmem:[%s1939 + $0x2f8] sm:$0xff]
    %v2036 = vld [vmem:[%s1939 + $0x300] sm:$0xff]
    %v2037 = vld [vmem:[%s1939 + $0x308] sm:$0xff]
    %v2038 = vld [vmem:[%s1939 + $0x310] sm:$0xff]
    %v2039 = vld [vmem:[%s1939 + $0x318] sm:$0xff]
    %v2040 = vld [vmem:[%s1939 + $0x320] sm:$0xff]
    %v2041 = vld [vmem:[%s1939 + $0x328] sm:$0xff]
    %v2042 = vld [vmem:[%s1939 + $0x330] sm:$0xff]
    %v2043 = vld [vmem:[%s1939 + $0x338] sm:$0xff]
    %v2044 = vld [vmem:[%s1939 + $0x340] sm:$0xff]
    %v2045 = vld [vmem:[%s1939 + $0x348] sm:$0xff]
    %v2046 = vld [vmem:[%s1939 + $0x350] sm:$0xff]
    %v2047 = vld [vmem:[%s1939 + $0x358] sm:$0xff]
    %v2048 = vld [vmem:[%s1939 + $0x360] sm:$0xff]
    %v2049 = vld [vmem:[%s1939 + $0x368] sm:$0xff]
    %v2050 = vld [vmem:[%s1939 + $0x370] sm:$0xff]
    %v2051 = vld [vmem:[%s1939 + $0x378] sm:$0xff]
    %v2052 = vld [vmem:[%s1939 + $0x380] sm:$0xff]
    %v2053 = vld [vmem:[%s1939 + $0x388] sm:$0xff]
    %v2054 = vld [vmem:[%s1939 + $0x390] sm:$0xff]
    %v2055 = vld [vmem:[%s1939 + $0x398] sm:$0xff]
    %v2056 = vld [vmem:[%s1939 + $0x3a0] sm:$0xff]
    %v2057 = vld [vmem:[%s1939 + $0x3a8] sm:$0xff]
    %v2058 = vld [vmem:[%s1939 + $0x3b0] sm:$0xff]
    %v2059 = vld [vmem:[%s1939 + $0x3b8] sm:$0xff]
    %v2060 = vld [vmem:[%s1939 + $0x3c0] sm:$0xff]
    %v2061 = vld [vmem:[%s1939 + $0x3c8] sm:$0xff]
    %v2062 = vld [vmem:[%s1939 + $0x3d0] sm:$0xff]
    %v2063 = vld [vmem:[%s1939 + $0x3d8] sm:$0xff]
    %v2064 = vld [vmem:[%s1939 + $0x3e0] sm:$0xff]
    %v2065 = vld [vmem:[%s1939 + $0x3e8] sm:$0xff]
    %v2066 = vld [vmem:[%s1939 + $0x3f0] sm:$0xff]
    %v2067 = vld [vmem:[%s1939 + $0x3f8] sm:$0xff]
    %s2068 = scalar_lea.vmem [#allocation7], 4
    %v2069 = vld [vmem:[%s2068] sm:$0xf]
    %v2071 = vlaneseq
    %v2072 = vshrl.u32 %v2071, 7
    %v2073 = vsub.s32 0, %v2072
    %v2074 = vrot.slane %v2069, %v2073
    %v2075 = vlaneseq
    %v2076 = vshrl.u32 %v2075, 7
    %v2077 = vsub.s32 1, %v2076
    %v2078 = vrot.slane %v2069, %v2077
    %v2079 = vlaneseq
    %v2080 = vshrl.u32 %v2079, 7
    %v2081 = vsub.s32 2, %v2080
    %v2082 = vrot.slane %v2069, %v2081
    %v2083 = vlaneseq
    %v2084 = vshrl.u32 %v2083, 7
    %v2085 = vsub.s32 3, %v2084
    %v2086 = vrot.slane %v2069, %v2085
    %v2219 = vunpack.c.l.b16 %v1940
    %v2220 = vunpack.c.h.b16 %v1940
    %v2221 = vunpack.c.l.b16 %v1941
    %v2222 = vunpack.c.h.b16 %v1941
    %v2223 = vunpack.c.l.b16 %v1942
    %v2224 = vunpack.c.h.b16 %v1942
    %v2225 = vunpack.c.l.b16 %v1943
    %v2226 = vunpack.c.h.b16 %v1943
    %v2227 = vunpack.c.l.b16 %v1944
    %v2228 = vunpack.c.h.b16 %v1944
    %v2229 = vunpack.c.l.b16 %v1945
    %v2230 = vunpack.c.h.b16 %v1945
    %v2231 = vunpack.c.l.b16 %v1946
    %v2232 = vunpack.c.h.b16 %v1946
    %v2233 = vunpack.c.l.b16 %v1947
    %v2234 = vunpack.c.h.b16 %v1947
    %v2235 = vunpack.c.l.b16 %v1948
    %v2236 = vunpack.c.h.b16 %v1948
    %v2237 = vunpack.c.l.b16 %v1949
    %v2238 = vunpack.c.h.b16 %v1949
    %v2239 = vunpack.c.l.b16 %v1950
    %v2240 = vunpack.c.h.b16 %v1950
    %v2241 = vunpack.c.l.b16 %v1951
    %v2242 = vunpack.c.h.b16 %v1951
    %v2243 = vunpack.c.l.b16 %v1952
    %v2244 = vunpack.c.h.b16 %v1952
    %v2245 = vunpack.c.l.b16 %v1953
    %v2246 = vunpack.c.h.b16 %v1953
    %v2247 = vunpack.c.l.b16 %v1954
    %v2248 = vunpack.c.h.b16 %v1954
    %v2249 = vunpack.c.l.b16 %v1955
    %v2250 = vunpack.c.h.b16 %v1955
    %v2251 = vunpack.c.l.b16 %v1956
    %v2252 = vunpack.c.h.b16 %v1956
    %v2253 = vunpack.c.l.b16 %v1957
    %v2254 = vunpack.c.h.b16 %v1957
    %v2255 = vunpack.c.l.b16 %v1958
    %v2256 = vunpack.c.h.b16 %v1958
    %v2257 = vunpack.c.l.b16 %v1959
    %v2258 = vunpack.c.h.b16 %v1959
    %v2259 = vunpack.c.l.b16 %v1960
    %v2260 = vunpack.c.h.b16 %v1960
    %v2261 = vunpack.c.l.b16 %v1961
    %v2262 = vunpack.c.h.b16 %v1961
    %v2263 = vunpack.c.l.b16 %v1962
    %v2264 = vunpack.c.h.b16 %v1962
    %v2265 = vunpack.c.l.b16 %v1963
    %v2266 = vunpack.c.h.b16 %v1963
    %v2267 = vunpack.c.l.b16 %v1964
    %v2268 = vunpack.c.h.b16 %v1964
    %v2269 = vunpack.c.l.b16 %v1965
    %v2270 = vunpack.c.h.b16 %v1965
    %v2271 = vunpack.c.l.b16 %v1966
    %v2272 = vunpack.c.h.b16 %v1966
    %v2273 = vunpack.c.l.b16 %v1967
    %v2274 = vunpack.c.h.b16 %v1967
    %v2275 = vunpack.c.l.b16 %v1968
    %v2276 = vunpack.c.h.b16 %v1968
    %v2277 = vunpack.c.l.b16 %v1969
    %v2278 = vunpack.c.h.b16 %v1969
    %v2279 = vunpack.c.l.b16 %v1970
    %v2280 = vunpack.c.h.b16 %v1970
    %v2281 = vunpack.c.l.b16 %v1971
    %v2282 = vunpack.c.h.b16 %v1971
    %v2283 = vunpack.c.l.b16 %v1972
    %v2284 = vunpack.c.h.b16 %v1972
    %v2285 = vunpack.c.l.b16 %v1973
    %v2286 = vunpack.c.h.b16 %v1973
    %v2287 = vunpack.c.l.b16 %v1974
    %v2288 = vunpack.c.h.b16 %v1974
    %v2289 = vunpack.c.l.b16 %v1975
    %v2290 = vunpack.c.h.b16 %v1975
    %v2291 = vunpack.c.l.b16 %v1976
    %v2292 = vunpack.c.h.b16 %v1976
    %v2293 = vunpack.c.l.b16 %v1977
    %v2294 = vunpack.c.h.b16 %v1977
    %v2295 = vunpack.c.l.b16 %v1978
    %v2296 = vunpack.c.h.b16 %v1978
    %v2297 = vunpack.c.l.b16 %v1979
    %v2298 = vunpack.c.h.b16 %v1979
    %v2299 = vunpack.c.l.b16 %v1980
    %v2300 = vunpack.c.h.b16 %v1980
    %v2301 = vunpack.c.l.b16 %v1981
    %v2302 = vunpack.c.h.b16 %v1981
    %v2303 = vunpack.c.l.b16 %v1982
    %v2304 = vunpack.c.h.b16 %v1982
    %v2305 = vunpack.c.l.b16 %v1983
    %v2306 = vunpack.c.h.b16 %v1983
    %v2307 = vunpack.c.l.b16 %v1984
    %v2308 = vunpack.c.h.b16 %v1984
    %v2309 = vunpack.c.l.b16 %v1985
    %v2310 = vunpack.c.h.b16 %v1985
    %v2311 = vunpack.c.l.b16 %v1986
    %v2312 = vunpack.c.h.b16 %v1986
    %v2313 = vunpack.c.l.b16 %v1987
    %v2314 = vunpack.c.h.b16 %v1987
    %v2315 = vunpack.c.l.b16 %v1988
    %v2316 = vunpack.c.h.b16 %v1988
    %v2317 = vunpack.c.l.b16 %v1989
    %v2318 = vunpack.c.h.b16 %v1989
    %v2319 = vunpack.c.l.b16 %v1990
    %v2320 = vunpack.c.h.b16 %v1990
    %v2321 = vunpack.c.l.b16 %v1991
    %v2322 = vunpack.c.h.b16 %v1991
    %v2323 = vunpack.c.l.b16 %v1992
    %v2324 = vunpack.c.h.b16 %v1992
    %v2325 = vunpack.c.l.b16 %v1993
    %v2326 = vunpack.c.h.b16 %v1993
    %v2327 = vunpack.c.l.b16 %v1994
    %v2328 = vunpack.c.h.b16 %v1994
    %v2329 = vunpack.c.l.b16 %v1995
    %v2330 = vunpack.c.h.b16 %v1995
    %v2331 = vunpack.c.l.b16 %v1996
    %v2332 = vunpack.c.h.b16 %v1996
    %v2333 = vunpack.c.l.b16 %v1997
    %v2334 = vunpack.c.h.b16 %v1997
    %v2335 = vunpack.c.l.b16 %v1998
    %v2336 = vunpack.c.h.b16 %v1998
    %v2337 = vunpack.c.l.b16 %v1999
    %v2338 = vunpack.c.h.b16 %v1999
    %v2339 = vunpack.c.l.b16 %v2000
    %v2340 = vunpack.c.h.b16 %v2000
    %v2341 = vunpack.c.l.b16 %v2001
    %v2342 = vunpack.c.h.b16 %v2001
    %v2343 = vunpack.c.l.b16 %v2002
    %v2344 = vunpack.c.h.b16 %v2002
    %v2345 = vunpack.c.l.b16 %v2003
    %v2346 = vunpack.c.h.b16 %v2003
    %v2347 = vunpack.c.l.b16 %v2004
    %v2348 = vunpack.c.h.b16 %v2004
    %v2349 = vunpack.c.l.b16 %v2005
    %v2350 = vunpack.c.h.b16 %v2005
    %v2351 = vunpack.c.l.b16 %v2006
    %v2352 = vunpack.c.h.b16 %v2006
    %v2353 = vunpack.c.l.b16 %v2007
    %v2354 = vunpack.c.h.b16 %v2007
    %v2355 = vunpack.c.l.b16 %v2008
    %v2356 = vunpack.c.h.b16 %v2008
    %v2357 = vunpack.c.l.b16 %v2009
    %v2358 = vunpack.c.h.b16 %v2009
    %v2359 = vunpack.c.l.b16 %v2010
    %v2360 = vunpack.c.h.b16 %v2010
    %v2361 = vunpack.c.l.b16 %v2011
    %v2362 = vunpack.c.h.b16 %v2011
    %v2363 = vunpack.c.l.b16 %v2012
    %v2364 = vunpack.c.h.b16 %v2012
    %v2365 = vunpack.c.l.b16 %v2013
    %v2366 = vunpack.c.h.b16 %v2013
    %v2367 = vunpack.c.l.b16 %v2014
    %v2368 = vunpack.c.h.b16 %v2014
    %v2369 = vunpack.c.l.b16 %v2015
    %v2370 = vunpack.c.h.b16 %v2015
    %v2371 = vunpack.c.l.b16 %v2016
    %v2372 = vunpack.c.h.b16 %v2016
    %v2373 = vunpack.c.l.b16 %v2017
    %v2374 = vunpack.c.h.b16 %v2017
    %v2375 = vunpack.c.l.b16 %v2018
    %v2376 = vunpack.c.h.b16 %v2018
    %v2377 = vunpack.c.l.b16 %v2019
    %v2378 = vunpack.c.h.b16 %v2019
    %v2379 = vunpack.c.l.b16 %v2020
    %v2380 = vunpack.c.h.b16 %v2020
    %v2381 = vunpack.c.l.b16 %v2021
    %v2382 = vunpack.c.h.b16 %v2021
    %v2383 = vunpack.c.l.b16 %v2022
    %v2384 = vunpack.c.h.b16 %v2022
    %v2385 = vunpack.c.l.b16 %v2023
    %v2386 = vunpack.c.h.b16 %v2023
    %v2387 = vunpack.c.l.b16 %v2024
    %v2388 = vunpack.c.h.b16 %v2024
    %v2389 = vunpack.c.l.b16 %v2025
    %v2390 = vunpack.c.h.b16 %v2025
    %v2391 = vunpack.c.l.b16 %v2026
    %v2392 = vunpack.c.h.b16 %v2026
    %v2393 = vunpack.c.l.b16 %v2027
    %v2394 = vunpack.c.h.b16 %v2027
    %v2395 = vunpack.c.l.b16 %v2028
    %v2396 = vunpack.c.h.b16 %v2028
    %v2397 = vunpack.c.l.b16 %v2029
    %v2398 = vunpack.c.h.b16 %v2029
    %v2399 = vunpack.c.l.b16 %v2030
    %v2400 = vunpack.c.h.b16 %v2030
    %v2401 = vunpack.c.l.b16 %v2031
    %v2402 = vunpack.c.h.b16 %v2031
    %v2403 = vunpack.c.l.b16 %v2032
    %v2404 = vunpack.c.h.b16 %v2032
    %v2405 = vunpack.c.l.b16 %v2033
    %v2406 = vunpack.c.h.b16 %v2033
    %v2407 = vunpack.c.l.b16 %v2034
    %v2408 = vunpack.c.h.b16 %v2034
    %v2409 = vunpack.c.l.b16 %v2035
    %v2410 = vunpack.c.h.b16 %v2035
    %v2411 = vunpack.c.l.b16 %v2036
    %v2412 = vunpack.c.h.b16 %v2036
    %v2413 = vunpack.c.l.b16 %v2037
    %v2414 = vunpack.c.h.b16 %v2037
    %v2415 = vunpack.c.l.b16 %v2038
    %v2416 = vunpack.c.h.b16 %v2038
    %v2417 = vunpack.c.l.b16 %v2039
    %v2418 = vunpack.c.h.b16 %v2039
    %v2419 = vunpack.c.l.b16 %v2040
    %v2420 = vunpack.c.h.b16 %v2040
    %v2421 = vunpack.c.l.b16 %v2041
    %v2422 = vunpack.c.h.b16 %v2041
    %v2423 = vunpack.c.l.b16 %v2042
    %v2424 = vunpack.c.h.b16 %v2042
    %v2425 = vunpack.c.l.b16 %v2043
    %v2426 = vunpack.c.h.b16 %v2043
    %v2427 = vunpack.c.l.b16 %v2044
    %v2428 = vunpack.c.h.b16 %v2044
    %v2429 = vunpack.c.l.b16 %v2045
    %v2430 = vunpack.c.h.b16 %v2045
    %v2431 = vunpack.c.l.b16 %v2046
    %v2432 = vunpack.c.h.b16 %v2046
    %v2433 = vunpack.c.l.b16 %v2047
    %v2434 = vunpack.c.h.b16 %v2047
    %v2435 = vunpack.c.l.b16 %v2048
    %v2436 = vunpack.c.h.b16 %v2048
    %v2437 = vunpack.c.l.b16 %v2049
    %v2438 = vunpack.c.h.b16 %v2049
    %v2439 = vunpack.c.l.b16 %v2050
    %v2440 = vunpack.c.h.b16 %v2050
    %v2441 = vunpack.c.l.b16 %v2051
    %v2442 = vunpack.c.h.b16 %v2051
    %v2443 = vunpack.c.l.b16 %v2052
    %v2444 = vunpack.c.h.b16 %v2052
    %v2445 = vunpack.c.l.b16 %v2053
    %v2446 = vunpack.c.h.b16 %v2053
    %v2447 = vunpack.c.l.b16 %v2054
    %v2448 = vunpack.c.h.b16 %v2054
    %v2449 = vunpack.c.l.b16 %v2055
    %v2450 = vunpack.c.h.b16 %v2055
    %v2451 = vunpack.c.l.b16 %v2056
    %v2452 = vunpack.c.h.b16 %v2056
    %v2453 = vunpack.c.l.b16 %v2057
    %v2454 = vunpack.c.h.b16 %v2057
    %v2455 = vunpack.c.l.b16 %v2058
    %v2456 = vunpack.c.h.b16 %v2058
    %v2457 = vunpack.c.l.b16 %v2059
    %v2458 = vunpack.c.h.b16 %v2059
    %v2459 = vunpack.c.l.b16 %v2060
    %v2460 = vunpack.c.h.b16 %v2060
    %v2461 = vunpack.c.l.b16 %v2061
    %v2462 = vunpack.c.h.b16 %v2061
    %v2463 = vunpack.c.l.b16 %v2062
    %v2464 = vunpack.c.h.b16 %v2062
    %v2465 = vunpack.c.l.b16 %v2063
    %v2466 = vunpack.c.h.b16 %v2063
    %v2467 = vunpack.c.l.b16 %v2064
    %v2468 = vunpack.c.h.b16 %v2064
    %v2469 = vunpack.c.l.b16 %v2065
    %v2470 = vunpack.c.h.b16 %v2065
    %v2471 = vunpack.c.l.b16 %v2066
    %v2472 = vunpack.c.h.b16 %v2066
    %v2473 = vunpack.c.l.b16 %v2067
    %v2474 = vunpack.c.h.b16 %v2067
    %v2475 = vpack.c.b16 %v2223, %v2219
    %v2476 = vpack.c.b16 %v2224, %v2220
    %v2477 = vpack.c.b16 %v2225, %v2221
    %v2478 = vpack.c.b16 %v2226, %v2222
    %v2479 = vpack.c.b16 %v2231, %v2227
    %v2480 = vpack.c.b16 %v2232, %v2228
    %v2481 = vpack.c.b16 %v2233, %v2229
    %v2482 = vpack.c.b16 %v2234, %v2230
    %v2483 = vpack.c.b16 %v2239, %v2235
    %v2484 = vpack.c.b16 %v2240, %v2236
    %v2485 = vpack.c.b16 %v2241, %v2237
    %v2486 = vpack.c.b16 %v2242, %v2238
    %v2487 = vpack.c.b16 %v2247, %v2243
    %v2488 = vpack.c.b16 %v2248, %v2244
    %v2489 = vpack.c.b16 %v2249, %v2245
    %v2490 = vpack.c.b16 %v2250, %v2246
    %v2491 = vpack.c.b16 %v2255, %v2251
    %v2492 = vpack.c.b16 %v2256, %v2252
    %v2493 = vpack.c.b16 %v2257, %v2253
    %v2494 = vpack.c.b16 %v2258, %v2254
    %v2495 = vpack.c.b16 %v2263, %v2259
    %v2496 = vpack.c.b16 %v2264, %v2260
    %v2497 = vpack.c.b16 %v2265, %v2261
    %v2498 = vpack.c.b16 %v2266, %v2262
    %v2499 = vpack.c.b16 %v2271, %v2267
    %v2500 = vpack.c.b16 %v2272, %v2268
    %v2501 = vpack.c.b16 %v2273, %v2269
    %v2502 = vpack.c.b16 %v2274, %v2270
    %v2503 = vpack.c.b16 %v2279, %v2275
    %v2504 = vpack.c.b16 %v2280, %v2276
    %v2505 = vpack.c.b16 %v2281, %v2277
    %v2506 = vpack.c.b16 %v2282, %v2278
    %v2507 = vpack.c.b16 %v2287, %v2283
    %v2508 = vpack.c.b16 %v2288, %v2284
    %v2509 = vpack.c.b16 %v2289, %v2285
    %v2510 = vpack.c.b16 %v2290, %v2286
    %v2511 = vpack.c.b16 %v2295, %v2291
    %v2512 = vpack.c.b16 %v2296, %v2292
    %v2513 = vpack.c.b16 %v2297, %v2293
    %v2514 = vpack.c.b16 %v2298, %v2294
    %v2515 = vpack.c.b16 %v2303, %v2299
    %v2516 = vpack.c.b16 %v2304, %v2300
    %v2517 = vpack.c.b16 %v2305, %v2301
    %v2518 = vpack.c.b16 %v2306, %v2302
    %v2519 = vpack.c.b16 %v2311, %v2307
    %v2520 = vpack.c.b16 %v2312, %v2308
    %v2521 = vpack.c.b16 %v2313, %v2309
    %v2522 = vpack.c.b16 %v2314, %v2310
    %v2523 = vpack.c.b16 %v2319, %v2315
    %v2524 = vpack.c.b16 %v2320, %v2316
    %v2525 = vpack.c.b16 %v2321, %v2317
    %v2526 = vpack.c.b16 %v2322, %v2318
    %v2527 = vpack.c.b16 %v2327, %v2323
    %v2528 = vpack.c.b16 %v2328, %v2324
    %v2529 = vpack.c.b16 %v2329, %v2325
    %v2530 = vpack.c.b16 %v2330, %v2326
    %v2531 = vpack.c.b16 %v2335, %v2331
    %v2532 = vpack.c.b16 %v2336, %v2332
    %v2533 = vpack.c.b16 %v2337, %v2333
    %v2534 = vpack.c.b16 %v2338, %v2334
    %v2535 = vpack.c.b16 %v2343, %v2339
    %v2536 = vpack.c.b16 %v2344, %v2340
    %v2537 = vpack.c.b16 %v2345, %v2341
    %v2538 = vpack.c.b16 %v2346, %v2342
    %v2539 = vpack.c.b16 %v2351, %v2347
    %v2540 = vpack.c.b16 %v2352, %v2348
    %v2541 = vpack.c.b16 %v2353, %v2349
    %v2542 = vpack.c.b16 %v2354, %v2350
    %v2543 = vpack.c.b16 %v2359, %v2355
    %v2544 = vpack.c.b16 %v2360, %v2356
    %v2545 = vpack.c.b16 %v2361, %v2357
    %v2546 = vpack.c.b16 %v2362, %v2358
    %v2547 = vpack.c.b16 %v2367, %v2363
    %v2548 = vpack.c.b16 %v2368, %v2364
    %v2549 = vpack.c.b16 %v2369, %v2365
    %v2550 = vpack.c.b16 %v2370, %v2366
    %v2551 = vpack.c.b16 %v2375, %v2371
    %v2552 = vpack.c.b16 %v2376, %v2372
    %v2553 = vpack.c.b16 %v2377, %v2373
    %v2554 = vpack.c.b16 %v2378, %v2374
    %v2555 = vpack.c.b16 %v2383, %v2379
    %v2556 = vpack.c.b16 %v2384, %v2380
    %v2557 = vpack.c.b16 %v2385, %v2381
    %v2558 = vpack.c.b16 %v2386, %v2382
    %v2559 = vpack.c.b16 %v2391, %v2387
    %v2560 = vpack.c.b16 %v2392, %v2388
    %v2561 = vpack.c.b16 %v2393, %v2389
    %v2562 = vpack.c.b16 %v2394, %v2390
    %v2563 = vpack.c.b16 %v2399, %v2395
    %v2564 = vpack.c.b16 %v2400, %v2396
    %v2565 = vpack.c.b16 %v2401, %v2397
    %v2566 = vpack.c.b16 %v2402, %v2398
    %v2567 = vpack.c.b16 %v2407, %v2403
    %v2568 = vpack.c.b16 %v2408, %v2404
    %v2569 = vpack.c.b16 %v2409, %v2405
    %v2570 = vpack.c.b16 %v2410, %v2406
    %v2571 = vpack.c.b16 %v2415, %v2411
    %v2572 = vpack.c.b16 %v2416, %v2412
    %v2573 = vpack.c.b16 %v2417, %v2413
    %v2574 = vpack.c.b16 %v2418, %v2414
    %v2575 = vpack.c.b16 %v2423, %v2419
    %v2576 = vpack.c.b16 %v2424, %v2420
    %v2577 = vpack.c.b16 %v2425, %v2421
    %v2578 = vpack.c.b16 %v2426, %v2422
    %v2579 = vpack.c.b16 %v2431, %v2427
    %v2580 = vpack.c.b16 %v2432, %v2428
    %v2581 = vpack.c.b16 %v2433, %v2429
    %v2582 = vpack.c.b16 %v2434, %v2430
    %v2583 = vpack.c.b16 %v2439, %v2435
    %v2584 = vpack.c.b16 %v2440, %v2436
    %v2585 = vpack.c.b16 %v2441, %v2437
    %v2586 = vpack.c.b16 %v2442, %v2438
    %v2587 = vpack.c.b16 %v2447, %v2443
    %v2588 = vpack.c.b16 %v2448, %v2444
    %v2589 = vpack.c.b16 %v2449, %v2445
    %v2590 = vpack.c.b16 %v2450, %v2446
    %v2591 = vpack.c.b16 %v2455, %v2451
    %v2592 = vpack.c.b16 %v2456, %v2452
    %v2593 = vpack.c.b16 %v2457, %v2453
    %v2594 = vpack.c.b16 %v2458, %v2454
    %v2595 = vpack.c.b16 %v2463, %v2459
    %v2596 = vpack.c.b16 %v2464, %v2460
    %v2597 = vpack.c.b16 %v2465, %v2461
    %v2598 = vpack.c.b16 %v2466, %v2462
    %v2599 = vpack.c.b16 %v2471, %v2467
    %v2600 = vpack.c.b16 %v2472, %v2468
    %v2601 = vpack.c.b16 %v2473, %v2469
    %v2602 = vpack.c.b16 %v2474, %v2470
    %2731 = vmatprep.subr.bf16.mxu0 %v2476
    %2732 = vmatpush1.bf16.msra.mxu0 %v2475
    %2733 = vmatprep.subr.bf16.mxu0 %v2480
    %2734 = vmatpush1.bf16.msra.mxu0 %v2479
    %2735 = vmatprep.subr.bf16.mxu0 %v2484
    %2736 = vmatpush1.bf16.msra.mxu0 %v2483
    %2737 = vmatprep.subr.bf16.mxu0 %v2488
    %2738 = vmatpush1.bf16.msra.mxu0 %v2487
    %2739 = vmatprep.subr.bf16.mxu0 %v2492
    %2740 = vmatpush1.bf16.msra.mxu0 %v2491
    %2741 = vmatprep.subr.bf16.mxu0 %v2496
    %2742 = vmatpush1.bf16.msra.mxu0 %v2495
    %2743 = vmatprep.subr.bf16.mxu0 %v2500
    %2744 = vmatpush1.bf16.msra.mxu0 %v2499
    %2745 = vmatprep.subr.bf16.mxu0 %v2504
    %2746 = vmatpush1.bf16.msra.mxu0 %v2503
    %2747 = vmatprep.subr.bf16.mxu0 %v2508
    %2748 = vmatpush1.bf16.msra.mxu0 %v2507
    %2749 = vmatprep.subr.bf16.mxu0 %v2512
    %2750 = vmatpush1.bf16.msra.mxu0 %v2511
    %2751 = vmatprep.subr.bf16.mxu0 %v2516
    %2752 = vmatpush1.bf16.msra.mxu0 %v2515
    %2753 = vmatprep.subr.bf16.mxu0 %v2520
    %2754 = vmatpush1.bf16.msra.mxu0 %v2519
    %2755 = vmatprep.subr.bf16.mxu0 %v2524
    %2756 = vmatpush1.bf16.msra.mxu0 %v2523
    %2757 = vmatprep.subr.bf16.mxu0 %v2528
    %2758 = vmatpush1.bf16.msra.mxu0 %v2527
    %2759 = vmatprep.subr.bf16.mxu0 %v2532
    %2760 = vmatpush1.bf16.msra.mxu0 %v2531
    %2761 = vmatprep.subr.bf16.mxu0 %v2536
    %2762 = vmatpush1.bf16.msra.mxu0 %v2535
    %2763 = vmatprep.mubr.bf16.mxu0 %v1908
    %2764 = vmatmul.mubr.bf16.gmra.mrb[0].mxu0 %v1907
    %v2765 = vpop.f32.mrb[0].mxu0
    %v2766 = vadd.f32 %v2074, %v2765
    %v2767 = vpop.f32.mrb[0].mxu0
    %v2768 = vadd.f32 %v2078, %v2767
    %v2769 = vpop.f32.mrb[0].mxu0
    %v2770 = vadd.f32 %v2074, %v2769
    %v2771 = vpop.f32.mrb[0].mxu0
    %v2772 = vadd.f32 %v2078, %v2771
    %2773 = vmatprep.mubr.bf16.mxu0 %v1912
    %2774 = vmatmul.mubr.bf16.gmra.mrb[0].mxu0 %v1911
    %v2775 = vpop.f32.mrb[0].mxu0
    %v2776 = vadd.f32 %v2074, %v2775
    %v2777 = vpop.f32.mrb[0].mxu0
    %v2778 = vadd.f32 %v2078, %v2777
    %v2779 = vpop.f32.mrb[0].mxu0
    %v2780 = vadd.f32 %v2074, %v2779
    %v2781 = vpop.f32.mrb[0].mxu0
    %v2782 = vadd.f32 %v2078, %v2781
    %2783 = vmatprep.mubr.bf16.mxu0 %v1916
    %2784 = vmatmul.mubr.bf16.gmra.mrb[0].mxu0 %v1915
    %v2785 = vpop.f32.mrb[0].mxu0
    %v2786 = vadd.f32 %v2074, %v2785
    %v2787 = vpop.f32.mrb[0].mxu0
    %v2788 = vadd.f32 %v2078, %v2787
    %v2789 = vpop.f32.mrb[0].mxu0
    %v2790 = vadd.f32 %v2074, %v2789
    %v2791 = vpop.f32.mrb[0].mxu0
    %v2792 = vadd.f32 %v2078, %v2791
    %2793 = vmatprep.mubr.bf16.mxu0 %v1920
    %2794 = vmatmul.mubr.bf16.gmra.mrb[0].mxu0 %v1919
    %v2795 = vpop.f32.mrb[0].mxu0
    %v2796 = vadd.f32 %v2074, %v2795
    %v2797 = vpop.f32.mrb[0].mxu0
    %v2798 = vadd.f32 %v2078, %v2797
    %v2799 = vpop.f32.mrb[0].mxu0
    %v2800 = vadd.f32 %v2074, %v2799
    %v2801 = vpop.f32.mrb[0].mxu0
    %v2802 = vadd.f32 %v2078, %v2801
    %2803 = vmatprep.mubr.bf16.mxu0 %v1924
    %2804 = vmatmul.mubr.bf16.gmra.mrb[0].mxu0 %v1923
    %v2805 = vpop.f32.mrb[0].mxu0
    %v2806 = vadd.f32 %v2074, %v2805
    %v2807 = vpop.f32.mrb[0].mxu0
    %v2808 = vadd.f32 %v2078, %v2807
    %v2809 = vpop.f32.mrb[0].mxu0
    %v2810 = vadd.f32 %v2074, %v2809
    %v2811 = vpop.f32.mrb[0].mxu0
    %v2812 = vadd.f32 %v2078, %v2811
    %2813 = vmatprep.mubr.bf16.mxu0 %v1928
    %2814 = vmatmul.mubr.bf16.gmra.mrb[0].mxu0 %v1927
    %v2815 = vpop.f32.mrb[0].mxu0
    %v2816 = vadd.f32 %v2074, %v2815
    %v2817 = vpop.f32.mrb[0].mxu0
    %v2818 = vadd.f32 %v2078, %v2817
    %v2819 = vpop.f32.mrb[0].mxu0
    %v2820 = vadd.f32 %v2074, %v2819
    %v2821 = vpop.f32.mrb[0].mxu0
    %v2822 = vadd.f32 %v2078, %v2821
    %2823 = vmatprep.mubr.bf16.mxu0 %v1932
    %2824 = vmatmul.mubr.bf16.gmra.mrb[0].mxu0 %v1931
    %v2825 = vpop.f32.mrb[0].mxu0
    %v2826 = vadd.f32 %v2074, %v2825
    %v2827 = vpop.f32.mrb[0].mxu0
    %v2828 = vadd.f32 %v2078, %v2827
    %v2829 = vpop.f32.mrb[0].mxu0
    %v2830 = vadd.f32 %v2074, %v2829
    %v2831 = vpop.f32.mrb[0].mxu0
    %v2832 = vadd.f32 %v2078, %v2831
    %2833 = vmatprep.mubr.bf16.mxu0 %v1936
    %2834 = vmatmul.mubr.bf16.gmra.mrb[0].mxu0 %v1935
    %v2835 = vpop.f32.mrb[0].mxu0
    %v2836 = vadd.f32 %v2074, %v2835
    %v2837 = vpop.f32.mrb[0].mxu0
    %v2838 = vadd.f32 %v2078, %v2837
    %v2839 = vpop.f32.mrb[0].mxu0
    %v2840 = vadd.f32 %v2074, %v2839
    %v2841 = vpop.f32.mrb[0].mxu0
    %v2842 = vadd.f32 %v2078, %v2841
    %2843 = vdwg.mxu0
    %2844 = vmatprep.subr.bf16.mxu0 %v2540
    %2845 = vmatpush1.bf16.msra.mxu0 %v2539
    %2846 = vmatprep.subr.bf16.mxu0 %v2544
    %2847 = vmatpush1.bf16.msra.mxu0 %v2543
    %2848 = vmatprep.subr.bf16.mxu0 %v2548
    %2849 = vmatpush1.bf16.msra.mxu0 %v2547
    %2850 = vmatprep.subr.bf16.mxu0 %v2552
    %2851 = vmatpush1.bf16.msra.mxu0 %v2551
    %2852 = vmatprep.subr.bf16.mxu0 %v2556
    %2853 = vmatpush1.bf16.msra.mxu0 %v2555
    %2854 = vmatprep.subr.bf16.mxu0 %v2560
    %2855 = vmatpush1.bf16.msra.mxu0 %v2559
    %2856 = vmatprep.subr.bf16.mxu0 %v2564
    %2857 = vmatpush1.bf16.msra.mxu0 %v2563
    %2858 = vmatprep.subr.bf16.mxu0 %v2568
    %2859 = vmatpush1.bf16.msra.mxu0 %v2567
    %2860 = vmatprep.subr.bf16.mxu0 %v2572
    %2861 = vmatpush1.bf16.msra.mxu0 %v2571
    %2862 = vmatprep.subr.bf16.mxu0 %v2576
    %2863 = vmatpush1.bf16.msra.mxu0 %v2575
    %2864 = vmatprep.subr.bf16.mxu0 %v2580
    %2865 = vmatpush1.bf16.msra.mxu0 %v2579
    %2866 = vmatprep.subr.bf16.mxu0 %v2584
    %2867 = vmatpush1.bf16.msra.mxu0 %v2583
    %2868 = vmatprep.subr.bf16.mxu0 %v2588
    %2869 = vmatpush1.bf16.msra.mxu0 %v2587
    %2870 = vmatprep.subr.bf16.mxu0 %v2592
    %2871 = vmatpush1.bf16.msra.mxu0 %v2591
    %2872 = vmatprep.subr.bf16.mxu0 %v2596
    %2873 = vmatpush1.bf16.msra.mxu0 %v2595
    %2874 = vmatprep.subr.bf16.mxu0 %v2600
    %2875 = vmatpush1.bf16.msra.mxu0 %v2599
    %2876 = vmatprep.mubr.bf16.mxu0 %v1910
    %2877 = vmatmul.mubr.bf16.gmra.mrb[0].mxu0 %v1909
    %v2878 = vpop.f32.mrb[0].mxu0
    %v2879 = vadd.f32 %v2766, %v2878
    %v2880 = vpop.f32.mrb[0].mxu0
    %v2881 = vadd.f32 %v2768, %v2880
    %v2882 = vpop.f32.mrb[0].mxu0
    %v2883 = vadd.f32 %v2770, %v2882
    %v2884 = vpop.f32.mrb[0].mxu0
    %v2885 = vadd.f32 %v2772, %v2884
    %2886 = vmatprep.mubr.bf16.mxu0 %v1914
    %2887 = vmatmul.mubr.bf16.gmra.mrb[0].mxu0 %v1913
    %v2888 = vpop.f32.mrb[0].mxu0
    %v2889 = vadd.f32 %v2776, %v2888
    %v2890 = vpop.f32.mrb[0].mxu0
    %v2891 = vadd.f32 %v2778, %v2890
    %v2892 = vpop.f32.mrb[0].mxu0
    %v2893 = vadd.f32 %v2780, %v2892
    %v2894 = vpop.f32.mrb[0].mxu0
    %v2895 = vadd.f32 %v2782, %v2894
    %2896 = vmatprep.mubr.bf16.mxu0 %v1918
    %2897 = vmatmul.mubr.bf16.gmra.mrb[0].mxu0 %v1917
    %v2898 = vpop.f32.mrb[0].mxu0
    %v2899 = vadd.f32 %v2786, %v2898
    %v2900 = vpop.f32.mrb[0].mxu0
    %v2901 = vadd.f32 %v2788, %v2900
    %v2902 = vpop.f32.mrb[0].mxu0
    %v2903 = vadd.f32 %v2790, %v2902
    %v2904 = vpop.f32.mrb[0].mxu0
    %v2905 = vadd.f32 %v2792, %v2904
    %2906 = vmatprep.mubr.bf16.mxu0 %v1922
    %2907 = vmatmul.mubr.bf16.gmra.mrb[0].mxu0 %v1921
    %v2908 = vpop.f32.mrb[0].mxu0
    %v2909 = vadd.f32 %v2796, %v2908
    %v2910 = vpop.f32.mrb[0].mxu0
    %v2911 = vadd.f32 %v2798, %v2910
    %v2912 = vpop.f32.mrb[0].mxu0
    %v2913 = vadd.f32 %v2800, %v2912
    %v2914 = vpop.f32.mrb[0].mxu0
    %v2915 = vadd.f32 %v2802, %v2914
    %2916 = vmatprep.mubr.bf16.mxu0 %v1926
    %2917 = vmatmul.mubr.bf16.gmra.mrb[0].mxu0 %v1925
    %v2918 = vpop.f32.mrb[0].mxu0
    %v2919 = vadd.f32 %v2806, %v2918
    %v2920 = vpop.f32.mrb[0].mxu0
    %v2921 = vadd.f32 %v2808, %v2920
    %v2922 = vpop.f32.mrb[0].mxu0
    %v2923 = vadd.f32 %v2810, %v2922
    %v2924 = vpop.f32.mrb[0].mxu0
    %v2925 = vadd.f32 %v2812, %v2924
    %2926 = vmatprep.mubr.bf16.mxu0 %v1930
    %2927 = vmatmul.mubr.bf16.gmra.mrb[0].mxu0 %v1929
    %v2928 = vpop.f32.mrb[0].mxu0
    %v2929 = vadd.f32 %v2816, %v2928
    %v2930 = vpop.f32.mrb[0].mxu0
    %v2931 = vadd.f32 %v2818, %v2930
    %v2932 = vpop.f32.mrb[0].mxu0
    %v2933 = vadd.f32 %v2820, %v2932
    %v2934 = vpop.f32.mrb[0].mxu0
    %v2935 = vadd.f32 %v2822, %v2934
    %2936 = vmatprep.mubr.bf16.mxu0 %v1934
    %2937 = vmatmul.mubr.bf16.gmra.mrb[0].mxu0 %v1933
    %v2938 = vpop.f32.mrb[0].mxu0
    %v2939 = vadd.f32 %v2826, %v2938
    %v2940 = vpop.f32.mrb[0].mxu0
    %v2941 = vadd.f32 %v2828, %v2940
    %v2942 = vpop.f32.mrb[0].mxu0
    %v2943 = vadd.f32 %v2830, %v2942
    %v2944 = vpop.f32.mrb[0].mxu0
    %v2945 = vadd.f32 %v2832, %v2944
    %2946 = vmatprep.mubr.bf16.mxu0 %v1938
    %2947 = vmatmul.mubr.bf16.gmra.mrb[0].mxu0 %v1937
    %v2948 = vpop.f32.mrb[0].mxu0
    %v2949 = vadd.f32 %v2836, %v2948
    %v2950 = vpop.f32.mrb[0].mxu0
    %v2951 = vadd.f32 %v2838, %v2950
    %v2952 = vpop.f32.mrb[0].mxu0
    %v2953 = vadd.f32 %v2840, %v2952
    %v2954 = vpop.f32.mrb[0].mxu0
    %v2955 = vadd.f32 %v2842, %v2954
    %2956 = vdwg.mxu0
    %2957 = vmatprep.subr.bf16.mxu0 %v2478
    %2958 = vmatpush1.bf16.msra.mxu0 %v2477
    %2959 = vmatprep.subr.bf16.mxu0 %v2482
    %2960 = vmatpush1.bf16.msra.mxu0 %v2481
    %2961 = vmatprep.subr.bf16.mxu0 %v2486
    %2962 = vmatpush1.bf16.msra.mxu0 %v2485
    %2963 = vmatprep.subr.bf16.mxu0 %v2490
    %2964 = vmatpush1.bf16.msra.mxu0 %v2489
    %2965 = vmatprep.subr.bf16.mxu0 %v2494
    %2966 = vmatpush1.bf16.msra.mxu0 %v2493
    %2967 = vmatprep.subr.bf16.mxu0 %v2498
    %2968 = vmatpush1.bf16.msra.mxu0 %v2497
    %2969 = vmatprep.subr.bf16.mxu0 %v2502
    %2970 = vmatpush1.bf16.msra.mxu0 %v2501
    %2971 = vmatprep.subr.bf16.mxu0 %v2506
    %2972 = vmatpush1.bf16.msra.mxu0 %v2505
    %2973 = vmatprep.subr.bf16.mxu0 %v2510
    %2974 = vmatpush1.bf16.msra.mxu0 %v2509
    %2975 = vmatprep.subr.bf16.mxu0 %v2514
    %2976 = vmatpush1.bf16.msra.mxu0 %v2513
    %2977 = vmatprep.subr.bf16.mxu0 %v2518
    %2978 = vmatpush1.bf16.msra.mxu0 %v2517
    %2979 = vmatprep.subr.bf16.mxu0 %v2522
    %2980 = vmatpush1.bf16.msra.mxu0 %v2521
    %2981 = vmatprep.subr.bf16.mxu0 %v2526
    %2982 = vmatpush1.bf16.msra.mxu0 %v2525
    %2983 = vmatprep.subr.bf16.mxu0 %v2530
    %2984 = vmatpush1.bf16.msra.mxu0 %v2529
    %2985 = vmatprep.subr.bf16.mxu0 %v2534
    %2986 = vmatpush1.bf16.msra.mxu0 %v2533
    %2987 = vmatprep.subr.bf16.mxu0 %v2538
    %2988 = vmatpush1.bf16.msra.mxu0 %v2537
    %2989 = vmatprep.mubr.bf16.mxu0 %v1908
    %2990 = vmatmul.mubr.bf16.gmra.mrb[0].mxu0 %v1907
    %v2991 = vpop.f32.mrb[0].mxu0
    %v2992 = vadd.f32 %v2082, %v2991
    %v2993 = vpop.f32.mrb[0].mxu0
    %v2994 = vadd.f32 %v2086, %v2993
    %v2995 = vpop.f32.mrb[0].mxu0
    %v2996 = vadd.f32 %v2082, %v2995
    %v2997 = vpop.f32.mrb[0].mxu0
    %v2998 = vadd.f32 %v2086, %v2997
    %2999 = vmatprep.mubr.bf16.mxu0 %v1912
    %3000 = vmatmul.mubr.bf16.gmra.mrb[0].mxu0 %v1911
    %v3001 = vpop.f32.mrb[0].mxu0
    %v3002 = vadd.f32 %v2082, %v3001
    %v3003 = vpop.f32.mrb[0].mxu0
    %v3004 = vadd.f32 %v2086, %v3003
    %v3005 = vpop.f32.mrb[0].mxu0
    %v3006 = vadd.f32 %v2082, %v3005
    %v3007 = vpop.f32.mrb[0].mxu0
    %v3008 = vadd.f32 %v2086, %v3007
    %3009 = vmatprep.mubr.bf16.mxu0 %v1916
    %3010 = vmatmul.mubr.bf16.gmra.mrb[0].mxu0 %v1915
    %v3011 = vpop.f32.mrb[0].mxu0
    %v3012 = vadd.f32 %v2082, %v3011
    %v3013 = vpop.f32.mrb[0].mxu0
    %v3014 = vadd.f32 %v2086, %v3013
    %v3015 = vpop.f32.mrb[0].mxu0
    %v3016 = vadd.f32 %v2082, %v3015
    %v3017 = vpop.f32.mrb[0].mxu0
    %v3018 = vadd.f32 %v2086, %v3017
    %3019 = vmatprep.mubr.bf16.mxu0 %v1920
    %3020 = vmatmul.mubr.bf16.gmra.mrb[0].mxu0 %v1919
    %v3021 = vpop.f32.mrb[0].mxu0
    %v3022 = vadd.f32 %v2082, %v3021
    %v3023 = vpop.f32.mrb[0].mxu0
    %v3024 = vadd.f32 %v2086, %v3023
    %v3025 = vpop.f32.mrb[0].mxu0
    %v3026 = vadd.f32 %v2082, %v3025
    %v3027 = vpop.f32.mrb[0].mxu0
    %v3028 = vadd.f32 %v2086, %v3027
    %3029 = vmatprep.mubr.bf16.mxu0 %v1924
    %3030 = vmatmul.mubr.bf16.gmra.mrb[0].mxu0 %v1923
    %v3031 = vpop.f32.mrb[0].mxu0
    %v3032 = vadd.f32 %v2082, %v3031
    %v3033 = vpop.f32.mrb[0].mxu0
    %v3034 = vadd.f32 %v2086, %v3033
    %v3035 = vpop.f32.mrb[0].mxu0
    %v3036 = vadd.f32 %v2082, %v3035
    %v3037 = vpop.f32.mrb[0].mxu0
    %v3038 = vadd.f32 %v2086, %v3037
    %3039 = vmatprep.mubr.bf16.mxu0 %v1928
    %3040 = vmatmul.mubr.bf16.gmra.mrb[0].mxu0 %v1927
    %v3041 = vpop.f32.mrb[0].mxu0
    %v3042 = vadd.f32 %v2082, %v3041
    %v3043 = vpop.f32.mrb[0].mxu0
    %v3044 = vadd.f32 %v2086, %v3043
    %v3045 = vpop.f32.mrb[0].mxu0
    %v3046 = vadd.f32 %v2082, %v3045
    %v3047 = vpop.f32.mrb[0].mxu0
    %v3048 = vadd.f32 %v2086, %v3047
    %3049 = vmatprep.mubr.bf16.mxu0 %v1932
    %3050 = vmatmul.mubr.bf16.gmra.mrb[0].mxu0 %v1931
    %v3051 = vpop.f32.mrb[0].mxu0
    %v3052 = vadd.f32 %v2082, %v3051
    %v3053 = vpop.f32.mrb[0].mxu0
    %v3054 = vadd.f32 %v2086, %v3053
    %v3055 = vpop.f32.mrb[0].mxu0
    %v3056 = vadd.f32 %v2082, %v3055
    %v3057 = vpop.f32.mrb[0].mxu0
    %v3058 = vadd.f32 %v2086, %v3057
    %3059 = vmatprep.mubr.bf16.mxu0 %v1936
    %3060 = vmatmul.mubr.bf16.gmra.mrb[0].mxu0 %v1935
    %v3061 = vpop.f32.mrb[0].mxu0
    %v3062 = vadd.f32 %v2082, %v3061
    %v3063 = vpop.f32.mrb[0].mxu0
    %v3064 = vadd.f32 %v2086, %v3063
    %v3065 = vpop.f32.mrb[0].mxu0
    %v3066 = vadd.f32 %v2082, %v3065
    %v3067 = vpop.f32.mrb[0].mxu0
    %v3068 = vadd.f32 %v2086, %v3067
    %3069 = vdwg.mxu0
    %3070 = vmatprep.subr.bf16.mxu0 %v2542
    %3071 = vmatpush1.bf16.msra.mxu0 %v2541
    %3072 = vmatprep.subr.bf16.mxu0 %v2546
    %3073 = vmatpush1.bf16.msra.mxu0 %v2545
    %3074 = vmatprep.subr.bf16.mxu0 %v2550
    %3075 = vmatpush1.bf16.msra.mxu0 %v2549
    %3076 = vmatprep.subr.bf16.mxu0 %v2554
    %3077 = vmatpush1.bf16.msra.mxu0 %v2553
    %3078 = vmatprep.subr.bf16.mxu0 %v2558
    %3079 = vmatpush1.bf16.msra.mxu0 %v2557
    %3080 = vmatprep.subr.bf16.mxu0 %v2562
    %3081 = vmatpush1.bf16.msra.mxu0 %v2561
    %3082 = vmatprep.subr.bf16.mxu0 %v2566
    %3083 = vmatpush1.bf16.msra.mxu0 %v2565
    %3084 = vmatprep.subr.bf16.mxu0 %v2570
    %3085 = vmatpush1.bf16.msra.mxu0 %v2569
    %3086 = vmatprep.subr.bf16.mxu0 %v2574
    %3087 = vmatpush1.bf16.msra.mxu0 %v2573
    %3088 = vmatprep.subr.bf16.mxu0 %v2578
    %3089 = vmatpush1.bf16.msra.mxu0 %v2577
    %3090 = vmatprep.subr.bf16.mxu0 %v2582
    %3091 = vmatpush1.bf16.msra.mxu0 %v2581
    %3092 = vmatprep.subr.bf16.mxu0 %v2586
    %3093 = vmatpush1.bf16.msra.mxu0 %v2585
    %3094 = vmatprep.subr.bf16.mxu0 %v2590
    %3095 = vmatpush1.bf16.msra.mxu0 %v2589
    %3096 = vmatprep.subr.bf16.mxu0 %v2594
    %3097 = vmatpush1.bf16.msra.mxu0 %v2593
    %3098 = vmatprep.subr.bf16.mxu0 %v2598
    %3099 = vmatpush1.bf16.msra.mxu0 %v2597
    %3100 = vmatprep.subr.bf16.mxu0 %v2602
    %3101 = vmatpush1.bf16.msra.mxu0 %v2601
    %3102 = vmatprep.mubr.bf16.mxu0 %v1910
    %3103 = vmatmul.mubr.bf16.gmra.mrb[0].mxu0 %v1909
    %v3104 = vpop.f32.mrb[0].mxu0
    %v3105 = vadd.f32 %v2992, %v3104
    %v3106 = vpop.f32.mrb[0].mxu0
    %v3107 = vadd.f32 %v2994, %v3106
    %v3108 = vpop.f32.mrb[0].mxu0
    %v3109 = vadd.f32 %v2996, %v3108
    %v3110 = vpop.f32.mrb[0].mxu0
    %v3111 = vadd.f32 %v2998, %v3110
    %3112 = vmatprep.mubr.bf16.mxu0 %v1914
    %3113 = vmatmul.mubr.bf16.gmra.mrb[0].mxu0 %v1913
    %v3114 = vpop.f32.mrb[0].mxu0
    %v3115 = vadd.f32 %v3002, %v3114
    %v3116 = vpop.f32.mrb[0].mxu0
    %v3117 = vadd.f32 %v3004, %v3116
    %v3118 = vpop.f32.mrb[0].mxu0
    %v3119 = vadd.f32 %v3006, %v3118
    %v3120 = vpop.f32.mrb[0].mxu0
    %v3121 = vadd.f32 %v3008, %v3120
    %3122 = vmatprep.mubr.bf16.mxu0 %v1918
    %3123 = vmatmul.mubr.bf16.gmra.mrb[0].mxu0 %v1917
    %v3124 = vpop.f32.mrb[0].mxu0
    %v3125 = vadd.f32 %v3012, %v3124
    %v3126 = vpop.f32.mrb[0].mxu0
    %v3127 = vadd.f32 %v3014, %v3126
    %v3128 = vpop.f32.mrb[0].mxu0
    %v3129 = vadd.f32 %v3016, %v3128
    %v3130 = vpop.f32.mrb[0].mxu0
    %v3131 = vadd.f32 %v3018, %v3130
    %3132 = vmatprep.mubr.bf16.mxu0 %v1922
    %3133 = vmatmul.mubr.bf16.gmra.mrb[0].mxu0 %v1921
    %v3134 = vpop.f32.mrb[0].mxu0
    %v3135 = vadd.f32 %v3022, %v3134
    %v3136 = vpop.f32.mrb[0].mxu0
    %v3137 = vadd.f32 %v3024, %v3136
    %v3138 = vpop.f32.mrb[0].mxu0
    %v3139 = vadd.f32 %v3026, %v3138
    %v3140 = vpop.f32.mrb[0].mxu0
    %v3141 = vadd.f32 %v3028, %v3140
    %3142 = vmatprep.mubr.bf16.mxu0 %v1926
    %3143 = vmatmul.mubr.bf16.gmra.mrb[0].mxu0 %v1925
    %v3144 = vpop.f32.mrb[0].mxu0
    %v3145 = vadd.f32 %v3032, %v3144
    %v3146 = vpop.f32.mrb[0].mxu0
    %v3147 = vadd.f32 %v3034, %v3146
    %v3148 = vpop.f32.mrb[0].mxu0
    %v3149 = vadd.f32 %v3036, %v3148
    %v3150 = vpop.f32.mrb[0].mxu0
    %v3151 = vadd.f32 %v3038, %v3150
    %3152 = vmatprep.mubr.bf16.mxu0 %v1930
    %3153 = vmatmul.mubr.bf16.gmra.mrb[0].mxu0 %v1929
    %v3154 = vpop.f32.mrb[0].mxu0
    %v3155 = vadd.f32 %v3042, %v3154
    %v3156 = vpop.f32.mrb[0].mxu0
    %v3157 = vadd.f32 %v3044, %v3156
    %v3158 = vpop.f32.mrb[0].mxu0
    %v3159 = vadd.f32 %v3046, %v3158
    %v3160 = vpop.f32.mrb[0].mxu0
    %v3161 = vadd.f32 %v3048, %v3160
    %3162 = vmatprep.mubr.bf16.mxu0 %v1934
    %3163 = vmatmul.mubr.bf16.gmra.mrb[0].mxu0 %v1933
    %v3164 = vpop.f32.mrb[0].mxu0
    %v3165 = vadd.f32 %v3052, %v3164
    %v3166 = vpop.f32.mrb[0].mxu0
    %v3167 = vadd.f32 %v3054, %v3166
    %v3168 = vpop.f32.mrb[0].mxu0
    %v3169 = vadd.f32 %v3056, %v3168
    %v3170 = vpop.f32.mrb[0].mxu0
    %v3171 = vadd.f32 %v3058, %v3170
    %3172 = vmatprep.mubr.bf16.mxu0 %v1938
    %3173 = vmatmul.mubr.bf16.gmra.mrb[0].mxu0 %v1937
    %v3174 = vpop.f32.mrb[0].mxu0
    %v3175 = vadd.f32 %v3062, %v3174
    %v3176 = vpop.f32.mrb[0].mxu0
    %v3177 = vadd.f32 %v3064, %v3176
    %v3178 = vpop.f32.mrb[0].mxu0
    %v3179 = vadd.f32 %v3066, %v3178
    %v3180 = vpop.f32.mrb[0].mxu0
    %v3181 = vadd.f32 %v3068, %v3180
    %3182 = vdwg.mxu0
    %vm3183 = vcmp.ge.f32.partialorder %v2879, 0.0
    %vm3184 = vcmp.ge.f32.partialorder %v2881, 0.0
    %vm3185 = vcmp.ge.f32.partialorder %v3105, 0.0
    %vm3186 = vcmp.ge.f32.partialorder %v3107, 0.0
    %vm3187 = vcmp.ge.f32.partialorder %v2883, 0.0
    %vm3188 = vcmp.ge.f32.partialorder %v2885, 0.0
    %vm3189 = vcmp.ge.f32.partialorder %v3109, 0.0
    %vm3190 = vcmp.ge.f32.partialorder %v3111, 0.0
    %vm3191 = vcmp.ge.f32.partialorder %v2889, 0.0
    %vm3192 = vcmp.ge.f32.partialorder %v2891, 0.0
    %vm3193 = vcmp.ge.f32.partialorder %v3115, 0.0
    %vm3194 = vcmp.ge.f32.partialorder %v3117, 0.0
    %vm3195 = vcmp.ge.f32.partialorder %v2893, 0.0
    %vm3196 = vcmp.ge.f32.partialorder %v2895, 0.0
    %vm3197 = vcmp.ge.f32.partialorder %v3119, 0.0
    %vm3198 = vcmp.ge.f32.partialorder %v3121, 0.0
    %vm3199 = vcmp.ge.f32.partialorder %v2899, 0.0
    %vm3200 = vcmp.ge.f32.partialorder %v2901, 0.0
    %vm3201 = vcmp.ge.f32.partialorder %v3125, 0.0
    %vm3202 = vcmp.ge.f32.partialorder %v3127, 0.0
    %vm3203 = vcmp.ge.f32.partialorder %v2903, 0.0
    %vm3204 = vcmp.ge.f32.partialorder %v2905, 0.0
    %vm3205 = vcmp.ge.f32.partialorder %v3129, 0.0
    %vm3206 = vcmp.ge.f32.partialorder %v3131, 0.0
    %vm3207 = vcmp.ge.f32.partialorder %v2909, 0.0
    %vm3208 = vcmp.ge.f32.partialorder %v2911, 0.0
    %vm3209 = vcmp.ge.f32.partialorder %v3135, 0.0
    %vm3210 = vcmp.ge.f32.partialorder %v3137, 0.0
    %vm3211 = vcmp.ge.f32.partialorder %v2913, 0.0
    %vm3212 = vcmp.ge.f32.partialorder %v2915, 0.0
    %vm3213 = vcmp.ge.f32.partialorder %v3139, 0.0
    %vm3214 = vcmp.ge.f32.partialorder %v3141, 0.0
    %vm3215 = vcmp.ge.f32.partialorder %v2919, 0.0
    %vm3216 = vcmp.ge.f32.partialorder %v2921, 0.0
    %vm3217 = vcmp.ge.f32.partialorder %v3145, 0.0
    %vm3218 = vcmp.ge.f32.partialorder %v3147, 0.0
    %vm3219 = vcmp.ge.f32.partialorder %v2923, 0.0
    %vm3220 = vcmp.ge.f32.partialorder %v2925, 0.0
    %vm3221 = vcmp.ge.f32.partialorder %v3149, 0.0
    %vm3222 = vcmp.ge.f32.partialorder %v3151, 0.0
    %vm3223 = vcmp.ge.f32.partialorder %v2929, 0.0
    %vm3224 = vcmp.ge.f32.partialorder %v2931, 0.0
    %vm3225 = vcmp.ge.f32.partialorder %v3155, 0.0
    %vm3226 = vcmp.ge.f32.partialorder %v3157, 0.0
    %vm3227 = vcmp.ge.f32.partialorder %v2933, 0.0
    %vm3228 = vcmp.ge.f32.partialorder %v2935, 0.0
    %vm3229 = vcmp.ge.f32.partialorder %v3159, 0.0
    %vm3230 = vcmp.ge.f32.partialorder %v3161, 0.0
    %vm3231 = vcmp.ge.f32.partialorder %v2939, 0.0
    %vm3232 = vcmp.ge.f32.partialorder %v2941, 0.0
    %vm3233 = vcmp.ge.f32.partialorder %v3165, 0.0
    %vm3234 = vcmp.ge.f32.partialorder %v3167, 0.0
    %vm3235 = vcmp.ge.f32.partialorder %v2943, 0.0
    %vm3236 = vcmp.ge.f32.partialorder %v2945, 0.0
    %vm3237 = vcmp.ge.f32.partialorder %v3169, 0.0
    %vm3238 = vcmp.ge.f32.partialorder %v3171, 0.0
    %vm3239 = vcmp.ge.f32.partialorder %v2949, 0.0
    %vm3240 = vcmp.ge.f32.partialorder %v2951, 0.0
    %vm3241 = vcmp.ge.f32.partialorder %v3175, 0.0
    %vm3242 = vcmp.ge.f32.partialorder %v3177, 0.0
    %vm3243 = vcmp.ge.f32.partialorder %v2953, 0.0
    %vm3244 = vcmp.ge.f32.partialorder %v2955, 0.0
    %vm3245 = vcmp.ge.f32.partialorder %v3179, 0.0
    %vm3246 = vcmp.ge.f32.partialorder %v3181, 0.0
    %v3247 = vmul.f32 %v2879, 1.4142135
    %v3248 = vmul.f32 %v2881, 1.4142135
    %v3249 = vmul.f32 %v3105, 1.4142135
    %v3250 = vmul.f32 %v3107, 1.4142135
    %v3251 = vmul.f32 %v2883, 1.4142135
    %v3252 = vmul.f32 %v2885, 1.4142135
    %v3253 = vmul.f32 %v3109, 1.4142135
    %v3254 = vmul.f32 %v3111, 1.4142135
    %v3255 = vmul.f32 %v2889, 1.4142135
    %v3256 = vmul.f32 %v2891, 1.4142135
    %v3257 = vmul.f32 %v3115, 1.4142135
    %v3258 = vmul.f32 %v3117, 1.4142135
    %v3259 = vmul.f32 %v2893, 1.4142135
    %v3260 = vmul.f32 %v2895, 1.4142135
    %v3261 = vmul.f32 %v3119, 1.4142135
    %v3262 = vmul.f32 %v3121, 1.4142135
    %v3263 = vmul.f32 %v2899, 1.4142135
    %v3264 = vmul.f32 %v2901, 1.4142135
    %v3265 = vmul.f32 %v3125, 1.4142135
    %v3266 = vmul.f32 %v3127, 1.4142135
    %v3267 = vmul.f32 %v2903, 1.4142135
    %v3268 = vmul.f32 %v2905, 1.4142135
    %v3269 = vmul.f32 %v3129, 1.4142135
    %v3270 = vmul.f32 %v3131, 1.4142135
    %v3271 = vmul.f32 %v2909, 1.4142135
    %v3272 = vmul.f32 %v2911, 1.4142135
    %v3273 = vmul.f32 %v3135, 1.4142135
    %v3274 = vmul.f32 %v3137, 1.4142135
    %v3275 = vmul.f32 %v2913, 1.4142135
    %v3276 = vmul.f32 %v2915, 1.4142135
    %v3277 = vmul.f32 %v3139, 1.4142135
    %v3278 = vmul.f32 %v3141, 1.4142135
    %v3279 = vmul.f32 %v2919, 1.4142135
    %v3280 = vmul.f32 %v2921, 1.4142135
    %v3281 = vmul.f32 %v3145, 1.4142135
    %v3282 = vmul.f32 %v3147, 1.4142135
    %v3283 = vmul.f32 %v2923, 1.4142135
    %v3284 = vmul.f32 %v2925, 1.4142135
    %v3285 = vmul.f32 %v3149, 1.4142135
    %v3286 = vmul.f32 %v3151, 1.4142135
    %v3287 = vmul.f32 %v2929, 1.4142135
    %v3288 = vmul.f32 %v2931, 1.4142135
    %v3289 = vmul.f32 %v3155, 1.4142135
    %v3290 = vmul.f32 %v3157, 1.4142135
    %v3291 = vmul.f32 %v2933, 1.4142135
    %v3292 = vmul.f32 %v2935, 1.4142135
    %v3293 = vmul.f32 %v3159, 1.4142135
    %v3294 = vmul.f32 %v3161, 1.4142135
    %v3295 = vmul.f32 %v2939, 1.4142135
    %v3296 = vmul.f32 %v2941, 1.4142135
    %v3297 = vmul.f32 %v3165, 1.4142135
    %v3298 = vmul.f32 %v3167, 1.4142135
    %v3299 = vmul.f32 %v2943, 1.4142135
    %v3300 = vmul.f32 %v2945, 1.4142135
    %v3301 = vmul.f32 %v3169, 1.4142135
    %v3302 = vmul.f32 %v3171, 1.4142135
    %v3303 = vmul.f32 %v2949, 1.4142135
    %v3304 = vmul.f32 %v2951, 1.4142135
    %v3305 = vmul.f32 %v3175, 1.4142135
    %v3306 = vmul.f32 %v3177, 1.4142135
    %v3307 = vmul.f32 %v2953, 1.4142135
    %v3308 = vmul.f32 %v2955, 1.4142135
    %v3309 = vmul.f32 %v3179, 1.4142135
    %v3310 = vmul.f32 %v3181, 1.4142135
    %v3311 = vmul.f32 %v2879, 0.28284273
    %v3312 = vmul.f32 %v2881, 0.28284273
    %v3313 = vmul.f32 %v3105, 0.28284273
    %v3314 = vmul.f32 %v3107, 0.28284273
    %v3315 = vmul.f32 %v2883, 0.28284273
    %v3316 = vmul.f32 %v2885, 0.28284273
    %v3317 = vmul.f32 %v3109, 0.28284273
    %v3318 = vmul.f32 %v3111, 0.28284273
    %v3319 = vmul.f32 %v2889, 0.28284273
    %v3320 = vmul.f32 %v2891, 0.28284273
    %v3321 = vmul.f32 %v3115, 0.28284273
    %v3322 = vmul.f32 %v3117, 0.28284273
    %v3323 = vmul.f32 %v2893, 0.28284273
    %v3324 = vmul.f32 %v2895, 0.28284273
    %v3325 = vmul.f32 %v3119, 0.28284273
    %v3326 = vmul.f32 %v3121, 0.28284273
    %v3327 = vmul.f32 %v2899, 0.28284273
    %v3328 = vmul.f32 %v2901, 0.28284273
    %v3329 = vmul.f32 %v3125, 0.28284273
    %v3330 = vmul.f32 %v3127, 0.28284273
    %v3331 = vmul.f32 %v2903, 0.28284273
    %v3332 = vmul.f32 %v2905, 0.28284273
    %v3333 = vmul.f32 %v3129, 0.28284273
    %v3334 = vmul.f32 %v3131, 0.28284273
    %v3335 = vmul.f32 %v2909, 0.28284273
    %v3336 = vmul.f32 %v2911, 0.28284273
    %v3337 = vmul.f32 %v3135, 0.28284273
    %v3338 = vmul.f32 %v3137, 0.28284273
    %v3339 = vmul.f32 %v2913, 0.28284273
    %v3340 = vmul.f32 %v2915, 0.28284273
    %v3341 = vmul.f32 %v3139, 0.28284273
    %v3342 = vmul.f32 %v3141, 0.28284273
    %v3343 = vmul.f32 %v2919, 0.28284273
    %v3344 = vmul.f32 %v2921, 0.28284273
    %v3345 = vmul.f32 %v3145, 0.28284273
    %v3346 = vmul.f32 %v3147, 0.28284273
    %v3347 = vmul.f32 %v2923, 0.28284273
    %v3348 = vmul.f32 %v2925, 0.28284273
    %v3349 = vmul.f32 %v3149, 0.28284273
    %v3350 = vmul.f32 %v3151, 0.28284273
    %v3351 = vmul.f32 %v2929, 0.28284273
    %v3352 = vmul.f32 %v2931, 0.28284273
    %v3353 = vmul.f32 %v3155, 0.28284273
    %v3354 = vmul.f32 %v3157, 0.28284273
    %v3355 = vmul.f32 %v2933, 0.28284273
    %v3356 = vmul.f32 %v2935, 0.28284273
    %v3357 = vmul.f32 %v3159, 0.28284273
    %v3358 = vmul.f32 %v3161, 0.28284273
    %v3359 = vmul.f32 %v2939, 0.28284273
    %v3360 = vmul.f32 %v2941, 0.28284273
    %v3361 = vmul.f32 %v3165, 0.28284273
    %v3362 = vmul.f32 %v3167, 0.28284273
    %v3363 = vmul.f32 %v2943, 0.28284273
    %v3364 = vmul.f32 %v2945, 0.28284273
    %v3365 = vmul.f32 %v3169, 0.28284273
    %v3366 = vmul.f32 %v3171, 0.28284273
    %v3367 = vmul.f32 %v2949, 0.28284273
    %v3368 = vmul.f32 %v2951, 0.28284273
    %v3369 = vmul.f32 %v3175, 0.28284273
    %v3370 = vmul.f32 %v3177, 0.28284273
    %v3371 = vmul.f32 %v2953, 0.28284273
    %v3372 = vmul.f32 %v2955, 0.28284273
    %v3373 = vmul.f32 %v3179, 0.28284273
    %v3374 = vmul.f32 %v3181, 0.28284273
    %v3375 = vsel %vm3183, %v3247, %v3311
    %v3376 = vsel %vm3184, %v3248, %v3312
    %v3377 = vsel %vm3185, %v3249, %v3313
    %v3378 = vsel %vm3186, %v3250, %v3314
    %v3379 = vsel %vm3187, %v3251, %v3315
    %v3380 = vsel %vm3188, %v3252, %v3316
    %v3381 = vsel %vm3189, %v3253, %v3317
    %v3382 = vsel %vm3190, %v3254, %v3318
    %v3383 = vsel %vm3191, %v3255, %v3319
    %v3384 = vsel %vm3192, %v3256, %v3320
    %v3385 = vsel %vm3193, %v3257, %v3321
    %v3386 = vsel %vm3194, %v3258, %v3322
    %v3387 = vsel %vm3195, %v3259, %v3323
    %v3388 = vsel %vm3196, %v3260, %v3324
    %v3389 = vsel %vm3197, %v3261, %v3325
    %v3390 = vsel %vm3198, %v3262, %v3326
    %v3391 = vsel %vm3199, %v3263, %v3327
    %v3392 = vsel %vm3200, %v3264, %v3328
    %v3393 = vsel %vm3201, %v3265, %v3329
    %v3394 = vsel %vm3202, %v3266, %v3330
    %v3395 = vsel %vm3203, %v3267, %v3331
    %v3396 = vsel %vm3204, %v3268, %v3332
    %v3397 = vsel %vm3205, %v3269, %v3333
    %v3398 = vsel %vm3206, %v3270, %v3334
    %v3399 = vsel %vm3207, %v3271, %v3335
    %v3400 = vsel %vm3208, %v3272, %v3336
    %v3401 = vsel %vm3209, %v3273, %v3337
    %v3402 = vsel %vm3210, %v3274, %v3338
    %v3403 = vsel %vm3211, %v3275, %v3339
    %v3404 = vsel %vm3212, %v3276, %v3340
    %v3405 = vsel %vm3213, %v3277, %v3341
    %v3406 = vsel %vm3214, %v3278, %v3342
    %v3407 = vsel %vm3215, %v3279, %v3343
    %v3408 = vsel %vm3216, %v3280, %v3344
    %v3409 = vsel %vm3217, %v3281, %v3345
    %v3410 = vsel %vm3218, %v3282, %v3346
    %v3411 = vsel %vm3219, %v3283, %v3347
    %v3412 = vsel %vm3220, %v3284, %v3348
    %v3413 = vsel %vm3221, %v3285, %v3349
    %v3414 = vsel %vm3222, %v3286, %v3350
    %v3415 = vsel %vm3223, %v3287, %v3351
    %v3416 = vsel %vm3224, %v3288, %v3352
    %v3417 = vsel %vm3225, %v3289, %v3353
    %v3418 = vsel %vm3226, %v3290, %v3354
    %v3419 = vsel %vm3227, %v3291, %v3355
    %v3420 = vsel %vm3228, %v3292, %v3356
    %v3421 = vsel %vm3229, %v3293, %v3357
    %v3422 = vsel %vm3230, %v3294, %v3358
    %v3423 = vsel %vm3231, %v3295, %v3359
    %v3424 = vsel %vm3232, %v3296, %v3360
    %v3425 = vsel %vm3233, %v3297, %v3361
    %v3426 = vsel %vm3234, %v3298, %v3362
    %v3427 = vsel %vm3235, %v3299, %v3363
    %v3428 = vsel %vm3236, %v3300, %v3364
    %v3429 = vsel %vm3237, %v3301, %v3365
    %v3430 = vsel %vm3238, %v3302, %v3366
    %v3431 = vsel %vm3239, %v3303, %v3367
    %v3432 = vsel %vm3240, %v3304, %v3368
    %v3433 = vsel %vm3241, %v3305, %v3369
    %v3434 = vsel %vm3242, %v3306, %v3370
    %v3435 = vsel %vm3243, %v3307, %v3371
    %v3436 = vsel %vm3244, %v3308, %v3372
    %v3437 = vsel %vm3245, %v3309, %v3373
    %v3438 = vsel %vm3246, %v3310, %v3374
    %v3439 = vpack.c.bf16 %v3379, %v3375
    %v3440 = vpack.c.bf16 %v3380, %v3376
    %v3441 = vpack.c.bf16 %v3381, %v3377
    %v3442 = vpack.c.bf16 %v3382, %v3378
    %v3443 = vpack.c.bf16 %v3387, %v3383
    %v3444 = vpack.c.bf16 %v3388, %v3384
    %v3445 = vpack.c.bf16 %v3389, %v3385
    %v3446 = vpack.c.bf16 %v3390, %v3386
    %v3447 = vpack.c.bf16 %v3395, %v3391
    %v3448 = vpack.c.bf16 %v3396, %v3392
    %v3449 = vpack.c.bf16 %v3397, %v3393
    %v3450 = vpack.c.bf16 %v3398, %v3394
    %v3451 = vpack.c.bf16 %v3403, %v3399
    %v3452 = vpack.c.bf16 %v3404, %v3400
    %v3453 = vpack.c.bf16 %v3405, %v3401
    %v3454 = vpack.c.bf16 %v3406, %v3402
    %v3455 = vpack.c.bf16 %v3411, %v3407
    %v3456 = vpack.c.bf16 %v3412, %v3408
    %v3457 = vpack.c.bf16 %v3413, %v3409
    %v3458 = vpack.c.bf16 %v3414, %v3410
    %v3459 = vpack.c.bf16 %v3419, %v3415
    %v3460 = vpack.c.bf16 %v3420, %v3416
    %v3461 = vpack.c.bf16 %v3421, %v3417
    %v3462 = vpack.c.bf16 %v3422, %v3418
    %v3463 = vpack.c.bf16 %v3427, %v3423
    %v3464 = vpack.c.bf16 %v3428, %v3424
    %v3465 = vpack.c.bf16 %v3429, %v3425
    %v3466 = vpack.c.bf16 %v3430, %v3426
    %v3467 = vpack.c.bf16 %v3435, %v3431
    %v3468 = vpack.c.bf16 %v3436, %v3432
    %v3469 = vpack.c.bf16 %v3437, %v3433
    %v3470 = vpack.c.bf16 %v3438, %v3434
    %s3471 = scalar_lea.vmem [#allocation5], 2048
    %v3472 = vld [vmem:[%s3471] sm:$0xff]
    %v3473 = vld [vmem:[%s3471 + $0x8] sm:$0xff]
    %v3474 = vld [vmem:[%s3471 + $0x10] sm:$0xff]
    %v3475 = vld [vmem:[%s3471 + $0x18] sm:$0xff]
    %v3476 = vld [vmem:[%s3471 + $0x20] sm:$0xff]
    %v3477 = vld [vmem:[%s3471 + $0x28] sm:$0xff]
    %v3478 = vld [vmem:[%s3471 + $0x30] sm:$0xff]
    %v3479 = vld [vmem:[%s3471 + $0x38] sm:$0xff]
    %v3480 = vld [vmem:[%s3471 + $0x40] sm:$0xff]
    %v3481 = vld [vmem:[%s3471 + $0x48] sm:$0xff]
    %v3482 = vld [vmem:[%s3471 + $0x50] sm:$0xff]
    %v3483 = vld [vmem:[%s3471 + $0x58] sm:$0xff]
    %v3484 = vld [vmem:[%s3471 + $0x60] sm:$0xff]
    %v3485 = vld [vmem:[%s3471 + $0x68] sm:$0xff]
    %v3486 = vld [vmem:[%s3471 + $0x70] sm:$0xff]
    %v3487 = vld [vmem:[%s3471 + $0x78] sm:$0xff]
    %v3488 = vld [vmem:[%s3471 + $0x80] sm:$0xff]
    %v3489 = vld [vmem:[%s3471 + $0x88] sm:$0xff]
    %v3490 = vld [vmem:[%s3471 + $0x90] sm:$0xff]
    %v3491 = vld [vmem:[%s3471 + $0x98] sm:$0xff]
    %v3492 = vld [vmem:[%s3471 + $0xa0] sm:$0xff]
    %v3493 = vld [vmem:[%s3471 + $0xa8] sm:$0xff]
    %v3494 = vld [vmem:[%s3471 + $0xb0] sm:$0xff]
    %v3495 = vld [vmem:[%s3471 + $0xb8] sm:$0xff]
    %v3496 = vld [vmem:[%s3471 + $0xc0] sm:$0xff]
    %v3497 = vld [vmem:[%s3471 + $0xc8] sm:$0xff]
    %v3498 = vld [vmem:[%s3471 + $0xd0] sm:$0xff]
    %v3499 = vld [vmem:[%s3471 + $0xd8] sm:$0xff]
    %v3500 = vld [vmem:[%s3471 + $0xe0] sm:$0xff]
    %v3501 = vld [vmem:[%s3471 + $0xe8] sm:$0xff]
    %v3502 = vld [vmem:[%s3471 + $0xf0] sm:$0xff]
    %v3503 = vld [vmem:[%s3471 + $0xf8] sm:$0xff]
    %v3504 = vld [vmem:[%s3471 + $0x100] sm:$0xff]
    %v3505 = vld [vmem:[%s3471 + $0x108] sm:$0xff]
    %v3506 = vld [vmem:[%s3471 + $0x110] sm:$0xff]
    %v3507 = vld [vmem:[%s3471 + $0x118] sm:$0xff]
    %v3508 = vld [vmem:[%s3471 + $0x120] sm:$0xff]
    %v3509 = vld [vmem:[%s3471 + $0x128] sm:$0xff]
    %v3510 = vld [vmem:[%s3471 + $0x130] sm:$0xff]
    %v3511 = vld [vmem:[%s3471 + $0x138] sm:$0xff]
    %v3512 = vld [vmem:[%s3471 + $0x140] sm:$0xff]
    %v3513 = vld [vmem:[%s3471 + $0x148] sm:$0xff]
    %v3514 = vld [vmem:[%s3471 + $0x150] sm:$0xff]
    %v3515 = vld [vmem:[%s3471 + $0x158] sm:$0xff]
    %v3516 = vld [vmem:[%s3471 + $0x160] sm:$0xff]
    %v3517 = vld [vmem:[%s3471 + $0x168] sm:$0xff]
    %v3518 = vld [vmem:[%s3471 + $0x170] sm:$0xff]
    %v3519 = vld [vmem:[%s3471 + $0x178] sm:$0xff]
    %v3520 = vld [vmem:[%s3471 + $0x180] sm:$0xff]
    %v3521 = vld [vmem:[%s3471 + $0x188] sm:$0xff]
    %v3522 = vld [vmem:[%s3471 + $0x190] sm:$0xff]
    %v3523 = vld [vmem:[%s3471 + $0x198] sm:$0xff]
    %v3524 = vld [vmem:[%s3471 + $0x1a0] sm:$0xff]
    %v3525 = vld [vmem:[%s3471 + $0x1a8] sm:$0xff]
    %v3526 = vld [vmem:[%s3471 + $0x1b0] sm:$0xff]
    %v3527 = vld [vmem:[%s3471 + $0x1b8] sm:$0xff]
    %v3528 = vld [vmem:[%s3471 + $0x1c0] sm:$0xff]
    %v3529 = vld [vmem:[%s3471 + $0x1c8] sm:$0xff]
    %v3530 = vld [vmem:[%s3471 + $0x1d0] sm:$0xff]
    %v3531 = vld [vmem:[%s3471 + $0x1d8] sm:$0xff]
    %v3532 = vld [vmem:[%s3471 + $0x1e0] sm:$0xff]
    %v3533 = vld [vmem:[%s3471 + $0x1e8] sm:$0xff]
    %v3534 = vld [vmem:[%s3471 + $0x1f0] sm:$0xff]
    %v3535 = vld [vmem:[%s3471 + $0x1f8] sm:$0xff]
    %v3536 = vld [vmem:[%s3471 + $0x200] sm:$0xff]
    %v3537 = vld [vmem:[%s3471 + $0x208] sm:$0xff]
    %v3538 = vld [vmem:[%s3471 + $0x210] sm:$0xff]
    %v3539 = vld [vmem:[%s3471 + $0x218] sm:$0xff]
    %v3540 = vld [vmem:[%s3471 + $0x220] sm:$0xff]
    %v3541 = vld [vmem:[%s3471 + $0x228] sm:$0xff]
    %v3542 = vld [vmem:[%s3471 + $0x230] sm:$0xff]
    %v3543 = vld [vmem:[%s3471 + $0x238] sm:$0xff]
    %v3544 = vld [vmem:[%s3471 + $0x240] sm:$0xff]
    %v3545 = vld [vmem:[%s3471 + $0x248] sm:$0xff]
    %v3546 = vld [vmem:[%s3471 + $0x250] sm:$0xff]
    %v3547 = vld [vmem:[%s3471 + $0x258] sm:$0xff]
    %v3548 = vld [vmem:[%s3471 + $0x260] sm:$0xff]
    %v3549 = vld [vmem:[%s3471 + $0x268] sm:$0xff]
    %v3550 = vld [vmem:[%s3471 + $0x270] sm:$0xff]
    %v3551 = vld [vmem:[%s3471 + $0x278] sm:$0xff]
    %v3552 = vld [vmem:[%s3471 + $0x280] sm:$0xff]
    %v3553 = vld [vmem:[%s3471 + $0x288] sm:$0xff]
    %v3554 = vld [vmem:[%s3471 + $0x290] sm:$0xff]
    %v3555 = vld [vmem:[%s3471 + $0x298] sm:$0xff]
    %v3556 = vld [vmem:[%s3471 + $0x2a0] sm:$0xff]
    %v3557 = vld [vmem:[%s3471 + $0x2a8] sm:$0xff]
    %v3558 = vld [vmem:[%s3471 + $0x2b0] sm:$0xff]
    %v3559 = vld [vmem:[%s3471 + $0x2b8] sm:$0xff]
    %v3560 = vld [vmem:[%s3471 + $0x2c0] sm:$0xff]
    %v3561 = vld [vmem:[%s3471 + $0x2c8] sm:$0xff]
    %v3562 = vld [vmem:[%s3471 + $0x2d0] sm:$0xff]
    %v3563 = vld [vmem:[%s3471 + $0x2d8] sm:$0xff]
    %v3564 = vld [vmem:[%s3471 + $0x2e0] sm:$0xff]
    %v3565 = vld [vmem:[%s3471 + $0x2e8] sm:$0xff]
    %v3566 = vld [vmem:[%s3471 + $0x2f0] sm:$0xff]
    %v3567 = vld [vmem:[%s3471 + $0x2f8] sm:$0xff]
    %v3568 = vld [vmem:[%s3471 + $0x300] sm:$0xff]
    %v3569 = vld [vmem:[%s3471 + $0x308] sm:$0xff]
    %v3570 = vld [vmem:[%s3471 + $0x310] sm:$0xff]
    %v3571 = vld [vmem:[%s3471 + $0x318] sm:$0xff]
    %v3572 = vld [vmem:[%s3471 + $0x320] sm:$0xff]
    %v3573 = vld [vmem:[%s3471 + $0x328] sm:$0xff]
    %v3574 = vld [vmem:[%s3471 + $0x330] sm:$0xff]
    %v3575 = vld [vmem:[%s3471 + $0x338] sm:$0xff]
    %v3576 = vld [vmem:[%s3471 + $0x340] sm:$0xff]
    %v3577 = vld [vmem:[%s3471 + $0x348] sm:$0xff]
    %v3578 = vld [vmem:[%s3471 + $0x350] sm:$0xff]
    %v3579 = vld [vmem:[%s3471 + $0x358] sm:$0xff]
    %v3580 = vld [vmem:[%s3471 + $0x360] sm:$0xff]
    %v3581 = vld [vmem:[%s3471 + $0x368] sm:$0xff]
    %v3582 = vld [vmem:[%s3471 + $0x370] sm:$0xff]
    %v3583 = vld [vmem:[%s3471 + $0x378] sm:$0xff]
    %v3584 = vld [vmem:[%s3471 + $0x380] sm:$0xff]
    %v3585 = vld [vmem:[%s3471 + $0x388] sm:$0xff]
    %v3586 = vld [vmem:[%s3471 + $0x390] sm:$0xff]
    %v3587 = vld [vmem:[%s3471 + $0x398] sm:$0xff]
    %v3588 = vld [vmem:[%s3471 + $0x3a0] sm:$0xff]
    %v3589 = vld [vmem:[%s3471 + $0x3a8] sm:$0xff]
    %v3590 = vld [vmem:[%s3471 + $0x3b0] sm:$0xff]
    %v3591 = vld [vmem:[%s3471 + $0x3b8] sm:$0xff]
    %v3592 = vld [vmem:[%s3471 + $0x3c0] sm:$0xff]
    %v3593 = vld [vmem:[%s3471 + $0x3c8] sm:$0xff]
    %v3594 = vld [vmem:[%s3471 + $0x3d0] sm:$0xff]
    %v3595 = vld [vmem:[%s3471 + $0x3d8] sm:$0xff]
    %v3596 = vld [vmem:[%s3471 + $0x3e0] sm:$0xff]
    %v3597 = vld [vmem:[%s3471 + $0x3e8] sm:$0xff]
    %v3598 = vld [vmem:[%s3471 + $0x3f0] sm:$0xff]
    %v3599 = vld [vmem:[%s3471 + $0x3f8] sm:$0xff]
    %s3600 = scalar_lea.vmem [#allocation7], 8
    %v3601 = vld [vmem:[%s3600] sm:$0xf]
    %v3603 = vlaneseq
    %v3604 = vshrl.u32 %v3603, 7
    %v3605 = vsub.s32 0, %v3604
    %v3606 = vrot.slane %v3601, %v3605
    %v3607 = vlaneseq
    %v3608 = vshrl.u32 %v3607, 7
    %v3609 = vsub.s32 1, %v3608
    %v3610 = vrot.slane %v3601, %v3609
    %v3611 = vlaneseq
    %v3612 = vshrl.u32 %v3611, 7
    %v3613 = vsub.s32 2, %v3612
    %v3614 = vrot.slane %v3601, %v3613
    %v3615 = vlaneseq
    %v3616 = vshrl.u32 %v3615, 7
    %v3617 = vsub.s32 3, %v3616
    %v3618 = vrot.slane %v3601, %v3617
    %v3751 = vunpack.c.l.b16 %v3472
    %v3752 = vunpack.c.h.b16 %v3472
    %v3753 = vunpack.c.l.b16 %v3473
    %v3754 = vunpack.c.h.b16 %v3473
    %v3755 = vunpack.c.l.b16 %v3474
    %v3756 = vunpack.c.h.b16 %v3474
    %v3757 = vunpack.c.l.b16 %v3475
    %v3758 = vunpack.c.h.b16 %v3475
    %v3759 = vunpack.c.l.b16 %v3476
    %v3760 = vunpack.c.h.b16 %v3476
    %v3761 = vunpack.c.l.b16 %v3477
    %v3762 = vunpack.c.h.b16 %v3477
    %v3763 = vunpack.c.l.b16 %v3478
    %v3764 = vunpack.c.h.b16 %v3478
    %v3765 = vunpack.c.l.b16 %v3479
    %v3766 = vunpack.c.h.b16 %v3479
    %v3767 = vunpack.c.l.b16 %v3480
    %v3768 = vunpack.c.h.b16 %v3480
    %v3769 = vunpack.c.l.b16 %v3481
    %v3770 = vunpack.c.h.b16 %v3481
    %v3771 = vunpack.c.l.b16 %v3482
    %v3772 = vunpack.c.h.b16 %v3482
    %v3773 = vunpack.c.l.b16 %v3483
    %v3774 = vunpack.c.h.b16 %v3483
    %v3775 = vunpack.c.l.b16 %v3484
    %v3776 = vunpack.c.h.b16 %v3484
    %v3777 = vunpack.c.l.b16 %v3485
    %v3778 = vunpack.c.h.b16 %v3485
    %v3779 = vunpack.c.l.b16 %v3486
    %v3780 = vunpack.c.h.b16 %v3486
    %v3781 = vunpack.c.l.b16 %v3487
    %v3782 = vunpack.c.h.b16 %v3487
    %v3783 = vunpack.c.l.b16 %v3488
    %v3784 = vunpack.c.h.b16 %v3488
    %v3785 = vunpack.c.l.b16 %v3489
    %v3786 = vunpack.c.h.b16 %v3489
    %v3787 = vunpack.c.l.b16 %v3490
    %v3788 = vunpack.c.h.b16 %v3490
    %v3789 = vunpack.c.l.b16 %v3491
    %v3790 = vunpack.c.h.b16 %v3491
    %v3791 = vunpack.c.l.b16 %v3492
    %v3792 = vunpack.c.h.b16 %v3492
    %v3793 = vunpack.c.l.b16 %v3493
    %v3794 = vunpack.c.h.b16 %v3493
    %v3795 = vunpack.c.l.b16 %v3494
    %v3796 = vunpack.c.h.b16 %v3494
    %v3797 = vunpack.c.l.b16 %v3495
    %v3798 = vunpack.c.h.b16 %v3495
    %v3799 = vunpack.c.l.b16 %v3496
    %v3800 = vunpack.c.h.b16 %v3496
    %v3801 = vunpack.c.l.b16 %v3497
    %v3802 = vunpack.c.h.b16 %v3497
    %v3803 = vunpack.c.l.b16 %v3498
    %v3804 = vunpack.c.h.b16 %v3498
    %v3805 = vunpack.c.l.b16 %v3499
    %v3806 = vunpack.c.h.b16 %v3499
    %v3807 = vunpack.c.l.b16 %v3500
    %v3808 = vunpack.c.h.b16 %v3500
    %v3809 = vunpack.c.l.b16 %v3501
    %v3810 = vunpack.c.h.b16 %v3501
    %v3811 = vunpack.c.l.b16 %v3502
    %v3812 = vunpack.c.h.b16 %v3502
    %v3813 = vunpack.c.l.b16 %v3503
    %v3814 = vunpack.c.h.b16 %v3503
    %v3815 = vunpack.c.l.b16 %v3504
    %v3816 = vunpack.c.h.b16 %v3504
    %v3817 = vunpack.c.l.b16 %v3505
    %v3818 = vunpack.c.h.b16 %v3505
    %v3819 = vunpack.c.l.b16 %v3506
    %v3820 = vunpack.c.h.b16 %v3506
    %v3821 = vunpack.c.l.b16 %v3507
    %v3822 = vunpack.c.h.b16 %v3507
    %v3823 = vunpack.c.l.b16 %v3508
    %v3824 = vunpack.c.h.b16 %v3508
    %v3825 = vunpack.c.l.b16 %v3509
    %v3826 = vunpack.c.h.b16 %v3509
    %v3827 = vunpack.c.l.b16 %v3510
    %v3828 = vunpack.c.h.b16 %v3510
    %v3829 = vunpack.c.l.b16 %v3511
    %v3830 = vunpack.c.h.b16 %v3511
    %v3831 = vunpack.c.l.b16 %v3512
    %v3832 = vunpack.c.h.b16 %v3512
    %v3833 = vunpack.c.l.b16 %v3513
    %v3834 = vunpack.c.h.b16 %v3513
    %v3835 = vunpack.c.l.b16 %v3514
    %v3836 = vunpack.c.h.b16 %v3514
    %v3837 = vunpack.c.l.b16 %v3515
    %v3838 = vunpack.c.h.b16 %v3515
    %v3839 = vunpack.c.l.b16 %v3516
    %v3840 = vunpack.c.h.b16 %v3516
    %v3841 = vunpack.c.l.b16 %v3517
    %v3842 = vunpack.c.h.b16 %v3517
    %v3843 = vunpack.c.l.b16 %v3518
    %v3844 = vunpack.c.h.b16 %v3518
    %v3845 = vunpack.c.l.b16 %v3519
    %v3846 = vunpack.c.h.b16 %v3519
    %v3847 = vunpack.c.l.b16 %v3520
    %v3848 = vunpack.c.h.b16 %v3520
    %v3849 = vunpack.c.l.b16 %v3521
    %v3850 = vunpack.c.h.b16 %v3521
    %v3851 = vunpack.c.l.b16 %v3522
    %v3852 = vunpack.c.h.b16 %v3522
    %v3853 = vunpack.c.l.b16 %v3523
    %v3854 = vunpack.c.h.b16 %v3523
    %v3855 = vunpack.c.l.b16 %v3524
    %v3856 = vunpack.c.h.b16 %v3524
    %v3857 = vunpack.c.l.b16 %v3525
    %v3858 = vunpack.c.h.b16 %v3525
    %v3859 = vunpack.c.l.b16 %v3526
    %v3860 = vunpack.c.h.b16 %v3526
    %v3861 = vunpack.c.l.b16 %v3527
    %v3862 = vunpack.c.h.b16 %v3527
    %v3863 = vunpack.c.l.b16 %v3528
    %v3864 = vunpack.c.h.b16 %v3528
    %v3865 = vunpack.c.l.b16 %v3529
    %v3866 = vunpack.c.h.b16 %v3529
    %v3867 = vunpack.c.l.b16 %v3530
    %v3868 = vunpack.c.h.b16 %v3530
    %v3869 = vunpack.c.l.b16 %v3531
    %v3870 = vunpack.c.h.b16 %v3531
    %v3871 = vunpack.c.l.b16 %v3532
    %v3872 = vunpack.c.h.b16 %v3532
    %v3873 = vunpack.c.l.b16 %v3533
    %v3874 = vunpack.c.h.b16 %v3533
    %v3875 = vunpack.c.l.b16 %v3534
    %v3876 = vunpack.c.h.b16 %v3534
    %v3877 = vunpack.c.l.b16 %v3535
    %v3878 = vunpack.c.h.b16 %v3535
    %v3879 = vunpack.c.l.b16 %v3536
    %v3880 = vunpack.c.h.b16 %v3536
    %v3881 = vunpack.c.l.b16 %v3537
    %v3882 = vunpack.c.h.b16 %v3537
    %v3883 = vunpack.c.l.b16 %v3538
    %v3884 = vunpack.c.h.b16 %v3538
    %v3885 = vunpack.c.l.b16 %v3539
    %v3886 = vunpack.c.h.b16 %v3539
    %v3887 = vunpack.c.l.b16 %v3540
    %v3888 = vunpack.c.h.b16 %v3540
    %v3889 = vunpack.c.l.b16 %v3541
    %v3890 = vunpack.c.h.b16 %v3541
    %v3891 = vunpack.c.l.b16 %v3542
    %v3892 = vunpack.c.h.b16 %v3542
    %v3893 = vunpack.c.l.b16 %v3543
    %v3894 = vunpack.c.h.b16 %v3543
    %v3895 = vunpack.c.l.b16 %v3544
    %v3896 = vunpack.c.h.b16 %v3544
    %v3897 = vunpack.c.l.b16 %v3545
    %v3898 = vunpack.c.h.b16 %v3545
    %v3899 = vunpack.c.l.b16 %v3546
    %v3900 = vunpack.c.h.b16 %v3546
    %v3901 = vunpack.c.l.b16 %v3547
    %v3902 = vunpack.c.h.b16 %v3547
    %v3903 = vunpack.c.l.b16 %v3548
    %v3904 = vunpack.c.h.b16 %v3548
    %v3905 = vunpack.c.l.b16 %v3549
    %v3906 = vunpack.c.h.b16 %v3549
    %v3907 = vunpack.c.l.b16 %v3550
    %v3908 = vunpack.c.h.b16 %v3550
    %v3909 = vunpack.c.l.b16 %v3551
    %v3910 = vunpack.c.h.b16 %v3551
    %v3911 = vunpack.c.l.b16 %v3552
    %v3912 = vunpack.c.h.b16 %v3552
    %v3913 = vunpack.c.l.b16 %v3553
    %v3914 = vunpack.c.h.b16 %v3553
    %v3915 = vunpack.c.l.b16 %v3554
    %v3916 = vunpack.c.h.b16 %v3554
    %v3917 = vunpack.c.l.b16 %v3555
    %v3918 = vunpack.c.h.b16 %v3555
    %v3919 = vunpack.c.l.b16 %v3556
    %v3920 = vunpack.c.h.b16 %v3556
    %v3921 = vunpack.c.l.b16 %v3557
    %v3922 = vunpack.c.h.b16 %v3557
    %v3923 = vunpack.c.l.b16 %v3558
    %v3924 = vunpack.c.h.b16 %v3558
    %v3925 = vunpack.c.l.b16 %v3559
    %v3926 = vunpack.c.h.b16 %v3559
    %v3927 = vunpack.c.l.b16 %v3560
    %v3928 = vunpack.c.h.b16 %v3560
    %v3929 = vunpack.c.l.b16 %v3561
    %v3930 = vunpack.c.h.b16 %v3561
    %v3931 = vunpack.c.l.b16 %v3562
    %v3932 = vunpack.c.h.b16 %v3562
    %v3933 = vunpack.c.l.b16 %v3563
    %v3934 = vunpack.c.h.b16 %v3563
    %v3935 = vunpack.c.l.b16 %v3564
    %v3936 = vunpack.c.h.b16 %v3564
    %v3937 = vunpack.c.l.b16 %v3565
    %v3938 = vunpack.c.h.b16 %v3565
    %v3939 = vunpack.c.l.b16 %v3566
    %v3940 = vunpack.c.h.b16 %v3566
    %v3941 = vunpack.c.l.b16 %v3567
    %v3942 = vunpack.c.h.b16 %v3567
    %v3943 = vunpack.c.l.b16 %v3568
    %v3944 = vunpack.c.h.b16 %v3568
    %v3945 = vunpack.c.l.b16 %v3569
    %v3946 = vunpack.c.h.b16 %v3569
    %v3947 = vunpack.c.l.b16 %v3570
    %v3948 = vunpack.c.h.b16 %v3570
    %v3949 = vunpack.c.l.b16 %v3571
    %v3950 = vunpack.c.h.b16 %v3571
    %v3951 = vunpack.c.l.b16 %v3572
    %v3952 = vunpack.c.h.b16 %v3572
    %v3953 = vunpack.c.l.b16 %v3573
    %v3954 = vunpack.c.h.b16 %v3573
    %v3955 = vunpack.c.l.b16 %v3574
    %v3956 = vunpack.c.h.b16 %v3574
    %v3957 = vunpack.c.l.b16 %v3575
    %v3958 = vunpack.c.h.b16 %v3575
    %v3959 = vunpack.c.l.b16 %v3576
    %v3960 = vunpack.c.h.b16 %v3576
    %v3961 = vunpack.c.l.b16 %v3577
    %v3962 = vunpack.c.h.b16 %v3577
    %v3963 = vunpack.c.l.b16 %v3578
    %v3964 = vunpack.c.h.b16 %v3578
    %v3965 = vunpack.c.l.b16 %v3579
    %v3966 = vunpack.c.h.b16 %v3579
    %v3967 = vunpack.c.l.b16 %v3580
    %v3968 = vunpack.c.h.b16 %v3580
    %v3969 = vunpack.c.l.b16 %v3581
    %v3970 = vunpack.c.h.b16 %v3581
    %v3971 = vunpack.c.l.b16 %v3582
    %v3972 = vunpack.c.h.b16 %v3582
    %v3973 = vunpack.c.l.b16 %v3583
    %v3974 = vunpack.c.h.b16 %v3583
    %v3975 = vunpack.c.l.b16 %v3584
    %v3976 = vunpack.c.h.b16 %v3584
    %v3977 = vunpack.c.l.b16 %v3585
    %v3978 = vunpack.c.h.b16 %v3585
    %v3979 = vunpack.c.l.b16 %v3586
    %v3980 = vunpack.c.h.b16 %v3586
    %v3981 = vunpack.c.l.b16 %v3587
    %v3982 = vunpack.c.h.b16 %v3587
    %v3983 = vunpack.c.l.b16 %v3588
    %v3984 = vunpack.c.h.b16 %v3588
    %v3985 = vunpack.c.l.b16 %v3589
    %v3986 = vunpack.c.h.b16 %v3589
    %v3987 = vunpack.c.l.b16 %v3590
    %v3988 = vunpack.c.h.b16 %v3590
    %v3989 = vunpack.c.l.b16 %v3591
    %v3990 = vunpack.c.h.b16 %v3591
    %v3991 = vunpack.c.l.b16 %v3592
    %v3992 = vunpack.c.h.b16 %v3592
    %v3993 = vunpack.c.l.b16 %v3593
    %v3994 = vunpack.c.h.b16 %v3593
    %v3995 = vunpack.c.l.b16 %v3594
    %v3996 = vunpack.c.h.b16 %v3594
    %v3997 = vunpack.c.l.b16 %v3595
    %v3998 = vunpack.c.h.b16 %v3595
    %v3999 = vunpack.c.l.b16 %v3596
    %v4000 = vunpack.c.h.b16 %v3596
    %v4001 = vunpack.c.l.b16 %v3597
    %v4002 = vunpack.c.h.b16 %v3597
    %v4003 = vunpack.c.l.b16 %v3598
    %v4004 = vunpack.c.h.b16 %v3598
    %v4005 = vunpack.c.l.b16 %v3599
    %v4006 = vunpack.c.h.b16 %v3599
    %v4007 = vpack.c.b16 %v3755, %v3751
    %v4008 = vpack.c.b16 %v3756, %v3752
    %v4009 = vpack.c.b16 %v3757, %v3753
    %v4010 = vpack.c.b16 %v3758, %v3754
    %v4011 = vpack.c.b16 %v3763, %v3759
    %v4012 = vpack.c.b16 %v3764, %v3760
    %v4013 = vpack.c.b16 %v3765, %v3761
    %v4014 = vpack.c.b16 %v3766, %v3762
    %v4015 = vpack.c.b16 %v3771, %v3767
    %v4016 = vpack.c.b16 %v3772, %v3768
    %v4017 = vpack.c.b16 %v3773, %v3769
    %v4018 = vpack.c.b16 %v3774, %v3770
    %v4019 = vpack.c.b16 %v3779, %v3775
    %v4020 = vpack.c.b16 %v3780, %v3776
    %v4021 = vpack.c.b16 %v3781, %v3777
    %v4022 = vpack.c.b16 %v3782, %v3778
    %v4023 = vpack.c.b16 %v3787, %v3783
    %v4024 = vpack.c.b16 %v3788, %v3784
    %v4025 = vpack.c.b16 %v3789, %v3785
    %v4026 = vpack.c.b16 %v3790, %v3786
    %v4027 = vpack.c.b16 %v3795, %v3791
    %v4028 = vpack.c.b16 %v3796, %v3792
    %v4029 = vpack.c.b16 %v3797, %v3793
    %v4030 = vpack.c.b16 %v3798, %v3794
    %v4031 = vpack.c.b16 %v3803, %v3799
    %v4032 = vpack.c.b16 %v3804, %v3800
    %v4033 = vpack.c.b16 %v3805, %v3801
    %v4034 = vpack.c.b16 %v3806, %v3802
    %v4035 = vpack.c.b16 %v3811, %v3807
    %v4036 = vpack.c.b16 %v3812, %v3808
    %v4037 = vpack.c.b16 %v3813, %v3809
    %v4038 = vpack.c.b16 %v3814, %v3810
    %v4039 = vpack.c.b16 %v3819, %v3815
    %v4040 = vpack.c.b16 %v3820, %v3816
    %v4041 = vpack.c.b16 %v3821, %v3817
    %v4042 = vpack.c.b16 %v3822, %v3818
    %v4043 = vpack.c.b16 %v3827, %v3823
    %v4044 = vpack.c.b16 %v3828, %v3824
    %v4045 = vpack.c.b16 %v3829, %v3825
    %v4046 = vpack.c.b16 %v3830, %v3826
    %v4047 = vpack.c.b16 %v3835, %v3831
    %v4048 = vpack.c.b16 %v3836, %v3832
    %v4049 = vpack.c.b16 %v3837, %v3833
    %v4050 = vpack.c.b16 %v3838, %v3834
    %v4051 = vpack.c.b16 %v3843, %v3839
    %v4052 = vpack.c.b16 %v3844, %v3840
    %v4053 = vpack.c.b16 %v3845, %v3841
    %v4054 = vpack.c.b16 %v3846, %v3842
    %v4055 = vpack.c.b16 %v3851, %v3847
    %v4056 = vpack.c.b16 %v3852, %v3848
    %v4057 = vpack.c.b16 %v3853, %v3849
    %v4058 = vpack.c.b16 %v3854, %v3850
    %v4059 = vpack.c.b16 %v3859, %v3855
    %v4060 = vpack.c.b16 %v3860, %v3856
    %v4061 = vpack.c.b16 %v3861, %v3857
    %v4062 = vpack.c.b16 %v3862, %v3858
    %v4063 = vpack.c.b16 %v3867, %v3863
    %v4064 = vpack.c.b16 %v3868, %v3864
    %v4065 = vpack.c.b16 %v3869, %v3865
    %v4066 = vpack.c.b16 %v3870, %v3866
    %v4067 = vpack.c.b16 %v3875, %v3871
    %v4068 = vpack.c.b16 %v3876, %v3872
    %v4069 = vpack.c.b16 %v3877, %v3873
    %v4070 = vpack.c.b16 %v3878, %v3874
    %v4071 = vpack.c.b16 %v3883, %v3879
    %v4072 = vpack.c.b16 %v3884, %v3880
    %v4073 = vpack.c.b16 %v3885, %v3881
    %v4074 = vpack.c.b16 %v3886, %v3882
    %v4075 = vpack.c.b16 %v3891, %v3887
    %v4076 = vpack.c.b16 %v3892, %v3888
    %v4077 = vpack.c.b16 %v3893, %v3889
    %v4078 = vpack.c.b16 %v3894, %v3890
    %v4079 = vpack.c.b16 %v3899, %v3895
    %v4080 = vpack.c.b16 %v3900, %v3896
    %v4081 = vpack.c.b16 %v3901, %v3897
    %v4082 = vpack.c.b16 %v3902, %v3898
    %v4083 = vpack.c.b16 %v3907, %v3903
    %v4084 = vpack.c.b16 %v3908, %v3904
    %v4085 = vpack.c.b16 %v3909, %v3905
    %v4086 = vpack.c.b16 %v3910, %v3906
    %v4087 = vpack.c.b16 %v3915, %v3911
    %v4088 = vpack.c.b16 %v3916, %v3912
    %v4089 = vpack.c.b16 %v3917, %v3913
    %v4090 = vpack.c.b16 %v3918, %v3914
    %v4091 = vpack.c.b16 %v3923, %v3919
    %v4092 = vpack.c.b16 %v3924, %v3920
    %v4093 = vpack.c.b16 %v3925, %v3921
    %v4094 = vpack.c.b16 %v3926, %v3922
    %v4095 = vpack.c.b16 %v3931, %v3927
    %v4096 = vpack.c.b16 %v3932, %v3928
    %v4097 = vpack.c.b16 %v3933, %v3929
    %v4098 = vpack.c.b16 %v3934, %v3930
    %v4099 = vpack.c.b16 %v3939, %v3935
    %v4100 = vpack.c.b16 %v3940, %v3936
    %v4101 = vpack.c.b16 %v3941, %v3937
    %v4102 = vpack.c.b16 %v3942, %v3938
    %v4103 = vpack.c.b16 %v3947, %v3943
    %v4104 = vpack.c.b16 %v3948, %v3944
    %v4105 = vpack.c.b16 %v3949, %v3945
    %v4106 = vpack.c.b16 %v3950, %v3946
    %v4107 = vpack.c.b16 %v3955, %v3951
    %v4108 = vpack.c.b16 %v3956, %v3952
    %v4109 = vpack.c.b16 %v3957, %v3953
    %v4110 = vpack.c.b16 %v3958, %v3954
    %v4111 = vpack.c.b16 %v3963, %v3959
    %v4112 = vpack.c.b16 %v3964, %v3960
    %v4113 = vpack.c.b16 %v3965, %v3961
    %v4114 = vpack.c.b16 %v3966, %v3962
    %v4115 = vpack.c.b16 %v3971, %v3967
    %v4116 = vpack.c.b16 %v3972, %v3968
    %v4117 = vpack.c.b16 %v3973, %v3969
    %v4118 = vpack.c.b16 %v3974, %v3970
    %v4119 = vpack.c.b16 %v3979, %v3975
    %v4120 = vpack.c.b16 %v3980, %v3976
    %v4121 = vpack.c.b16 %v3981, %v3977
    %v4122 = vpack.c.b16 %v3982, %v3978
    %v4123 = vpack.c.b16 %v3987, %v3983
    %v4124 = vpack.c.b16 %v3988, %v3984
    %v4125 = vpack.c.b16 %v3989, %v3985
    %v4126 = vpack.c.b16 %v3990, %v3986
    %v4127 = vpack.c.b16 %v3995, %v3991
    %v4128 = vpack.c.b16 %v3996, %v3992
    %v4129 = vpack.c.b16 %v3997, %v3993
    %v4130 = vpack.c.b16 %v3998, %v3994
    %v4131 = vpack.c.b16 %v4003, %v3999
    %v4132 = vpack.c.b16 %v4004, %v4000
    %v4133 = vpack.c.b16 %v4005, %v4001
    %v4134 = vpack.c.b16 %v4006, %v4002
    %4263 = vmatprep.subr.bf16.mxu0 %v4008
    %4264 = vmatpush1.bf16.msra.mxu0 %v4007
    %4265 = vmatprep.subr.bf16.mxu0 %v4012
    %4266 = vmatpush1.bf16.msra.mxu0 %v4011
    %4267 = vmatprep.subr.bf16.mxu0 %v4016
    %4268 = vmatpush1.bf16.msra.mxu0 %v4015
    %4269 = vmatprep.subr.bf16.mxu0 %v4020
    %4270 = vmatpush1.bf16.msra.mxu0 %v4019
    %4271 = vmatprep.subr.bf16.mxu0 %v4024
    %4272 = vmatpush1.bf16.msra.mxu0 %v4023
    %4273 = vmatprep.subr.bf16.mxu0 %v4028
    %4274 = vmatpush1.bf16.msra.mxu0 %v4027
    %4275 = vmatprep.subr.bf16.mxu0 %v4032
    %4276 = vmatpush1.bf16.msra.mxu0 %v4031
    %4277 = vmatprep.subr.bf16.mxu0 %v4036
    %4278 = vmatpush1.bf16.msra.mxu0 %v4035
    %4279 = vmatprep.subr.bf16.mxu0 %v4040
    %4280 = vmatpush1.bf16.msra.mxu0 %v4039
    %4281 = vmatprep.subr.bf16.mxu0 %v4044
    %4282 = vmatpush1.bf16.msra.mxu0 %v4043
    %4283 = vmatprep.subr.bf16.mxu0 %v4048
    %4284 = vmatpush1.bf16.msra.mxu0 %v4047
    %4285 = vmatprep.subr.bf16.mxu0 %v4052
    %4286 = vmatpush1.bf16.msra.mxu0 %v4051
    %4287 = vmatprep.subr.bf16.mxu0 %v4056
    %4288 = vmatpush1.bf16.msra.mxu0 %v4055
    %4289 = vmatprep.subr.bf16.mxu0 %v4060
    %4290 = vmatpush1.bf16.msra.mxu0 %v4059
    %4291 = vmatprep.subr.bf16.mxu0 %v4064
    %4292 = vmatpush1.bf16.msra.mxu0 %v4063
    %4293 = vmatprep.subr.bf16.mxu0 %v4068
    %4294 = vmatpush1.bf16.msra.mxu0 %v4067
    %4295 = vmatprep.mubr.bf16.mxu0 %v3440
    %4296 = vmatmul.mubr.bf16.gmra.mrb[0].mxu0 %v3439
    %v4297 = vpop.f32.mrb[0].mxu0
    %v4298 = vadd.f32 %v3606, %v4297
    %v4299 = vpop.f32.mrb[0].mxu0
    %v4300 = vadd.f32 %v3610, %v4299
    %v4301 = vpop.f32.mrb[0].mxu0
    %v4302 = vadd.f32 %v3606, %v4301
    %v4303 = vpop.f32.mrb[0].mxu0
    %v4304 = vadd.f32 %v3610, %v4303
    %4305 = vmatprep.mubr.bf16.mxu0 %v3444
    %4306 = vmatmul.mubr.bf16.gmra.mrb[0].mxu0 %v3443
    %v4307 = vpop.f32.mrb[0].mxu0
    %v4308 = vadd.f32 %v3606, %v4307
    %v4309 = vpop.f32.mrb[0].mxu0
    %v4310 = vadd.f32 %v3610, %v4309
    %v4311 = vpop.f32.mrb[0].mxu0
    %v4312 = vadd.f32 %v3606, %v4311
    %v4313 = vpop.f32.mrb[0].mxu0
    %v4314 = vadd.f32 %v3610, %v4313
    %4315 = vmatprep.mubr.bf16.mxu0 %v3448
    %4316 = vmatmul.mubr.bf16.gmra.mrb[0].mxu0 %v3447
    %v4317 = vpop.f32.mrb[0].mxu0
    %v4318 = vadd.f32 %v3606, %v4317
    %v4319 = vpop.f32.mrb[0].mxu0
    %v4320 = vadd.f32 %v3610, %v4319
    %v4321 = vpop.f32.mrb[0].mxu0
    %v4322 = vadd.f32 %v3606, %v4321
    %v4323 = vpop.f32.mrb[0].mxu0
    %v4324 = vadd.f32 %v3610, %v4323
    %4325 = vmatprep.mubr.bf16.mxu0 %v3452
    %4326 = vmatmul.mubr.bf16.gmra.mrb[0].mxu0 %v3451
    %v4327 = vpop.f32.mrb[0].mxu0
    %v4328 = vadd.f32 %v3606, %v4327
    %v4329 = vpop.f32.mrb[0].mxu0
    %v4330 = vadd.f32 %v3610, %v4329
    %v4331 = vpop.f32.mrb[0].mxu0
    %v4332 = vadd.f32 %v3606, %v4331
    %v4333 = vpop.f32.mrb[0].mxu0
    %v4334 = vadd.f32 %v3610, %v4333
    %4335 = vmatprep.mubr.bf16.mxu0 %v3456
    %4336 = vmatmul.mubr.bf16.gmra.mrb[0].mxu0 %v3455
    %v4337 = vpop.f32.mrb[0].mxu0
    %v4338 = vadd.f32 %v3606, %v4337
    %v4339 = vpop.f32.mrb[0].mxu0
    %v4340 = vadd.f32 %v3610, %v4339
    %v4341 = vpop.f32.mrb[0].mxu0
    %v4342 = vadd.f32 %v3606, %v4341
    %v4343 = vpop.f32.mrb[0].mxu0
    %v4344 = vadd.f32 %v3610, %v4343
    %4345 = vmatprep.mubr.bf16.mxu0 %v3460
    %4346 = vmatmul.mubr.bf16.gmra.mrb[0].mxu0 %v3459
    %v4347 = vpop.f32.mrb[0].mxu0
    %v4348 = vadd.f32 %v3606, %v4347
    %v4349 = vpop.f32.mrb[0].mxu0
    %v4350 = vadd.f32 %v3610, %v4349
    %v4351 = vpop.f32.mrb[0].mxu0
    %v4352 = vadd.f32 %v3606, %v4351
    %v4353 = vpop.f32.mrb[0].mxu0
    %v4354 = vadd.f32 %v3610, %v4353
    %4355 = vmatprep.mubr.bf16.mxu0 %v3464
    %4356 = vmatmul.mubr.bf16.gmra.mrb[0].mxu0 %v3463
    %v4357 = vpop.f32.mrb[0].mxu0
    %v4358 = vadd.f32 %v3606, %v4357
    %v4359 = vpop.f32.mrb[0].mxu0
    %v4360 = vadd.f32 %v3610, %v4359
    %v4361 = vpop.f32.mrb[0].mxu0
    %v4362 = vadd.f32 %v3606, %v4361
    %v4363 = vpop.f32.mrb[0].mxu0
    %v4364 = vadd.f32 %v3610, %v4363
    %4365 = vmatprep.mubr.bf16.mxu0 %v3468
    %4366 = vmatmul.mubr.bf16.gmra.mrb[0].mxu0 %v3467
    %v4367 = vpop.f32.mrb[0].mxu0
    %v4368 = vadd.f32 %v3606, %v4367
    %v4369 = vpop.f32.mrb[0].mxu0
    %v4370 = vadd.f32 %v3610, %v4369
    %v4371 = vpop.f32.mrb[0].mxu0
    %v4372 = vadd.f32 %v3606, %v4371
    %v4373 = vpop.f32.mrb[0].mxu0
    %v4374 = vadd.f32 %v3610, %v4373
    %4375 = vdwg.mxu0
    %4376 = vmatprep.subr.bf16.mxu0 %v4072
    %4377 = vmatpush1.bf16.msra.mxu0 %v4071
    %4378 = vmatprep.subr.bf16.mxu0 %v4076
    %4379 = vmatpush1.bf16.msra.mxu0 %v4075
    %4380 = vmatprep.subr.bf16.mxu0 %v4080
    %4381 = vmatpush1.bf16.msra.mxu0 %v4079
    %4382 = vmatprep.subr.bf16.mxu0 %v4084
    %4383 = vmatpush1.bf16.msra.mxu0 %v4083
    %4384 = vmatprep.subr.bf16.mxu0 %v4088
    %4385 = vmatpush1.bf16.msra.mxu0 %v4087
    %4386 = vmatprep.subr.bf16.mxu0 %v4092
    %4387 = vmatpush1.bf16.msra.mxu0 %v4091
    %4388 = vmatprep.subr.bf16.mxu0 %v4096
    %4389 = vmatpush1.bf16.msra.mxu0 %v4095
    %4390 = vmatprep.subr.bf16.mxu0 %v4100
    %4391 = vmatpush1.bf16.msra.mxu0 %v4099
    %4392 = vmatprep.subr.bf16.mxu0 %v4104
    %4393 = vmatpush1.bf16.msra.mxu0 %v4103
    %4394 = vmatprep.subr.bf16.mxu0 %v4108
    %4395 = vmatpush1.bf16.msra.mxu0 %v4107
    %4396 = vmatprep.subr.bf16.mxu0 %v4112
    %4397 = vmatpush1.bf16.msra.mxu0 %v4111
    %4398 = vmatprep.subr.bf16.mxu0 %v4116
    %4399 = vmatpush1.bf16.msra.mxu0 %v4115
    %4400 = vmatprep.subr.bf16.mxu0 %v4120
    %4401 = vmatpush1.bf16.msra.mxu0 %v4119
    %4402 = vmatprep.subr.bf16.mxu0 %v4124
    %4403 = vmatpush1.bf16.msra.mxu0 %v4123
    %4404 = vmatprep.subr.bf16.mxu0 %v4128
    %4405 = vmatpush1.bf16.msra.mxu0 %v4127
    %4406 = vmatprep.subr.bf16.mxu0 %v4132
    %4407 = vmatpush1.bf16.msra.mxu0 %v4131
    %4408 = vmatprep.mubr.bf16.mxu0 %v3442
    %4409 = vmatmul.mubr.bf16.gmra.mrb[0].mxu0 %v3441
    %v4410 = vpop.f32.mrb[0].mxu0
    %v4411 = vadd.f32 %v4298, %v4410
    %v4412 = vpop.f32.mrb[0].mxu0
    %v4413 = vadd.f32 %v4300, %v4412
    %v4414 = vpop.f32.mrb[0].mxu0
    %v4415 = vadd.f32 %v4302, %v4414
    %v4416 = vpop.f32.mrb[0].mxu0
    %v4417 = vadd.f32 %v4304, %v4416
    %4418 = vmatprep.mubr.bf16.mxu0 %v3446
    %4419 = vmatmul.mubr.bf16.gmra.mrb[0].mxu0 %v3445
    %v4420 = vpop.f32.mrb[0].mxu0
    %v4421 = vadd.f32 %v4308, %v4420
    %v4422 = vpop.f32.mrb[0].mxu0
    %v4423 = vadd.f32 %v4310, %v4422
    %v4424 = vpop.f32.mrb[0].mxu0
    %v4425 = vadd.f32 %v4312, %v4424
    %v4426 = vpop.f32.mrb[0].mxu0
    %v4427 = vadd.f32 %v4314, %v4426
    %4428 = vmatprep.mubr.bf16.mxu0 %v3450
    %4429 = vmatmul.mubr.bf16.gmra.mrb[0].mxu0 %v3449
    %v4430 = vpop.f32.mrb[0].mxu0
    %v4431 = vadd.f32 %v4318, %v4430
    %v4432 = vpop.f32.mrb[0].mxu0
    %v4433 = vadd.f32 %v4320, %v4432
    %v4434 = vpop.f32.mrb[0].mxu0
    %v4435 = vadd.f32 %v4322, %v4434
    %v4436 = vpop.f32.mrb[0].mxu0
    %v4437 = vadd.f32 %v4324, %v4436
    %4438 = vmatprep.mubr.bf16.mxu0 %v3454
    %4439 = vmatmul.mubr.bf16.gmra.mrb[0].mxu0 %v3453
    %v4440 = vpop.f32.mrb[0].mxu0
    %v4441 = vadd.f32 %v4328, %v4440
    %v4442 = vpop.f32.mrb[0].mxu0
    %v4443 = vadd.f32 %v4330, %v4442
    %v4444 = vpop.f32.mrb[0].mxu0
    %v4445 = vadd.f32 %v4332, %v4444
    %v4446 = vpop.f32.mrb[0].mxu0
    %v4447 = vadd.f32 %v4334, %v4446
    %4448 = vmatprep.mubr.bf16.mxu0 %v3458
    %4449 = vmatmul.mubr.bf16.gmra.mrb[0].mxu0 %v3457
    %v4450 = vpop.f32.mrb[0].mxu0
    %v4451 = vadd.f32 %v4338, %v4450
    %v4452 = vpop.f32.mrb[0].mxu0
    %v4453 = vadd.f32 %v4340, %v4452
    %v4454 = vpop.f32.mrb[0].mxu0
    %v4455 = vadd.f32 %v4342, %v4454
    %v4456 = vpop.f32.mrb[0].mxu0
    %v4457 = vadd.f32 %v4344, %v4456
    %4458 = vmatprep.mubr.bf16.mxu0 %v3462
    %4459 = vmatmul.mubr.bf16.gmra.mrb[0].mxu0 %v3461
    %v4460 = vpop.f32.mrb[0].mxu0
    %v4461 = vadd.f32 %v4348, %v4460
    %v4462 = vpop.f32.mrb[0].mxu0
    %v4463 = vadd.f32 %v4350, %v4462
    %v4464 = vpop.f32.mrb[0].mxu0
    %v4465 = vadd.f32 %v4352, %v4464
    %v4466 = vpop.f32.mrb[0].mxu0
    %v4467 = vadd.f32 %v4354, %v4466
    %4468 = vmatprep.mubr.bf16.mxu0 %v3466
    %4469 = vmatmul.mubr.bf16.gmra.mrb[0].mxu0 %v3465
    %v4470 = vpop.f32.mrb[0].mxu0
    %v4471 = vadd.f32 %v4358, %v4470
    %v4472 = vpop.f32.mrb[0].mxu0
    %v4473 = vadd.f32 %v4360, %v4472
    %v4474 = vpop.f32.mrb[0].mxu0
    %v4475 = vadd.f32 %v4362, %v4474
    %v4476 = vpop.f32.mrb[0].mxu0
    %v4477 = vadd.f32 %v4364, %v4476
    %4478 = vmatprep.mubr.bf16.mxu0 %v3470
    %4479 = vmatmul.mubr.bf16.gmra.mrb[0].mxu0 %v3469
    %v4480 = vpop.f32.mrb[0].mxu0
    %v4481 = vadd.f32 %v4368, %v4480
    %v4482 = vpop.f32.mrb[0].mxu0
    %v4483 = vadd.f32 %v4370, %v4482
    %v4484 = vpop.f32.mrb[0].mxu0
    %v4485 = vadd.f32 %v4372, %v4484
    %v4486 = vpop.f32.mrb[0].mxu0
    %v4487 = vadd.f32 %v4374, %v4486
    %4488 = vdwg.mxu0
    %4489 = vmatprep.subr.bf16.mxu0 %v4010
    %4490 = vmatpush1.bf16.msra.mxu0 %v4009
    %4491 = vmatprep.subr.bf16.mxu0 %v4014
    %4492 = vmatpush1.bf16.msra.mxu0 %v4013
    %4493 = vmatprep.subr.bf16.mxu0 %v4018
    %4494 = vmatpush1.bf16.msra.mxu0 %v4017
    %4495 = vmatprep.subr.bf16.mxu0 %v4022
    %4496 = vmatpush1.bf16.msra.mxu0 %v4021
    %4497 = vmatprep.subr.bf16.mxu0 %v4026
    %4498 = vmatpush1.bf16.msra.mxu0 %v4025
    %4499 = vmatprep.subr.bf16.mxu0 %v4030
    %4500 = vmatpush1.bf16.msra.mxu0 %v4029
    %4501 = vmatprep.subr.bf16.mxu0 %v4034
    %4502 = vmatpush1.bf16.msra.mxu0 %v4033
    %4503 = vmatprep.subr.bf16.mxu0 %v4038
    %4504 = vmatpush1.bf16.msra.mxu0 %v4037
    %4505 = vmatprep.subr.bf16.mxu0 %v4042
    %4506 = vmatpush1.bf16.msra.mxu0 %v4041
    %4507 = vmatprep.subr.bf16.mxu0 %v4046
    %4508 = vmatpush1.bf16.msra.mxu0 %v4045
    %4509 = vmatprep.subr.bf16.mxu0 %v4050
    %4510 = vmatpush1.bf16.msra.mxu0 %v4049
    %4511 = vmatprep.subr.bf16.mxu0 %v4054
    %4512 = vmatpush1.bf16.msra.mxu0 %v4053
    %4513 = vmatprep.subr.bf16.mxu0 %v4058
    %4514 = vmatpush1.bf16.msra.mxu0 %v4057
    %4515 = vmatprep.subr.bf16.mxu0 %v4062
    %4516 = vmatpush1.bf16.msra.mxu0 %v4061
    %4517 = vmatprep.subr.bf16.mxu0 %v4066
    %4518 = vmatpush1.bf16.msra.mxu0 %v4065
    %4519 = vmatprep.subr.bf16.mxu0 %v4070
    %4520 = vmatpush1.bf16.msra.mxu0 %v4069
    %4521 = vmatprep.mubr.bf16.mxu0 %v3440
    %4522 = vmatmul.mubr.bf16.gmra.mrb[0].mxu0 %v3439
    %v4523 = vpop.f32.mrb[0].mxu0
    %v4524 = vadd.f32 %v3614, %v4523
    %v4525 = vpop.f32.mrb[0].mxu0
    %v4526 = vadd.f32 %v3618, %v4525
    %v4527 = vpop.f32.mrb[0].mxu0
    %v4528 = vadd.f32 %v3614, %v4527
    %v4529 = vpop.f32.mrb[0].mxu0
    %v4530 = vadd.f32 %v3618, %v4529
    %4531 = vmatprep.mubr.bf16.mxu0 %v3444
    %4532 = vmatmul.mubr.bf16.gmra.mrb[0].mxu0 %v3443
    %v4533 = vpop.f32.mrb[0].mxu0
    %v4534 = vadd.f32 %v3614, %v4533
    %v4535 = vpop.f32.mrb[0].mxu0
    %v4536 = vadd.f32 %v3618, %v4535
    %v4537 = vpop.f32.mrb[0].mxu0
    %v4538 = vadd.f32 %v3614, %v4537
    %v4539 = vpop.f32.mrb[0].mxu0
    %v4540 = vadd.f32 %v3618, %v4539
    %4541 = vmatprep.mubr.bf16.mxu0 %v3448
    %4542 = vmatmul.mubr.bf16.gmra.mrb[0].mxu0 %v3447
    %v4543 = vpop.f32.mrb[0].mxu0
    %v4544 = vadd.f32 %v3614, %v4543
    %v4545 = vpop.f32.mrb[0].mxu0
    %v4546 = vadd.f32 %v3618, %v4545
    %v4547 = vpop.f32.mrb[0].mxu0
    %v4548 = vadd.f32 %v3614, %v4547
    %v4549 = vpop.f32.mrb[0].mxu0
    %v4550 = vadd.f32 %v3618, %v4549
    %4551 = vmatprep.mubr.bf16.mxu0 %v3452
    %4552 = vmatmul.mubr.bf16.gmra.mrb[0].mxu0 %v3451
    %v4553 = vpop.f32.mrb[0].mxu0
    %v4554 = vadd.f32 %v3614, %v4553
    %v4555 = vpop.f32.mrb[0].mxu0
    %v4556 = vadd.f32 %v3618, %v4555
    %v4557 = vpop.f32.mrb[0].mxu0
    %v4558 = vadd.f32 %v3614, %v4557
    %v4559 = vpop.f32.mrb[0].mxu0
    %v4560 = vadd.f32 %v3618, %v4559
    %4561 = vmatprep.mubr.bf16.mxu0 %v3456
    %4562 = vmatmul.mubr.bf16.gmra.mrb[0].mxu0 %v3455
    %v4563 = vpop.f32.mrb[0].mxu0
    %v4564 = vadd.f32 %v3614, %v4563
    %v4565 = vpop.f32.mrb[0].mxu0
    %v4566 = vadd.f32 %v3618, %v4565
    %v4567 = vpop.f32.mrb[0].mxu0
    %v4568 = vadd.f32 %v3614, %v4567
    %v4569 = vpop.f32.mrb[0].mxu0
    %v4570 = vadd.f32 %v3618, %v4569
    %4571 = vmatprep.mubr.bf16.mxu0 %v3460
    %4572 = vmatmul.mubr.bf16.gmra.mrb[0].mxu0 %v3459
    %v4573 = vpop.f32.mrb[0].mxu0
    %v4574 = vadd.f32 %v3614, %v4573
    %v4575 = vpop.f32.mrb[0].mxu0
    %v4576 = vadd.f32 %v3618, %v4575
    %v4577 = vpop.f32.mrb[0].mxu0
    %v4578 = vadd.f32 %v3614, %v4577
    %v4579 = vpop.f32.mrb[0].mxu0
    %v4580 = vadd.f32 %v3618, %v4579
    %4581 = vmatprep.mubr.bf16.mxu0 %v3464
    %4582 = vmatmul.mubr.bf16.gmra.mrb[0].mxu0 %v3463
    %v4583 = vpop.f32.mrb[0].mxu0
    %v4584 = vadd.f32 %v3614, %v4583
    %v4585 = vpop.f32.mrb[0].mxu0
    %v4586 = vadd.f32 %v3618, %v4585
    %v4587 = vpop.f32.mrb[0].mxu0
    %v4588 = vadd.f32 %v3614, %v4587
    %v4589 = vpop.f32.mrb[0].mxu0
    %v4590 = vadd.f32 %v3618, %v4589
    %4591 = vmatprep.mubr.bf16.mxu0 %v3468
    %4592 = vmatmul.mubr.bf16.gmra.mrb[0].mxu0 %v3467
    %v4593 = vpop.f32.mrb[0].mxu0
    %v4594 = vadd.f32 %v3614, %v4593
    %v4595 = vpop.f32.mrb[0].mxu0
    %v4596 = vadd.f32 %v3618, %v4595
    %v4597 = vpop.f32.mrb[0].mxu0
    %v4598 = vadd.f32 %v3614, %v4597
    %v4599 = vpop.f32.mrb[0].mxu0
    %v4600 = vadd.f32 %v3618, %v4599
    %4601 = vdwg.mxu0
    %4602 = vmatprep.subr.bf16.mxu0 %v4074
    %4603 = vmatpush1.bf16.msra.mxu0 %v4073
    %4604 = vmatprep.subr.bf16.mxu0 %v4078
    %4605 = vmatpush1.bf16.msra.mxu0 %v4077
    %4606 = vmatprep.subr.bf16.mxu0 %v4082
    %4607 = vmatpush1.bf16.msra.mxu0 %v4081
    %4608 = vmatprep.subr.bf16.mxu0 %v4086
    %4609 = vmatpush1.bf16.msra.mxu0 %v4085
    %4610 = vmatprep.subr.bf16.mxu0 %v4090
    %4611 = vmatpush1.bf16.msra.mxu0 %v4089
    %4612 = vmatprep.subr.bf16.mxu0 %v4094
    %4613 = vmatpush1.bf16.msra.mxu0 %v4093
    %4614 = vmatprep.subr.bf16.mxu0 %v4098
    %4615 = vmatpush1.bf16.msra.mxu0 %v4097
    %4616 = vmatprep.subr.bf16.mxu0 %v4102
    %4617 = vmatpush1.bf16.msra.mxu0 %v4101
    %4618 = vmatprep.subr.bf16.mxu0 %v4106
    %4619 = vmatpush1.bf16.msra.mxu0 %v4105
    %4620 = vmatprep.subr.bf16.mxu0 %v4110
    %4621 = vmatpush1.bf16.msra.mxu0 %v4109
    %4622 = vmatprep.subr.bf16.mxu0 %v4114
    %4623 = vmatpush1.bf16.msra.mxu0 %v4113
    %4624 = vmatprep.subr.bf16.mxu0 %v4118
    %4625 = vmatpush1.bf16.msra.mxu0 %v4117
    %4626 = vmatprep.subr.bf16.mxu0 %v4122
    %4627 = vmatpush1.bf16.msra.mxu0 %v4121
    %4628 = vmatprep.subr.bf16.mxu0 %v4126
    %4629 = vmatpush1.bf16.msra.mxu0 %v4125
    %4630 = vmatprep.subr.bf16.mxu0 %v4130
    %4631 = vmatpush1.bf16.msra.mxu0 %v4129
    %4632 = vmatprep.subr.bf16.mxu0 %v4134
    %4633 = vmatpush1.bf16.msra.mxu0 %v4133
    %4634 = vmatprep.mubr.bf16.mxu0 %v3442
    %4635 = vmatmul.mubr.bf16.gmra.mrb[0].mxu0 %v3441
    %v4636 = vpop.f32.mrb[0].mxu0
    %v4637 = vadd.f32 %v4524, %v4636
    %v4638 = vpop.f32.mrb[0].mxu0
    %v4639 = vadd.f32 %v4526, %v4638
    %v4640 = vpop.f32.mrb[0].mxu0
    %v4641 = vadd.f32 %v4528, %v4640
    %v4642 = vpop.f32.mrb[0].mxu0
    %v4643 = vadd.f32 %v4530, %v4642
    %4644 = vmatprep.mubr.bf16.mxu0 %v3446
    %4645 = vmatmul.mubr.bf16.gmra.mrb[0].mxu0 %v3445
    %v4646 = vpop.f32.mrb[0].mxu0
    %v4647 = vadd.f32 %v4534, %v4646
    %v4648 = vpop.f32.mrb[0].mxu0
    %v4649 = vadd.f32 %v4536, %v4648
    %v4650 = vpop.f32.mrb[0].mxu0
    %v4651 = vadd.f32 %v4538, %v4650
    %v4652 = vpop.f32.mrb[0].mxu0
    %v4653 = vadd.f32 %v4540, %v4652
    %4654 = vmatprep.mubr.bf16.mxu0 %v3450
    %4655 = vmatmul.mubr.bf16.gmra.mrb[0].mxu0 %v3449
    %v4656 = vpop.f32.mrb[0].mxu0
    %v4657 = vadd.f32 %v4544, %v4656
    %v4658 = vpop.f32.mrb[0].mxu0
    %v4659 = vadd.f32 %v4546, %v4658
    %v4660 = vpop.f32.mrb[0].mxu0
    %v4661 = vadd.f32 %v4548, %v4660
    %v4662 = vpop.f32.mrb[0].mxu0
    %v4663 = vadd.f32 %v4550, %v4662
    %4664 = vmatprep.mubr.bf16.mxu0 %v3454
    %4665 = vmatmul.mubr.bf16.gmra.mrb[0].mxu0 %v3453
    %v4666 = vpop.f32.mrb[0].mxu0
    %v4667 = vadd.f32 %v4554, %v4666
    %v4668 = vpop.f32.mrb[0].mxu0
    %v4669 = vadd.f32 %v4556, %v4668
    %v4670 = vpop.f32.mrb[0].mxu0
    %v4671 = vadd.f32 %v4558, %v4670
    %v4672 = vpop.f32.mrb[0].mxu0
    %v4673 = vadd.f32 %v4560, %v4672
    %4674 = vmatprep.mubr.bf16.mxu0 %v3458
    %4675 = vmatmul.mubr.bf16.gmra.mrb[0].mxu0 %v3457
    %v4676 = vpop.f32.mrb[0].mxu0
    %v4677 = vadd.f32 %v4564, %v4676
    %v4678 = vpop.f32.mrb[0].mxu0
    %v4679 = vadd.f32 %v4566, %v4678
    %v4680 = vpop.f32.mrb[0].mxu0
    %v4681 = vadd.f32 %v4568, %v4680
    %v4682 = vpop.f32.mrb[0].mxu0
    %v4683 = vadd.f32 %v4570, %v4682
    %4684 = vmatprep.mubr.bf16.mxu0 %v3462
    %4685 = vmatmul.mubr.bf16.gmra.mrb[0].mxu0 %v3461
    %v4686 = vpop.f32.mrb[0].mxu0
    %v4687 = vadd.f32 %v4574, %v4686
    %v4688 = vpop.f32.mrb[0].mxu0
    %v4689 = vadd.f32 %v4576, %v4688
    %v4690 = vpop.f32.mrb[0].mxu0
    %v4691 = vadd.f32 %v4578, %v4690
    %v4692 = vpop.f32.mrb[0].mxu0
    %v4693 = vadd.f32 %v4580, %v4692
    %4694 = vmatprep.mubr.bf16.mxu0 %v3466
    %4695 = vmatmul.mubr.bf16.gmra.mrb[0].mxu0 %v3465
    %v4696 = vpop.f32.mrb[0].mxu0
    %v4697 = vadd.f32 %v4584, %v4696
    %v4698 = vpop.f32.mrb[0].mxu0
    %v4699 = vadd.f32 %v4586, %v4698
    %v4700 = vpop.f32.mrb[0].mxu0
    %v4701 = vadd.f32 %v4588, %v4700
    %v4702 = vpop.f32.mrb[0].mxu0
    %v4703 = vadd.f32 %v4590, %v4702
    %4704 = vmatprep.mubr.bf16.mxu0 %v3470
    %4705 = vmatmul.mubr.bf16.gmra.mrb[0].mxu0 %v3469
    %v4706 = vpop.f32.mrb[0].mxu0
    %v4707 = vadd.f32 %v4594, %v4706
    %v4708 = vpop.f32.mrb[0].mxu0
    %v4709 = vadd.f32 %v4596, %v4708
    %v4710 = vpop.f32.mrb[0].mxu0
    %v4711 = vadd.f32 %v4598, %v4710
    %v4712 = vpop.f32.mrb[0].mxu0
    %v4713 = vadd.f32 %v4600, %v4712
    %4714 = vdwg.mxu0
    %vm4715 = vcmp.ge.f32.partialorder %v4411, 0.0
    %vm4716 = vcmp.ge.f32.partialorder %v4413, 0.0
    %vm4717 = vcmp.ge.f32.partialorder %v4637, 0.0
    %vm4718 = vcmp.ge.f32.partialorder %v4639, 0.0
    %vm4719 = vcmp.ge.f32.partialorder %v4415, 0.0
    %vm4720 = vcmp.ge.f32.partialorder %v4417, 0.0
    %vm4721 = vcmp.ge.f32.partialorder %v4641, 0.0
    %vm4722 = vcmp.ge.f32.partialorder %v4643, 0.0
    %vm4723 = vcmp.ge.f32.partialorder %v4421, 0.0
    %vm4724 = vcmp.ge.f32.partialorder %v4423, 0.0
    %vm4725 = vcmp.ge.f32.partialorder %v4647, 0.0
    %vm4726 = vcmp.ge.f32.partialorder %v4649, 0.0
    %vm4727 = vcmp.ge.f32.partialorder %v4425, 0.0
    %vm4728 = vcmp.ge.f32.partialorder %v4427, 0.0
    %vm4729 = vcmp.ge.f32.partialorder %v4651, 0.0
    %vm4730 = vcmp.ge.f32.partialorder %v4653, 0.0
    %vm4731 = vcmp.ge.f32.partialorder %v4431, 0.0
    %vm4732 = vcmp.ge.f32.partialorder %v4433, 0.0
    %vm4733 = vcmp.ge.f32.partialorder %v4657, 0.0
    %vm4734 = vcmp.ge.f32.partialorder %v4659, 0.0
    %vm4735 = vcmp.ge.f32.partialorder %v4435, 0.0
    %vm4736 = vcmp.ge.f32.partialorder %v4437, 0.0
    %vm4737 = vcmp.ge.f32.partialorder %v4661, 0.0
    %vm4738 = vcmp.ge.f32.partialorder %v4663, 0.0
    %vm4739 = vcmp.ge.f32.partialorder %v4441, 0.0
    %vm4740 = vcmp.ge.f32.partialorder %v4443, 0.0
    %vm4741 = vcmp.ge.f32.partialorder %v4667, 0.0
    %vm4742 = vcmp.ge.f32.partialorder %v4669, 0.0
    %vm4743 = vcmp.ge.f32.partialorder %v4445, 0.0
    %vm4744 = vcmp.ge.f32.partialorder %v4447, 0.0
    %vm4745 = vcmp.ge.f32.partialorder %v4671, 0.0
    %vm4746 = vcmp.ge.f32.partialorder %v4673, 0.0
    %vm4747 = vcmp.ge.f32.partialorder %v4451, 0.0
    %vm4748 = vcmp.ge.f32.partialorder %v4453, 0.0
    %vm4749 = vcmp.ge.f32.partialorder %v4677, 0.0
    %vm4750 = vcmp.ge.f32.partialorder %v4679, 0.0
    %vm4751 = vcmp.ge.f32.partialorder %v4455, 0.0
    %vm4752 = vcmp.ge.f32.partialorder %v4457, 0.0
    %vm4753 = vcmp.ge.f32.partialorder %v4681, 0.0
    %vm4754 = vcmp.ge.f32.partialorder %v4683, 0.0
    %vm4755 = vcmp.ge.f32.partialorder %v4461, 0.0
    %vm4756 = vcmp.ge.f32.partialorder %v4463, 0.0
    %vm4757 = vcmp.ge.f32.partialorder %v4687, 0.0
    %vm4758 = vcmp.ge.f32.partialorder %v4689, 0.0
    %vm4759 = vcmp.ge.f32.partialorder %v4465, 0.0
    %vm4760 = vcmp.ge.f32.partialorder %v4467, 0.0
    %vm4761 = vcmp.ge.f32.partialorder %v4691, 0.0
    %vm4762 = vcmp.ge.f32.partialorder %v4693, 0.0
    %vm4763 = vcmp.ge.f32.partialorder %v4471, 0.0
    %vm4764 = vcmp.ge.f32.partialorder %v4473, 0.0
    %vm4765 = vcmp.ge.f32.partialorder %v4697, 0.0
    %vm4766 = vcmp.ge.f32.partialorder %v4699, 0.0
    %vm4767 = vcmp.ge.f32.partialorder %v4475, 0.0
    %vm4768 = vcmp.ge.f32.partialorder %v4477, 0.0
    %vm4769 = vcmp.ge.f32.partialorder %v4701, 0.0
    %vm4770 = vcmp.ge.f32.partialorder %v4703, 0.0
    %vm4771 = vcmp.ge.f32.partialorder %v4481, 0.0
    %vm4772 = vcmp.ge.f32.partialorder %v4483, 0.0
    %vm4773 = vcmp.ge.f32.partialorder %v4707, 0.0
    %vm4774 = vcmp.ge.f32.partialorder %v4709, 0.0
    %vm4775 = vcmp.ge.f32.partialorder %v4485, 0.0
    %vm4776 = vcmp.ge.f32.partialorder %v4487, 0.0
    %vm4777 = vcmp.ge.f32.partialorder %v4711, 0.0
    %vm4778 = vcmp.ge.f32.partialorder %v4713, 0.0
    %v4779 = vmul.f32 %v4411, 1.4142135
    %v4780 = vmul.f32 %v4413, 1.4142135
    %v4781 = vmul.f32 %v4637, 1.4142135
    %v4782 = vmul.f32 %v4639, 1.4142135
    %v4783 = vmul.f32 %v4415, 1.4142135
    %v4784 = vmul.f32 %v4417, 1.4142135
    %v4785 = vmul.f32 %v4641, 1.4142135
    %v4786 = vmul.f32 %v4643, 1.4142135
    %v4787 = vmul.f32 %v4421, 1.4142135
    %v4788 = vmul.f32 %v4423, 1.4142135
    %v4789 = vmul.f32 %v4647, 1.4142135
    %v4790 = vmul.f32 %v4649, 1.4142135
    %v4791 = vmul.f32 %v4425, 1.4142135
    %v4792 = vmul.f32 %v4427, 1.4142135
    %v4793 = vmul.f32 %v4651, 1.4142135
    %v4794 = vmul.f32 %v4653, 1.4142135
    %v4795 = vmul.f32 %v4431, 1.4142135
    %v4796 = vmul.f32 %v4433, 1.4142135
    %v4797 = vmul.f32 %v4657, 1.4142135
    %v4798 = vmul.f32 %v4659, 1.4142135
    %v4799 = vmul.f32 %v4435, 1.4142135
    %v4800 = vmul.f32 %v4437, 1.4142135
    %v4801 = vmul.f32 %v4661, 1.4142135
    %v4802 = vmul.f32 %v4663, 1.4142135
    %v4803 = vmul.f32 %v4441, 1.4142135
    %v4804 = vmul.f32 %v4443, 1.4142135
    %v4805 = vmul.f32 %v4667, 1.4142135
    %v4806 = vmul.f32 %v4669, 1.4142135
    %v4807 = vmul.f32 %v4445, 1.4142135
    %v4808 = vmul.f32 %v4447, 1.4142135
    %v4809 = vmul.f32 %v4671, 1.4142135
    %v4810 = vmul.f32 %v4673, 1.4142135
    %v4811 = vmul.f32 %v4451, 1.4142135
    %v4812 = vmul.f32 %v4453, 1.4142135
    %v4813 = vmul.f32 %v4677, 1.4142135
    %v4814 = vmul.f32 %v4679, 1.4142135
    %v4815 = vmul.f32 %v4455, 1.4142135
    %v4816 = vmul.f32 %v4457, 1.4142135
    %v4817 = vmul.f32 %v4681, 1.4142135
    %v4818 = vmul.f32 %v4683, 1.4142135
    %v4819 = vmul.f32 %v4461, 1.4142135
    %v4820 = vmul.f32 %v4463, 1.4142135
    %v4821 = vmul.f32 %v4687, 1.4142135
    %v4822 = vmul.f32 %v4689, 1.4142135
    %v4823 = vmul.f32 %v4465, 1.4142135
    %v4824 = vmul.f32 %v4467, 1.4142135
    %v4825 = vmul.f32 %v4691, 1.4142135
    %v4826 = vmul.f32 %v4693, 1.4142135
    %v4827 = vmul.f32 %v4471, 1.4142135
    %v4828 = vmul.f32 %v4473, 1.4142135
    %v4829 = vmul.f32 %v4697, 1.4142135
    %v4830 = vmul.f32 %v4699, 1.4142135
    %v4831 = vmul.f32 %v4475, 1.4142135
    %v4832 = vmul.f32 %v4477, 1.4142135
    %v4833 = vmul.f32 %v4701, 1.4142135
    %v4834 = vmul.f32 %v4703, 1.4142135
    %v4835 = vmul.f32 %v4481, 1.4142135
    %v4836 = vmul.f32 %v4483, 1.4142135
    %v4837 = vmul.f32 %v4707, 1.4142135
    %v4838 = vmul.f32 %v4709, 1.4142135
    %v4839 = vmul.f32 %v4485, 1.4142135
    %v4840 = vmul.f32 %v4487, 1.4142135
    %v4841 = vmul.f32 %v4711, 1.4142135
    %v4842 = vmul.f32 %v4713, 1.4142135
    %v4843 = vmul.f32 %v4411, 0.28284273
    %v4844 = vmul.f32 %v4413, 0.28284273
    %v4845 = vmul.f32 %v4637, 0.28284273
    %v4846 = vmul.f32 %v4639, 0.28284273
    %v4847 = vmul.f32 %v4415, 0.28284273
    %v4848 = vmul.f32 %v4417, 0.28284273
    %v4849 = vmul.f32 %v4641, 0.28284273
    %v4850 = vmul.f32 %v4643, 0.28284273
    %v4851 = vmul.f32 %v4421, 0.28284273
    %v4852 = vmul.f32 %v4423, 0.28284273
    %v4853 = vmul.f32 %v4647, 0.28284273
    %v4854 = vmul.f32 %v4649, 0.28284273
    %v4855 = vmul.f32 %v4425, 0.28284273
    %v4856 = vmul.f32 %v4427, 0.28284273
    %v4857 = vmul.f32 %v4651, 0.28284273
    %v4858 = vmul.f32 %v4653, 0.28284273
    %v4859 = vmul.f32 %v4431, 0.28284273
    %v4860 = vmul.f32 %v4433, 0.28284273
    %v4861 = vmul.f32 %v4657, 0.28284273
    %v4862 = vmul.f32 %v4659, 0.28284273
    %v4863 = vmul.f32 %v4435, 0.28284273
    %v4864 = vmul.f32 %v4437, 0.28284273
    %v4865 = vmul.f32 %v4661, 0.28284273
    %v4866 = vmul.f32 %v4663, 0.28284273
    %v4867 = vmul.f32 %v4441, 0.28284273
    %v4868 = vmul.f32 %v4443, 0.28284273
    %v4869 = vmul.f32 %v4667, 0.28284273
    %v4870 = vmul.f32 %v4669, 0.28284273
    %v4871 = vmul.f32 %v4445, 0.28284273
    %v4872 = vmul.f32 %v4447, 0.28284273
    %v4873 = vmul.f32 %v4671, 0.28284273
    %v4874 = vmul.f32 %v4673, 0.28284273
    %v4875 = vmul.f32 %v4451, 0.28284273
    %v4876 = vmul.f32 %v4453, 0.28284273
    %v4877 = vmul.f32 %v4677, 0.28284273
    %v4878 = vmul.f32 %v4679, 0.28284273
    %v4879 = vmul.f32 %v4455, 0.28284273
    %v4880 = vmul.f32 %v4457, 0.28284273
    %v4881 = vmul.f32 %v4681, 0.28284273
    %v4882 = vmul.f32 %v4683, 0.28284273
    %v4883 = vmul.f32 %v4461, 0.28284273
    %v4884 = vmul.f32 %v4463, 0.28284273
    %v4885 = vmul.f32 %v4687, 0.28284273
    %v4886 = vmul.f32 %v4689, 0.28284273
    %v4887 = vmul.f32 %v4465, 0.28284273
    %v4888 = vmul.f32 %v4467, 0.28284273
    %v4889 = vmul.f32 %v4691, 0.28284273
    %v4890 = vmul.f32 %v4693, 0.28284273
    %v4891 = vmul.f32 %v4471, 0.28284273
    %v4892 = vmul.f32 %v4473, 0.28284273
    %v4893 = vmul.f32 %v4697, 0.28284273
    %v4894 = vmul.f32 %v4699, 0.28284273
    %v4895 = vmul.f32 %v4475, 0.28284273
    %v4896 = vmul.f32 %v4477, 0.28284273
    %v4897 = vmul.f32 %v4701, 0.28284273
    %v4898 = vmul.f32 %v4703, 0.28284273
    %v4899 = vmul.f32 %v4481, 0.28284273
    %v4900 = vmul.f32 %v4483, 0.28284273
    %v4901 = vmul.f32 %v4707, 0.28284273
    %v4902 = vmul.f32 %v4709, 0.28284273
    %v4903 = vmul.f32 %v4485, 0.28284273
    %v4904 = vmul.f32 %v4487, 0.28284273
    %v4905 = vmul.f32 %v4711, 0.28284273
    %v4906 = vmul.f32 %v4713, 0.28284273
    %v4907 = vsel %vm4715, %v4779, %v4843
    %v4908 = vsel %vm4716, %v4780, %v4844
    %v4909 = vsel %vm4717, %v4781, %v4845
    %v4910 = vsel %vm4718, %v4782, %v4846
    %v4911 = vsel %vm4719, %v4783, %v4847
    %v4912 = vsel %vm4720, %v4784, %v4848
    %v4913 = vsel %vm4721, %v4785, %v4849
    %v4914 = vsel %vm4722, %v4786, %v4850
    %v4915 = vsel %vm4723, %v4787, %v4851
    %v4916 = vsel %vm4724, %v4788, %v4852
    %v4917 = vsel %vm4725, %v4789, %v4853
    %v4918 = vsel %vm4726, %v4790, %v4854
    %v4919 = vsel %vm4727, %v4791, %v4855
    %v4920 = vsel %vm4728, %v4792, %v4856
    %v4921 = vsel %vm4729, %v4793, %v4857
    %v4922 = vsel %vm4730, %v4794, %v4858
    %v4923 = vsel %vm4731, %v4795, %v4859
    %v4924 = vsel %vm4732, %v4796, %v4860
    %v4925 = vsel %vm4733, %v4797, %v4861
    %v4926 = vsel %vm4734, %v4798, %v4862
    %v4927 = vsel %vm4735, %v4799, %v4863
    %v4928 = vsel %vm4736, %v4800, %v4864
    %v4929 = vsel %vm4737, %v4801, %v4865
    %v4930 = vsel %vm4738, %v4802, %v4866
    %v4931 = vsel %vm4739, %v4803, %v4867
    %v4932 = vsel %vm4740, %v4804, %v4868
    %v4933 = vsel %vm4741, %v4805, %v4869
    %v4934 = vsel %vm4742, %v4806, %v4870
    %v4935 = vsel %vm4743, %v4807, %v4871
    %v4936 = vsel %vm4744, %v4808, %v4872
    %v4937 = vsel %vm4745, %v4809, %v4873
    %v4938 = vsel %vm4746, %v4810, %v4874
    %v4939 = vsel %vm4747, %v4811, %v4875
    %v4940 = vsel %vm4748, %v4812, %v4876
    %v4941 = vsel %vm4749, %v4813, %v4877
    %v4942 = vsel %vm4750, %v4814, %v4878
    %v4943 = vsel %vm4751, %v4815, %v4879
    %v4944 = vsel %vm4752, %v4816, %v4880
    %v4945 = vsel %vm4753, %v4817, %v4881
    %v4946 = vsel %vm4754, %v4818, %v4882
    %v4947 = vsel %vm4755, %v4819, %v4883
    %v4948 = vsel %vm4756, %v4820, %v4884
    %v4949 = vsel %vm4757, %v4821, %v4885
    %v4950 = vsel %vm4758, %v4822, %v4886
    %v4951 = vsel %vm4759, %v4823, %v4887
    %v4952 = vsel %vm4760, %v4824, %v4888
    %v4953 = vsel %vm4761, %v4825, %v4889
    %v4954 = vsel %vm4762, %v4826, %v4890
    %v4955 = vsel %vm4763, %v4827, %v4891
    %v4956 = vsel %vm4764, %v4828, %v4892
    %v4957 = vsel %vm4765, %v4829, %v4893
    %v4958 = vsel %vm4766, %v4830, %v4894
    %v4959 = vsel %vm4767, %v4831, %v4895
    %v4960 = vsel %vm4768, %v4832, %v4896
    %v4961 = vsel %vm4769, %v4833, %v4897
    %v4962 = vsel %vm4770, %v4834, %v4898
    %v4963 = vsel %vm4771, %v4835, %v4899
    %v4964 = vsel %vm4772, %v4836, %v4900
    %v4965 = vsel %vm4773, %v4837, %v4901
    %v4966 = vsel %vm4774, %v4838, %v4902
    %v4967 = vsel %vm4775, %v4839, %v4903
    %v4968 = vsel %vm4776, %v4840, %v4904
    %v4969 = vsel %vm4777, %v4841, %v4905
    %v4970 = vsel %vm4778, %v4842, %v4906
    %v4971 = vpack.c.bf16 %v4911, %v4907
    %v4972 = vpack.c.bf16 %v4912, %v4908
    %v4973 = vpack.c.bf16 %v4913, %v4909
    %v4974 = vpack.c.bf16 %v4914, %v4910
    %v4975 = vpack.c.bf16 %v4919, %v4915
    %v4976 = vpack.c.bf16 %v4920, %v4916
    %v4977 = vpack.c.bf16 %v4921, %v4917
    %v4978 = vpack.c.bf16 %v4922, %v4918
    %v4979 = vpack.c.bf16 %v4927, %v4923
    %v4980 = vpack.c.bf16 %v4928, %v4924
    %v4981 = vpack.c.bf16 %v4929, %v4925
    %v4982 = vpack.c.bf16 %v4930, %v4926
    %v4983 = vpack.c.bf16 %v4935, %v4931
    %v4984 = vpack.c.bf16 %v4936, %v4932
    %v4985 = vpack.c.bf16 %v4937, %v4933
    %v4986 = vpack.c.bf16 %v4938, %v4934
    %v4987 = vpack.c.bf16 %v4943, %v4939
    %v4988 = vpack.c.bf16 %v4944, %v4940
    %v4989 = vpack.c.bf16 %v4945, %v4941
    %v4990 = vpack.c.bf16 %v4946, %v4942
    %v4991 = vpack.c.bf16 %v4951, %v4947
    %v4992 = vpack.c.bf16 %v4952, %v4948
    %v4993 = vpack.c.bf16 %v4953, %v4949
    %v4994 = vpack.c.bf16 %v4954, %v4950
    %v4995 = vpack.c.bf16 %v4959, %v4955
    %v4996 = vpack.c.bf16 %v4960, %v4956
    %v4997 = vpack.c.bf16 %v4961, %v4957
    %v4998 = vpack.c.bf16 %v4962, %v4958
    %v4999 = vpack.c.bf16 %v4967, %v4963
    %v5000 = vpack.c.bf16 %v4968, %v4964
    %v5001 = vpack.c.bf16 %v4969, %v4965
    %v5002 = vpack.c.bf16 %v4970, %v4966
    %s5003 = scalar_lea.vmem [#allocation5], 3072
    %v5004 = vld [vmem:[%s5003] sm:$0xff]
    %v5005 = vld [vmem:[%s5003 + $0x8] sm:$0xff]
    %v5006 = vld [vmem:[%s5003 + $0x10] sm:$0xff]
    %v5007 = vld [vmem:[%s5003 + $0x18] sm:$0xff]
    %v5008 = vld [vmem:[%s5003 + $0x20] sm:$0xff]
    %v5009 = vld [vmem:[%s5003 + $0x28] sm:$0xff]
    %v5010 = vld [vmem:[%s5003 + $0x30] sm:$0xff]
    %v5011 = vld [vmem:[%s5003 + $0x38] sm:$0xff]
    %v5012 = vld [vmem:[%s5003 + $0x40] sm:$0xff]
    %v5013 = vld [vmem:[%s5003 + $0x48] sm:$0xff]
    %v5014 = vld [vmem:[%s5003 + $0x50] sm:$0xff]
    %v5015 = vld [vmem:[%s5003 + $0x58] sm:$0xff]
    %v5016 = vld [vmem:[%s5003 + $0x60] sm:$0xff]
    %v5017 = vld [vmem:[%s5003 + $0x68] sm:$0xff]
    %v5018 = vld [vmem:[%s5003 + $0x70] sm:$0xff]
    %v5019 = vld [vmem:[%s5003 + $0x78] sm:$0xff]
    %v5020 = vld [vmem:[%s5003 + $0x80] sm:$0xff]
    %v5021 = vld [vmem:[%s5003 + $0x88] sm:$0xff]
    %v5022 = vld [vmem:[%s5003 + $0x90] sm:$0xff]
    %v5023 = vld [vmem:[%s5003 + $0x98] sm:$0xff]
    %v5024 = vld [vmem:[%s5003 + $0xa0] sm:$0xff]
    %v5025 = vld [vmem:[%s5003 + $0xa8] sm:$0xff]
    %v5026 = vld [vmem:[%s5003 + $0xb0] sm:$0xff]
    %v5027 = vld [vmem:[%s5003 + $0xb8] sm:$0xff]
    %v5028 = vld [vmem:[%s5003 + $0xc0] sm:$0xff]
    %v5029 = vld [vmem:[%s5003 + $0xc8] sm:$0xff]
    %v5030 = vld [vmem:[%s5003 + $0xd0] sm:$0xff]
    %v5031 = vld [vmem:[%s5003 + $0xd8] sm:$0xff]
    %v5032 = vld [vmem:[%s5003 + $0xe0] sm:$0xff]
    %v5033 = vld [vmem:[%s5003 + $0xe8] sm:$0xff]
    %v5034 = vld [vmem:[%s5003 + $0xf0] sm:$0xff]
    %v5035 = vld [vmem:[%s5003 + $0xf8] sm:$0xff]
    %v5036 = vld [vmem:[%s5003 + $0x100] sm:$0xff]
    %v5037 = vld [vmem:[%s5003 + $0x108] sm:$0xff]
    %v5038 = vld [vmem:[%s5003 + $0x110] sm:$0xff]
    %v5039 = vld [vmem:[%s5003 + $0x118] sm:$0xff]
    %v5040 = vld [vmem:[%s5003 + $0x120] sm:$0xff]
    %v5041 = vld [vmem:[%s5003 + $0x128] sm:$0xff]
    %v5042 = vld [vmem:[%s5003 + $0x130] sm:$0xff]
    %v5043 = vld [vmem:[%s5003 + $0x138] sm:$0xff]
    %v5044 = vld [vmem:[%s5003 + $0x140] sm:$0xff]
    %v5045 = vld [vmem:[%s5003 + $0x148] sm:$0xff]
    %v5046 = vld [vmem:[%s5003 + $0x150] sm:$0xff]
    %v5047 = vld [vmem:[%s5003 + $0x158] sm:$0xff]
    %v5048 = vld [vmem:[%s5003 + $0x160] sm:$0xff]
    %v5049 = vld [vmem:[%s5003 + $0x168] sm:$0xff]
    %v5050 = vld [vmem:[%s5003 + $0x170] sm:$0xff]
    %v5051 = vld [vmem:[%s5003 + $0x178] sm:$0xff]
    %v5052 = vld [vmem:[%s5003 + $0x180] sm:$0xff]
    %v5053 = vld [vmem:[%s5003 + $0x188] sm:$0xff]
    %v5054 = vld [vmem:[%s5003 + $0x190] sm:$0xff]
    %v5055 = vld [vmem:[%s5003 + $0x198] sm:$0xff]
    %v5056 = vld [vmem:[%s5003 + $0x1a0] sm:$0xff]
    %v5057 = vld [vmem:[%s5003 + $0x1a8] sm:$0xff]
    %v5058 = vld [vmem:[%s5003 + $0x1b0] sm:$0xff]
    %v5059 = vld [vmem:[%s5003 + $0x1b8] sm:$0xff]
    %v5060 = vld [vmem:[%s5003 + $0x1c0] sm:$0xff]
    %v5061 = vld [vmem:[%s5003 + $0x1c8] sm:$0xff]
    %v5062 = vld [vmem:[%s5003 + $0x1d0] sm:$0xff]
    %v5063 = vld [vmem:[%s5003 + $0x1d8] sm:$0xff]
    %v5064 = vld [vmem:[%s5003 + $0x1e0] sm:$0xff]
    %v5065 = vld [vmem:[%s5003 + $0x1e8] sm:$0xff]
    %v5066 = vld [vmem:[%s5003 + $0x1f0] sm:$0xff]
    %v5067 = vld [vmem:[%s5003 + $0x1f8] sm:$0xff]
    %v5068 = vld [vmem:[%s5003 + $0x200] sm:$0xff]
    %v5069 = vld [vmem:[%s5003 + $0x208] sm:$0xff]
    %v5070 = vld [vmem:[%s5003 + $0x210] sm:$0xff]
    %v5071 = vld [vmem:[%s5003 + $0x218] sm:$0xff]
    %v5072 = vld [vmem:[%s5003 + $0x220] sm:$0xff]
    %v5073 = vld [vmem:[%s5003 + $0x228] sm:$0xff]
    %v5074 = vld [vmem:[%s5003 + $0x230] sm:$0xff]
    %v5075 = vld [vmem:[%s5003 + $0x238] sm:$0xff]
    %v5076 = vld [vmem:[%s5003 + $0x240] sm:$0xff]
    %v5077 = vld [vmem:[%s5003 + $0x248] sm:$0xff]
    %v5078 = vld [vmem:[%s5003 + $0x250] sm:$0xff]
    %v5079 = vld [vmem:[%s5003 + $0x258] sm:$0xff]
    %v5080 = vld [vmem:[%s5003 + $0x260] sm:$0xff]
    %v5081 = vld [vmem:[%s5003 + $0x268] sm:$0xff]
    %v5082 = vld [vmem:[%s5003 + $0x270] sm:$0xff]
    %v5083 = vld [vmem:[%s5003 + $0x278] sm:$0xff]
    %v5084 = vld [vmem:[%s5003 + $0x280] sm:$0xff]
    %v5085 = vld [vmem:[%s5003 + $0x288] sm:$0xff]
    %v5086 = vld [vmem:[%s5003 + $0x290] sm:$0xff]
    %v5087 = vld [vmem:[%s5003 + $0x298] sm:$0xff]
    %v5088 = vld [vmem:[%s5003 + $0x2a0] sm:$0xff]
    %v5089 = vld [vmem:[%s5003 + $0x2a8] sm:$0xff]
    %v5090 = vld [vmem:[%s5003 + $0x2b0] sm:$0xff]
    %v5091 = vld [vmem:[%s5003 + $0x2b8] sm:$0xff]
    %v5092 = vld [vmem:[%s5003 + $0x2c0] sm:$0xff]
    %v5093 = vld [vmem:[%s5003 + $0x2c8] sm:$0xff]
    %v5094 = vld [vmem:[%s5003 + $0x2d0] sm:$0xff]
    %v5095 = vld [vmem:[%s5003 + $0x2d8] sm:$0xff]
    %v5096 = vld [vmem:[%s5003 + $0x2e0] sm:$0xff]
    %v5097 = vld [vmem:[%s5003 + $0x2e8] sm:$0xff]
    %v5098 = vld [vmem:[%s5003 + $0x2f0] sm:$0xff]
    %v5099 = vld [vmem:[%s5003 + $0x2f8] sm:$0xff]
    %v5100 = vld [vmem:[%s5003 + $0x300] sm:$0xff]
    %v5101 = vld [vmem:[%s5003 + $0x308] sm:$0xff]
    %v5102 = vld [vmem:[%s5003 + $0x310] sm:$0xff]
    %v5103 = vld [vmem:[%s5003 + $0x318] sm:$0xff]
    %v5104 = vld [vmem:[%s5003 + $0x320] sm:$0xff]
    %v5105 = vld [vmem:[%s5003 + $0x328] sm:$0xff]
    %v5106 = vld [vmem:[%s5003 + $0x330] sm:$0xff]
    %v5107 = vld [vmem:[%s5003 + $0x338] sm:$0xff]
    %v5108 = vld [vmem:[%s5003 + $0x340] sm:$0xff]
    %v5109 = vld [vmem:[%s5003 + $0x348] sm:$0xff]
    %v5110 = vld [vmem:[%s5003 + $0x350] sm:$0xff]
    %v5111 = vld [vmem:[%s5003 + $0x358] sm:$0xff]
    %v5112 = vld [vmem:[%s5003 + $0x360] sm:$0xff]
    %v5113 = vld [vmem:[%s5003 + $0x368] sm:$0xff]
    %v5114 = vld [vmem:[%s5003 + $0x370] sm:$0xff]
    %v5115 = vld [vmem:[%s5003 + $0x378] sm:$0xff]
    %v5116 = vld [vmem:[%s5003 + $0x380] sm:$0xff]
    %v5117 = vld [vmem:[%s5003 + $0x388] sm:$0xff]
    %v5118 = vld [vmem:[%s5003 + $0x390] sm:$0xff]
    %v5119 = vld [vmem:[%s5003 + $0x398] sm:$0xff]
    %v5120 = vld [vmem:[%s5003 + $0x3a0] sm:$0xff]
    %v5121 = vld [vmem:[%s5003 + $0x3a8] sm:$0xff]
    %v5122 = vld [vmem:[%s5003 + $0x3b0] sm:$0xff]
    %v5123 = vld [vmem:[%s5003 + $0x3b8] sm:$0xff]
    %v5124 = vld [vmem:[%s5003 + $0x3c0] sm:$0xff]
    %v5125 = vld [vmem:[%s5003 + $0x3c8] sm:$0xff]
    %v5126 = vld [vmem:[%s5003 + $0x3d0] sm:$0xff]
    %v5127 = vld [vmem:[%s5003 + $0x3d8] sm:$0xff]
    %v5128 = vld [vmem:[%s5003 + $0x3e0] sm:$0xff]
    %v5129 = vld [vmem:[%s5003 + $0x3e8] sm:$0xff]
    %v5130 = vld [vmem:[%s5003 + $0x3f0] sm:$0xff]
    %v5131 = vld [vmem:[%s5003 + $0x3f8] sm:$0xff]
    %s5132 = scalar_lea.vmem [#allocation7], 12
    %v5133 = vld [vmem:[%s5132] sm:$0xf]
    %v5135 = vlaneseq
    %v5136 = vshrl.u32 %v5135, 7
    %v5137 = vsub.s32 0, %v5136
    %v5138 = vrot.slane %v5133, %v5137
    %v5139 = vlaneseq
    %v5140 = vshrl.u32 %v5139, 7
    %v5141 = vsub.s32 1, %v5140
    %v5142 = vrot.slane %v5133, %v5141
    %v5143 = vlaneseq
    %v5144 = vshrl.u32 %v5143, 7
    %v5145 = vsub.s32 2, %v5144
    %v5146 = vrot.slane %v5133, %v5145
    %v5147 = vlaneseq
    %v5148 = vshrl.u32 %v5147, 7
    %v5149 = vsub.s32 3, %v5148
    %v5150 = vrot.slane %v5133, %v5149
    %v5283 = vunpack.c.l.b16 %v5004
    %v5284 = vunpack.c.h.b16 %v5004
    %v5285 = vunpack.c.l.b16 %v5005
    %v5286 = vunpack.c.h.b16 %v5005
    %v5287 = vunpack.c.l.b16 %v5006
    %v5288 = vunpack.c.h.b16 %v5006
    %v5289 = vunpack.c.l.b16 %v5007
    %v5290 = vunpack.c.h.b16 %v5007
    %v5291 = vunpack.c.l.b16 %v5008
    %v5292 = vunpack.c.h.b16 %v5008
    %v5293 = vunpack.c.l.b16 %v5009
    %v5294 = vunpack.c.h.b16 %v5009
    %v5295 = vunpack.c.l.b16 %v5010
    %v5296 = vunpack.c.h.b16 %v5010
    %v5297 = vunpack.c.l.b16 %v5011
    %v5298 = vunpack.c.h.b16 %v5011
    %v5299 = vunpack.c.l.b16 %v5012
    %v5300 = vunpack.c.h.b16 %v5012
    %v5301 = vunpack.c.l.b16 %v5013
    %v5302 = vunpack.c.h.b16 %v5013
    %v5303 = vunpack.c.l.b16 %v5014
    %v5304 = vunpack.c.h.b16 %v5014
    %v5305 = vunpack.c.l.b16 %v5015
    %v5306 = vunpack.c.h.b16 %v5015
    %v5307 = vunpack.c.l.b16 %v5016
    %v5308 = vunpack.c.h.b16 %v5016
    %v5309 = vunpack.c.l.b16 %v5017
    %v5310 = vunpack.c.h.b16 %v5017
    %v5311 = vunpack.c.l.b16 %v5018
    %v5312 = vunpack.c.h.b16 %v5018
    %v5313 = vunpack.c.l.b16 %v5019
    %v5314 = vunpack.c.h.b16 %v5019
    %v5315 = vunpack.c.l.b16 %v5020
    %v5316 = vunpack.c.h.b16 %v5020
    %v5317 = vunpack.c.l.b16 %v5021
    %v5318 = vunpack.c.h.b16 %v5021
    %v5319 = vunpack.c.l.b16 %v5022
    %v5320 = vunpack.c.h.b16 %v5022
    %v5321 = vunpack.c.l.b16 %v5023
    %v5322 = vunpack.c.h.b16 %v5023
    %v5323 = vunpack.c.l.b16 %v5024
    %v5324 = vunpack.c.h.b16 %v5024
    %v5325 = vunpack.c.l.b16 %v5025
    %v5326 = vunpack.c.h.b16 %v5025
    %v5327 = vunpack.c.l.b16 %v5026
    %v5328 = vunpack.c.h.b16 %v5026
    %v5329 = vunpack.c.l.b16 %v5027
    %v5330 = vunpack.c.h.b16 %v5027
    %v5331 = vunpack.c.l.b16 %v5028
    %v5332 = vunpack.c.h.b16 %v5028
    %v5333 = vunpack.c.l.b16 %v5029
    %v5334 = vunpack.c.h.b16 %v5029
    %v5335 = vunpack.c.l.b16 %v5030
    %v5336 = vunpack.c.h.b16 %v5030
    %v5337 = vunpack.c.l.b16 %v5031
    %v5338 = vunpack.c.h.b16 %v5031
    %v5339 = vunpack.c.l.b16 %v5032
    %v5340 = vunpack.c.h.b16 %v5032
    %v5341 = vunpack.c.l.b16 %v5033
    %v5342 = vunpack.c.h.b16 %v5033
    %v5343 = vunpack.c.l.b16 %v5034
    %v5344 = vunpack.c.h.b16 %v5034
    %v5345 = vunpack.c.l.b16 %v5035
    %v5346 = vunpack.c.h.b16 %v5035
    %v5347 = vunpack.c.l.b16 %v5036
    %v5348 = vunpack.c.h.b16 %v5036
    %v5349 = vunpack.c.l.b16 %v5037
    %v5350 = vunpack.c.h.b16 %v5037
    %v5351 = vunpack.c.l.b16 %v5038
    %v5352 = vunpack.c.h.b16 %v5038
    %v5353 = vunpack.c.l.b16 %v5039
    %v5354 = vunpack.c.h.b16 %v5039
    %v5355 = vunpack.c.l.b16 %v5040
    %v5356 = vunpack.c.h.b16 %v5040
    %v5357 = vunpack.c.l.b16 %v5041
    %v5358 = vunpack.c.h.b16 %v5041
    %v5359 = vunpack.c.l.b16 %v5042
    %v5360 = vunpack.c.h.b16 %v5042
    %v5361 = vunpack.c.l.b16 %v5043
    %v5362 = vunpack.c.h.b16 %v5043
    %v5363 = vunpack.c.l.b16 %v5044
    %v5364 = vunpack.c.h.b16 %v5044
    %v5365 = vunpack.c.l.b16 %v5045
    %v5366 = vunpack.c.h.b16 %v5045
    %v5367 = vunpack.c.l.b16 %v5046
    %v5368 = vunpack.c.h.b16 %v5046
    %v5369 = vunpack.c.l.b16 %v5047
    %v5370 = vunpack.c.h.b16 %v5047
    %v5371 = vunpack.c.l.b16 %v5048
    %v5372 = vunpack.c.h.b16 %v5048
    %v5373 = vunpack.c.l.b16 %v5049
    %v5374 = vunpack.c.h.b16 %v5049
    %v5375 = vunpack.c.l.b16 %v5050
    %v5376 = vunpack.c.h.b16 %v5050
    %v5377 = vunpack.c.l.b16 %v5051
    %v5378 = vunpack.c.h.b16 %v5051
    %v5379 = vunpack.c.l.b16 %v5052
    %v5380 = vunpack.c.h.b16 %v5052
    %v5381 = vunpack.c.l.b16 %v5053
    %v5382 = vunpack.c.h.b16 %v5053
    %v5383 = vunpack.c.l.b16 %v5054
    %v5384 = vunpack.c.h.b16 %v5054
    %v5385 = vunpack.c.l.b16 %v5055
    %v5386 = vunpack.c.h.b16 %v5055
    %v5387 = vunpack.c.l.b16 %v5056
    %v5388 = vunpack.c.h.b16 %v5056
    %v5389 = vunpack.c.l.b16 %v5057
    %v5390 = vunpack.c.h.b16 %v5057
    %v5391 = vunpack.c.l.b16 %v5058
    %v5392 = vunpack.c.h.b16 %v5058
    %v5393 = vunpack.c.l.b16 %v5059
    %v5394 = vunpack.c.h.b16 %v5059
    %v5395 = vunpack.c.l.b16 %v5060
    %v5396 = vunpack.c.h.b16 %v5060
    %v5397 = vunpack.c.l.b16 %v5061
    %v5398 = vunpack.c.h.b16 %v5061
    %v5399 = vunpack.c.l.b16 %v5062
    %v5400 = vunpack.c.h.b16 %v5062
    %v5401 = vunpack.c.l.b16 %v5063
    %v5402 = vunpack.c.h.b16 %v5063
    %v5403 = vunpack.c.l.b16 %v5064
    %v5404 = vunpack.c.h.b16 %v5064
    %v5405 = vunpack.c.l.b16 %v5065
    %v5406 = vunpack.c.h.b16 %v5065
    %v5407 = vunpack.c.l.b16 %v5066
    %v5408 = vunpack.c.h.b16 %v5066
    %v5409 = vunpack.c.l.b16 %v5067
    %v5410 = vunpack.c.h.b16 %v5067
    %v5411 = vunpack.c.l.b16 %v5068
    %v5412 = vunpack.c.h.b16 %v5068
    %v5413 = vunpack.c.l.b16 %v5069
    %v5414 = vunpack.c.h.b16 %v5069
    %v5415 = vunpack.c.l.b16 %v5070
    %v5416 = vunpack.c.h.b16 %v5070
    %v5417 = vunpack.c.l.b16 %v5071
    %v5418 = vunpack.c.h.b16 %v5071
    %v5419 = vunpack.c.l.b16 %v5072
    %v5420 = vunpack.c.h.b16 %v5072
    %v5421 = vunpack.c.l.b16 %v5073
    %v5422 = vunpack.c.h.b16 %v5073
    %v5423 = vunpack.c.l.b16 %v5074
    %v5424 = vunpack.c.h.b16 %v5074
    %v5425 = vunpack.c.l.b16 %v5075
    %v5426 = vunpack.c.h.b16 %v5075
    %v5427 = vunpack.c.l.b16 %v5076
    %v5428 = vunpack.c.h.b16 %v5076
    %v5429 = vunpack.c.l.b16 %v5077
    %v5430 = vunpack.c.h.b16 %v5077
    %v5431 = vunpack.c.l.b16 %v5078
    %v5432 = vunpack.c.h.b16 %v5078
    %v5433 = vunpack.c.l.b16 %v5079
    %v5434 = vunpack.c.h.b16 %v5079
    %v5435 = vunpack.c.l.b16 %v5080
    %v5436 = vunpack.c.h.b16 %v5080
    %v5437 = vunpack.c.l.b16 %v5081
    %v5438 = vunpack.c.h.b16 %v5081
    %v5439 = vunpack.c.l.b16 %v5082
    %v5440 = vunpack.c.h.b16 %v5082
    %v5441 = vunpack.c.l.b16 %v5083
    %v5442 = vunpack.c.h.b16 %v5083
    %v5443 = vunpack.c.l.b16 %v5084
    %v5444 = vunpack.c.h.b16 %v5084
    %v5445 = vunpack.c.l.b16 %v5085
    %v5446 = vunpack.c.h.b16 %v5085
    %v5447 = vunpack.c.l.b16 %v5086
    %v5448 = vunpack.c.h.b16 %v5086
    %v5449 = vunpack.c.l.b16 %v5087
    %v5450 = vunpack.c.h.b16 %v5087
    %v5451 = vunpack.c.l.b16 %v5088
    %v5452 = vunpack.c.h.b16 %v5088
    %v5453 = vunpack.c.l.b16 %v5089
    %v5454 = vunpack.c.h.b16 %v5089
    %v5455 = vunpack.c.l.b16 %v5090
    %v5456 = vunpack.c.h.b16 %v5090
    %v5457 = vunpack.c.l.b16 %v5091
    %v5458 = vunpack.c.h.b16 %v5091
    %v5459 = vunpack.c.l.b16 %v5092
    %v5460 = vunpack.c.h.b16 %v5092
    %v5461 = vunpack.c.l.b16 %v5093
    %v5462 = vunpack.c.h.b16 %v5093
    %v5463 = vunpack.c.l.b16 %v5094
    %v5464 = vunpack.c.h.b16 %v5094
    %v5465 = vunpack.c.l.b16 %v5095
    %v5466 = vunpack.c.h.b16 %v5095
    %v5467 = vunpack.c.l.b16 %v5096
    %v5468 = vunpack.c.h.b16 %v5096
    %v5469 = vunpack.c.l.b16 %v5097
    %v5470 = vunpack.c.h.b16 %v5097
    %v5471 = vunpack.c.l.b16 %v5098
    %v5472 = vunpack.c.h.b16 %v5098
    %v5473 = vunpack.c.l.b16 %v5099
    %v5474 = vunpack.c.h.b16 %v5099
    %v5475 = vunpack.c.l.b16 %v5100
    %v5476 = vunpack.c.h.b16 %v5100
    %v5477 = vunpack.c.l.b16 %v5101
    %v5478 = vunpack.c.h.b16 %v5101
    %v5479 = vunpack.c.l.b16 %v5102
    %v5480 = vunpack.c.h.b16 %v5102
    %v5481 = vunpack.c.l.b16 %v5103
    %v5482 = vunpack.c.h.b16 %v5103
    %v5483 = vunpack.c.l.b16 %v5104
    %v5484 = vunpack.c.h.b16 %v5104
    %v5485 = vunpack.c.l.b16 %v5105
    %v5486 = vunpack.c.h.b16 %v5105
    %v5487 = vunpack.c.l.b16 %v5106
    %v5488 = vunpack.c.h.b16 %v5106
    %v5489 = vunpack.c.l.b16 %v5107
    %v5490 = vunpack.c.h.b16 %v5107
    %v5491 = vunpack.c.l.b16 %v5108
    %v5492 = vunpack.c.h.b16 %v5108
    %v5493 = vunpack.c.l.b16 %v5109
    %v5494 = vunpack.c.h.b16 %v5109
    %v5495 = vunpack.c.l.b16 %v5110
    %v5496 = vunpack.c.h.b16 %v5110
    %v5497 = vunpack.c.l.b16 %v5111
    %v5498 = vunpack.c.h.b16 %v5111
    %v5499 = vunpack.c.l.b16 %v5112
    %v5500 = vunpack.c.h.b16 %v5112
    %v5501 = vunpack.c.l.b16 %v5113
    %v5502 = vunpack.c.h.b16 %v5113
    %v5503 = vunpack.c.l.b16 %v5114
    %v5504 = vunpack.c.h.b16 %v5114
    %v5505 = vunpack.c.l.b16 %v5115
    %v5506 = vunpack.c.h.b16 %v5115
    %v5507 = vunpack.c.l.b16 %v5116
    %v5508 = vunpack.c.h.b16 %v5116
    %v5509 = vunpack.c.l.b16 %v5117
    %v5510 = vunpack.c.h.b16 %v5117
    %v5511 = vunpack.c.l.b16 %v5118
    %v5512 = vunpack.c.h.b16 %v5118
    %v5513 = vunpack.c.l.b16 %v5119
    %v5514 = vunpack.c.h.b16 %v5119
    %v5515 = vunpack.c.l.b16 %v5120
    %v5516 = vunpack.c.h.b16 %v5120
    %v5517 = vunpack.c.l.b16 %v5121
    %v5518 = vunpack.c.h.b16 %v5121
    %v5519 = vunpack.c.l.b16 %v5122
    %v5520 = vunpack.c.h.b16 %v5122
    %v5521 = vunpack.c.l.b16 %v5123
    %v5522 = vunpack.c.h.b16 %v5123
    %v5523 = vunpack.c.l.b16 %v5124
    %v5524 = vunpack.c.h.b16 %v5124
    %v5525 = vunpack.c.l.b16 %v5125
    %v5526 = vunpack.c.h.b16 %v5125
    %v5527 = vunpack.c.l.b16 %v5126
    %v5528 = vunpack.c.h.b16 %v5126
    %v5529 = vunpack.c.l.b16 %v5127
    %v5530 = vunpack.c.h.b16 %v5127
    %v5531 = vunpack.c.l.b16 %v5128
    %v5532 = vunpack.c.h.b16 %v5128
    %v5533 = vunpack.c.l.b16 %v5129
    %v5534 = vunpack.c.h.b16 %v5129
    %v5535 = vunpack.c.l.b16 %v5130
    %v5536 = vunpack.c.h.b16 %v5130
    %v5537 = vunpack.c.l.b16 %v5131
    %v5538 = vunpack.c.h.b16 %v5131
    %v5539 = vpack.c.b16 %v5287, %v5283
    %v5540 = vpack.c.b16 %v5288, %v5284
    %v5541 = vpack.c.b16 %v5289, %v5285
    %v5542 = vpack.c.b16 %v5290, %v5286
    %v5543 = vpack.c.b16 %v5295, %v5291
    %v5544 = vpack.c.b16 %v5296, %v5292
    %v5545 = vpack.c.b16 %v5297, %v5293
    %v5546 = vpack.c.b16 %v5298, %v5294
    %v5547 = vpack.c.b16 %v5303, %v5299
    %v5548 = vpack.c.b16 %v5304, %v5300
    %v5549 = vpack.c.b16 %v5305, %v5301
    %v5550 = vpack.c.b16 %v5306, %v5302
    %v5551 = vpack.c.b16 %v5311, %v5307
    %v5552 = vpack.c.b16 %v5312, %v5308
    %v5553 = vpack.c.b16 %v5313, %v5309
    %v5554 = vpack.c.b16 %v5314, %v5310
    %v5555 = vpack.c.b16 %v5319, %v5315
    %v5556 = vpack.c.b16 %v5320, %v5316
    %v5557 = vpack.c.b16 %v5321, %v5317
    %v5558 = vpack.c.b16 %v5322, %v5318
    %v5559 = vpack.c.b16 %v5327, %v5323
    %v5560 = vpack.c.b16 %v5328, %v5324
    %v5561 = vpack.c.b16 %v5329, %v5325
    %v5562 = vpack.c.b16 %v5330, %v5326
    %v5563 = vpack.c.b16 %v5335, %v5331
    %v5564 = vpack.c.b16 %v5336, %v5332
    %v5565 = vpack.c.b16 %v5337, %v5333
    %v5566 = vpack.c.b16 %v5338, %v5334
    %v5567 = vpack.c.b16 %v5343, %v5339
    %v5568 = vpack.c.b16 %v5344, %v5340
    %v5569 = vpack.c.b16 %v5345, %v5341
    %v5570 = vpack.c.b16 %v5346, %v5342
    %v5571 = vpack.c.b16 %v5351, %v5347
    %v5572 = vpack.c.b16 %v5352, %v5348
    %v5573 = vpack.c.b16 %v5353, %v5349
    %v5574 = vpack.c.b16 %v5354, %v5350
    %v5575 = vpack.c.b16 %v5359, %v5355
    %v5576 = vpack.c.b16 %v5360, %v5356
    %v5577 = vpack.c.b16 %v5361, %v5357
    %v5578 = vpack.c.b16 %v5362, %v5358
    %v5579 = vpack.c.b16 %v5367, %v5363
    %v5580 = vpack.c.b16 %v5368, %v5364
    %v5581 = vpack.c.b16 %v5369, %v5365
    %v5582 = vpack.c.b16 %v5370, %v5366
    %v5583 = vpack.c.b16 %v5375, %v5371
    %v5584 = vpack.c.b16 %v5376, %v5372
    %v5585 = vpack.c.b16 %v5377, %v5373
    %v5586 = vpack.c.b16 %v5378, %v5374
    %v5587 = vpack.c.b16 %v5383, %v5379
    %v5588 = vpack.c.b16 %v5384, %v5380
    %v5589 = vpack.c.b16 %v5385, %v5381
    %v5590 = vpack.c.b16 %v5386, %v5382
    %v5591 = vpack.c.b16 %v5391, %v5387
    %v5592 = vpack.c.b16 %v5392, %v5388
    %v5593 = vpack.c.b16 %v5393, %v5389
    %v5594 = vpack.c.b16 %v5394, %v5390
    %v5595 = vpack.c.b16 %v5399, %v5395
    %v5596 = vpack.c.b16 %v5400, %v5396
    %v5597 = vpack.c.b16 %v5401, %v5397
    %v5598 = vpack.c.b16 %v5402, %v5398
    %v5599 = vpack.c.b16 %v5407, %v5403
    %v5600 = vpack.c.b16 %v5408, %v5404
    %v5601 = vpack.c.b16 %v5409, %v5405
    %v5602 = vpack.c.b16 %v5410, %v5406
    %v5603 = vpack.c.b16 %v5415, %v5411
    %v5604 = vpack.c.b16 %v5416, %v5412
    %v5605 = vpack.c.b16 %v5417, %v5413
    %v5606 = vpack.c.b16 %v5418, %v5414
    %v5607 = vpack.c.b16 %v5423, %v5419
    %v5608 = vpack.c.b16 %v5424, %v5420
    %v5609 = vpack.c.b16 %v5425, %v5421
    %v5610 = vpack.c.b16 %v5426, %v5422
    %v5611 = vpack.c.b16 %v5431, %v5427
    %v5612 = vpack.c.b16 %v5432, %v5428
    %v5613 = vpack.c.b16 %v5433, %v5429
    %v5614 = vpack.c.b16 %v5434, %v5430
    %v5615 = vpack.c.b16 %v5439, %v5435
    %v5616 = vpack.c.b16 %v5440, %v5436
    %v5617 = vpack.c.b16 %v5441, %v5437
    %v5618 = vpack.c.b16 %v5442, %v5438
    %v5619 = vpack.c.b16 %v5447, %v5443
    %v5620 = vpack.c.b16 %v5448, %v5444
    %v5621 = vpack.c.b16 %v5449, %v5445
    %v5622 = vpack.c.b16 %v5450, %v5446
    %v5623 = vpack.c.b16 %v5455, %v5451
    %v5624 = vpack.c.b16 %v5456, %v5452
    %v5625 = vpack.c.b16 %v5457, %v5453
    %v5626 = vpack.c.b16 %v5458, %v5454
    %v5627 = vpack.c.b16 %v5463, %v5459
    %v5628 = vpack.c.b16 %v5464, %v5460
    %v5629 = vpack.c.b16 %v5465, %v5461
    %v5630 = vpack.c.b16 %v5466, %v5462
    %v5631 = vpack.c.b16 %v5471, %v5467
    %v5632 = vpack.c.b16 %v5472, %v5468
    %v5633 = vpack.c.b16 %v5473, %v5469
    %v5634 = vpack.c.b16 %v5474, %v5470
    %v5635 = vpack.c.b16 %v5479, %v5475
    %v5636 = vpack.c.b16 %v5480, %v5476
    %v5637 = vpack.c.b16 %v5481, %v5477
    %v5638 = vpack.c.b16 %v5482, %v5478
    %v5639 = vpack.c.b16 %v5487, %v5483
    %v5640 = vpack.c.b16 %v5488, %v5484
    %v5641 = vpack.c.b16 %v5489, %v5485
    %v5642 = vpack.c.b16 %v5490, %v5486
    %v5643 = vpack.c.b16 %v5495, %v5491
    %v5644 = vpack.c.b16 %v5496, %v5492
    %v5645 = vpack.c.b16 %v5497, %v5493
    %v5646 = vpack.c.b16 %v5498, %v5494
    %v5647 = vpack.c.b16 %v5503, %v5499
    %v5648 = vpack.c.b16 %v5504, %v5500
    %v5649 = vpack.c.b16 %v5505, %v5501
    %v5650 = vpack.c.b16 %v5506, %v5502
    %v5651 = vpack.c.b16 %v5511, %v5507
    %v5652 = vpack.c.b16 %v5512, %v5508
    %v5653 = vpack.c.b16 %v5513, %v5509
    %v5654 = vpack.c.b16 %v5514, %v5510
    %v5655 = vpack.c.b16 %v5519, %v5515
    %v5656 = vpack.c.b16 %v5520, %v5516
    %v5657 = vpack.c.b16 %v5521, %v5517
    %v5658 = vpack.c.b16 %v5522, %v5518
    %v5659 = vpack.c.b16 %v5527, %v5523
    %v5660 = vpack.c.b16 %v5528, %v5524
    %v5661 = vpack.c.b16 %v5529, %v5525
    %v5662 = vpack.c.b16 %v5530, %v5526
    %v5663 = vpack.c.b16 %v5535, %v5531
    %v5664 = vpack.c.b16 %v5536, %v5532
    %v5665 = vpack.c.b16 %v5537, %v5533
    %v5666 = vpack.c.b16 %v5538, %v5534
    %5795 = vmatprep.subr.bf16.mxu0 %v5540
    %5796 = vmatpush1.bf16.msra.mxu0 %v5539
    %5797 = vmatprep.subr.bf16.mxu0 %v5544
    %5798 = vmatpush1.bf16.msra.mxu0 %v5543
    %5799 = vmatprep.subr.bf16.mxu0 %v5548
    %5800 = vmatpush1.bf16.msra.mxu0 %v5547
    %5801 = vmatprep.subr.bf16.mxu0 %v5552
    %5802 = vmatpush1.bf16.msra.mxu0 %v5551
    %5803 = vmatprep.subr.bf16.mxu0 %v5556
    %5804 = vmatpush1.bf16.msra.mxu0 %v5555
    %5805 = vmatprep.subr.bf16.mxu0 %v5560
    %5806 = vmatpush1.bf16.msra.mxu0 %v5559
    %5807 = vmatprep.subr.bf16.mxu0 %v5564
    %5808 = vmatpush1.bf16.msra.mxu0 %v5563
    %5809 = vmatprep.subr.bf16.mxu0 %v5568
    %5810 = vmatpush1.bf16.msra.mxu0 %v5567
    %5811 = vmatprep.subr.bf16.mxu0 %v5572
    %5812 = vmatpush1.bf16.msra.mxu0 %v5571
    %5813 = vmatprep.subr.bf16.mxu0 %v5576
    %5814 = vmatpush1.bf16.msra.mxu0 %v5575
    %5815 = vmatprep.subr.bf16.mxu0 %v5580
    %5816 = vmatpush1.bf16.msra.mxu0 %v5579
    %5817 = vmatprep.subr.bf16.mxu0 %v5584
    %5818 = vmatpush1.bf16.msra.mxu0 %v5583
    %5819 = vmatprep.subr.bf16.mxu0 %v5588
    %5820 = vmatpush1.bf16.msra.mxu0 %v5587
    %5821 = vmatprep.subr.bf16.mxu0 %v5592
    %5822 = vmatpush1.bf16.msra.mxu0 %v5591
    %5823 = vmatprep.subr.bf16.mxu0 %v5596
    %5824 = vmatpush1.bf16.msra.mxu0 %v5595
    %5825 = vmatprep.subr.bf16.mxu0 %v5600
    %5826 = vmatpush1.bf16.msra.mxu0 %v5599
    %5827 = vmatprep.mubr.bf16.mxu0 %v4972
    %5828 = vmatmul.mubr.bf16.gmra.mrb[0].mxu0 %v4971
    %v5829 = vpop.f32.mrb[0].mxu0
    %v5830 = vadd.f32 %v5138, %v5829
    %v5831 = vpop.f32.mrb[0].mxu0
    %v5832 = vadd.f32 %v5142, %v5831
    %v5833 = vpop.f32.mrb[0].mxu0
    %v5834 = vadd.f32 %v5138, %v5833
    %v5835 = vpop.f32.mrb[0].mxu0
    %v5836 = vadd.f32 %v5142, %v5835
    %5837 = vmatprep.mubr.bf16.mxu0 %v4976
    %5838 = vmatmul.mubr.bf16.gmra.mrb[0].mxu0 %v4975
    %v5839 = vpop.f32.mrb[0].mxu0
    %v5840 = vadd.f32 %v5138, %v5839
    %v5841 = vpop.f32.mrb[0].mxu0
    %v5842 = vadd.f32 %v5142, %v5841
    %v5843 = vpop.f32.mrb[0].mxu0
    %v5844 = vadd.f32 %v5138, %v5843
    %v5845 = vpop.f32.mrb[0].mxu0
    %v5846 = vadd.f32 %v5142, %v5845
    %5847 = vmatprep.mubr.bf16.mxu0 %v4980
    %5848 = vmatmul.mubr.bf16.gmra.mrb[0].mxu0 %v4979
    %v5849 = vpop.f32.mrb[0].mxu0
    %v5850 = vadd.f32 %v5138, %v5849
    %v5851 = vpop.f32.mrb[0].mxu0
    %v5852 = vadd.f32 %v5142, %v5851
    %v5853 = vpop.f32.mrb[0].mxu0
    %v5854 = vadd.f32 %v5138, %v5853
    %v5855 = vpop.f32.mrb[0].mxu0
    %v5856 = vadd.f32 %v5142, %v5855
    %5857 = vmatprep.mubr.bf16.mxu0 %v4984
    %5858 = vmatmul.mubr.bf16.gmra.mrb[0].mxu0 %v4983
    %v5859 = vpop.f32.mrb[0].mxu0
    %v5860 = vadd.f32 %v5138, %v5859
    %v5861 = vpop.f32.mrb[0].mxu0
    %v5862 = vadd.f32 %v5142, %v5861
    %v5863 = vpop.f32.mrb[0].mxu0
    %v5864 = vadd.f32 %v5138, %v5863
    %v5865 = vpop.f32.mrb[0].mxu0
    %v5866 = vadd.f32 %v5142, %v5865
    %5867 = vmatprep.mubr.bf16.mxu0 %v4988
    %5868 = vmatmul.mubr.bf16.gmra.mrb[0].mxu0 %v4987
    %v5869 = vpop.f32.mrb[0].mxu0
    %v5870 = vadd.f32 %v5138, %v5869
    %v5871 = vpop.f32.mrb[0].mxu0
    %v5872 = vadd.f32 %v5142, %v5871
    %v5873 = vpop.f32.mrb[0].mxu0
    %v5874 = vadd.f32 %v5138, %v5873
    %v5875 = vpop.f32.mrb[0].mxu0
    %v5876 = vadd.f32 %v5142, %v5875
    %5877 = vmatprep.mubr.bf16.mxu0 %v4992
    %5878 = vmatmul.mubr.bf16.gmra.mrb[0].mxu0 %v4991
    %v5879 = vpop.f32.mrb[0].mxu0
    %v5880 = vadd.f32 %v5138, %v5879
    %v5881 = vpop.f32.mrb[0].mxu0
    %v5882 = vadd.f32 %v5142, %v5881
    %v5883 = vpop.f32.mrb[0].mxu0
    %v5884 = vadd.f32 %v5138, %v5883
    %v5885 = vpop.f32.mrb[0].mxu0
    %v5886 = vadd.f32 %v5142, %v5885
    %5887 = vmatprep.mubr.bf16.mxu0 %v4996
    %5888 = vmatmul.mubr.bf16.gmra.mrb[0].mxu0 %v4995
    %v5889 = vpop.f32.mrb[0].mxu0
    %v5890 = vadd.f32 %v5138, %v5889
    %v5891 = vpop.f32.mrb[0].mxu0
    %v5892 = vadd.f32 %v5142, %v5891
    %v5893 = vpop.f32.mrb[0].mxu0
    %v5894 = vadd.f32 %v5138, %v5893
    %v5895 = vpop.f32.mrb[0].mxu0
    %v5896 = vadd.f32 %v5142, %v5895
    %5897 = vmatprep.mubr.bf16.mxu0 %v5000
    %5898 = vmatmul.mubr.bf16.gmra.mrb[0].mxu0 %v4999
    %v5899 = vpop.f32.mrb[0].mxu0
    %v5900 = vadd.f32 %v5138, %v5899
    %v5901 = vpop.f32.mrb[0].mxu0
    %v5902 = vadd.f32 %v5142, %v5901
    %v5903 = vpop.f32.mrb[0].mxu0
    %v5904 = vadd.f32 %v5138, %v5903
    %v5905 = vpop.f32.mrb[0].mxu0
    %v5906 = vadd.f32 %v5142, %v5905
    %5907 = vdwg.mxu0
    %5908 = vmatprep.subr.bf16.mxu0 %v5604
    %5909 = vmatpush1.bf16.msra.mxu0 %v5603
    %5910 = vmatprep.subr.bf16.mxu0 %v5608
    %5911 = vmatpush1.bf16.msra.mxu0 %v5607
    %5912 = vmatprep.subr.bf16.mxu0 %v5612
    %5913 = vmatpush1.bf16.msra.mxu0 %v5611
    %5914 = vmatprep.subr.bf16.mxu0 %v5616
    %5915 = vmatpush1.bf16.msra.mxu0 %v5615
    %5916 = vmatprep.subr.bf16.mxu0 %v5620
    %5917 = vmatpush1.bf16.msra.mxu0 %v5619
    %5918 = vmatprep.subr.bf16.mxu0 %v5624
    %5919 = vmatpush1.bf16.msra.mxu0 %v5623
    %5920 = vmatprep.subr.bf16.mxu0 %v5628
    %5921 = vmatpush1.bf16.msra.mxu0 %v5627
    %5922 = vmatprep.subr.bf16.mxu0 %v5632
    %5923 = vmatpush1.bf16.msra.mxu0 %v5631
    %5924 = vmatprep.subr.bf16.mxu0 %v5636
    %5925 = vmatpush1.bf16.msra.mxu0 %v5635
    %5926 = vmatprep.subr.bf16.mxu0 %v5640
    %5927 = vmatpush1.bf16.msra.mxu0 %v5639
    %5928 = vmatprep.subr.bf16.mxu0 %v5644
    %5929 = vmatpush1.bf16.msra.mxu0 %v5643
    %5930 = vmatprep.subr.bf16.mxu0 %v5648
    %5931 = vmatpush1.bf16.msra.mxu0 %v5647
    %5932 = vmatprep.subr.bf16.mxu0 %v5652
    %5933 = vmatpush1.bf16.msra.mxu0 %v5651
    %5934 = vmatprep.subr.bf16.mxu0 %v5656
    %5935 = vmatpush1.bf16.msra.mxu0 %v5655
    %5936 = vmatprep.subr.bf16.mxu0 %v5660
    %5937 = vmatpush1.bf16.msra.mxu0 %v5659
    %5938 = vmatprep.subr.bf16.mxu0 %v5664
    %5939 = vmatpush1.bf16.msra.mxu0 %v5663
    %5940 = vmatprep.mubr.bf16.mxu0 %v4974
    %5941 = vmatmul.mubr.bf16.gmra.mrb[0].mxu0 %v4973
    %v5942 = vpop.f32.mrb[0].mxu0
    %v5943 = vadd.f32 %v5830, %v5942
    %v5944 = vpop.f32.mrb[0].mxu0
    %v5945 = vadd.f32 %v5832, %v5944
    %v5946 = vpop.f32.mrb[0].mxu0
    %v5947 = vadd.f32 %v5834, %v5946
    %v5948 = vpop.f32.mrb[0].mxu0
    %v5949 = vadd.f32 %v5836, %v5948
    %5950 = vmatprep.mubr.bf16.mxu0 %v4978
    %5951 = vmatmul.mubr.bf16.gmra.mrb[0].mxu0 %v4977
    %v5952 = vpop.f32.mrb[0].mxu0
    %v5953 = vadd.f32 %v5840, %v5952
    %v5954 = vpop.f32.mrb[0].mxu0
    %v5955 = vadd.f32 %v5842, %v5954
    %v5956 = vpop.f32.mrb[0].mxu0
    %v5957 = vadd.f32 %v5844, %v5956
    %v5958 = vpop.f32.mrb[0].mxu0
    %v5959 = vadd.f32 %v5846, %v5958
    %5960 = vmatprep.mubr.bf16.mxu0 %v4982
    %5961 = vmatmul.mubr.bf16.gmra.mrb[0].mxu0 %v4981
    %v5962 = vpop.f32.mrb[0].mxu0
    %v5963 = vadd.f32 %v5850, %v5962
    %v5964 = vpop.f32.mrb[0].mxu0
    %v5965 = vadd.f32 %v5852, %v5964
    %v5966 = vpop.f32.mrb[0].mxu0
    %v5967 = vadd.f32 %v5854, %v5966
    %v5968 = vpop.f32.mrb[0].mxu0
    %v5969 = vadd.f32 %v5856, %v5968
    %5970 = vmatprep.mubr.bf16.mxu0 %v4986
    %5971 = vmatmul.mubr.bf16.gmra.mrb[0].mxu0 %v4985
    %v5972 = vpop.f32.mrb[0].mxu0
    %v5973 = vadd.f32 %v5860, %v5972
    %v5974 = vpop.f32.mrb[0].mxu0
    %v5975 = vadd.f32 %v5862, %v5974
    %v5976 = vpop.f32.mrb[0].mxu0
    %v5977 = vadd.f32 %v5864, %v5976
    %v5978 = vpop.f32.mrb[0].mxu0
    %v5979 = vadd.f32 %v5866, %v5978
    %5980 = vmatprep.mubr.bf16.mxu0 %v4990
    %5981 = vmatmul.mubr.bf16.gmra.mrb[0].mxu0 %v4989
    %v5982 = vpop.f32.mrb[0].mxu0
    %v5983 = vadd.f32 %v5870, %v5982
    %v5984 = vpop.f32.mrb[0].mxu0
    %v5985 = vadd.f32 %v5872, %v5984
    %v5986 = vpop.f32.mrb[0].mxu0
    %v5987 = vadd.f32 %v5874, %v5986
    %v5988 = vpop.f32.mrb[0].mxu0
    %v5989 = vadd.f32 %v5876, %v5988
    %5990 = vmatprep.mubr.bf16.mxu0 %v4994
    %5991 = vmatmul.mubr.bf16.gmra.mrb[0].mxu0 %v4993
    %v5992 = vpop.f32.mrb[0].mxu0
    %v5993 = vadd.f32 %v5880, %v5992
    %v5994 = vpop.f32.mrb[0].mxu0
    %v5995 = vadd.f32 %v5882, %v5994
    %v5996 = vpop.f32.mrb[0].mxu0
    %v5997 = vadd.f32 %v5884, %v5996
    %v5998 = vpop.f32.mrb[0].mxu0
    %v5999 = vadd.f32 %v5886, %v5998
    %6000 = vmatprep.mubr.bf16.mxu0 %v4998
    %6001 = vmatmul.mubr.bf16.gmra.mrb[0].mxu0 %v4997
    %v6002 = vpop.f32.mrb[0].mxu0
    %v6003 = vadd.f32 %v5890, %v6002
    %v6004 = vpop.f32.mrb[0].mxu0
    %v6005 = vadd.f32 %v5892, %v6004
    %v6006 = vpop.f32.mrb[0].mxu0
    %v6007 = vadd.f32 %v5894, %v6006
    %v6008 = vpop.f32.mrb[0].mxu0
    %v6009 = vadd.f32 %v5896, %v6008
    %6010 = vmatprep.mubr.bf16.mxu0 %v5002
    %6011 = vmatmul.mubr.bf16.gmra.mrb[0].mxu0 %v5001
    %v6012 = vpop.f32.mrb[0].mxu0
    %v6013 = vadd.f32 %v5900, %v6012
    %v6014 = vpop.f32.mrb[0].mxu0
    %v6015 = vadd.f32 %v5902, %v6014
    %v6016 = vpop.f32.mrb[0].mxu0
    %v6017 = vadd.f32 %v5904, %v6016
    %v6018 = vpop.f32.mrb[0].mxu0
    %v6019 = vadd.f32 %v5906, %v6018
    %6020 = vdwg.mxu0
    %6021 = vmatprep.subr.bf16.mxu0 %v5542
    %6022 = vmatpush1.bf16.msra.mxu0 %v5541
    %6023 = vmatprep.subr.bf16.mxu0 %v5546
    %6024 = vmatpush1.bf16.msra.mxu0 %v5545
    %6025 = vmatprep.subr.bf16.mxu0 %v5550
    %6026 = vmatpush1.bf16.msra.mxu0 %v5549
    %6027 = vmatprep.subr.bf16.mxu0 %v5554
    %6028 = vmatpush1.bf16.msra.mxu0 %v5553
    %6029 = vmatprep.subr.bf16.mxu0 %v5558
    %6030 = vmatpush1.bf16.msra.mxu0 %v5557
    %6031 = vmatprep.subr.bf16.mxu0 %v5562
    %6032 = vmatpush1.bf16.msra.mxu0 %v5561
    %6033 = vmatprep.subr.bf16.mxu0 %v5566
    %6034 = vmatpush1.bf16.msra.mxu0 %v5565
    %6035 = vmatprep.subr.bf16.mxu0 %v5570
    %6036 = vmatpush1.bf16.msra.mxu0 %v5569
    %6037 = vmatprep.subr.bf16.mxu0 %v5574
    %6038 = vmatpush1.bf16.msra.mxu0 %v5573
    %6039 = vmatprep.subr.bf16.mxu0 %v5578
    %6040 = vmatpush1.bf16.msra.mxu0 %v5577
    %6041 = vmatprep.subr.bf16.mxu0 %v5582
    %6042 = vmatpush1.bf16.msra.mxu0 %v5581
    %6043 = vmatprep.subr.bf16.mxu0 %v5586
    %6044 = vmatpush1.bf16.msra.mxu0 %v5585
    %6045 = vmatprep.subr.bf16.mxu0 %v5590
    %6046 = vmatpush1.bf16.msra.mxu0 %v5589
    %6047 = vmatprep.subr.bf16.mxu0 %v5594
    %6048 = vmatpush1.bf16.msra.mxu0 %v5593
    %6049 = vmatprep.subr.bf16.mxu0 %v5598
    %6050 = vmatpush1.bf16.msra.mxu0 %v5597
    %6051 = vmatprep.subr.bf16.mxu0 %v5602
    %6052 = vmatpush1.bf16.msra.mxu0 %v5601
    %6053 = vmatprep.mubr.bf16.mxu0 %v4972
    %6054 = vmatmul.mubr.bf16.gmra.mrb[0].mxu0 %v4971
    %v6055 = vpop.f32.mrb[0].mxu0
    %v6056 = vadd.f32 %v5146, %v6055
    %v6057 = vpop.f32.mrb[0].mxu0
    %v6058 = vadd.f32 %v5150, %v6057
    %v6059 = vpop.f32.mrb[0].mxu0
    %v6060 = vadd.f32 %v5146, %v6059
    %v6061 = vpop.f32.mrb[0].mxu0
    %v6062 = vadd.f32 %v5150, %v6061
    %6063 = vmatprep.mubr.bf16.mxu0 %v4976
    %6064 = vmatmul.mubr.bf16.gmra.mrb[0].mxu0 %v4975
    %v6065 = vpop.f32.mrb[0].mxu0
    %v6066 = vadd.f32 %v5146, %v6065
    %v6067 = vpop.f32.mrb[0].mxu0
    %v6068 = vadd.f32 %v5150, %v6067
    %v6069 = vpop.f32.mrb[0].mxu0
    %v6070 = vadd.f32 %v5146, %v6069
    %v6071 = vpop.f32.mrb[0].mxu0
    %v6072 = vadd.f32 %v5150, %v6071
    %6073 = vmatprep.mubr.bf16.mxu0 %v4980
    %6074 = vmatmul.mubr.bf16.gmra.mrb[0].mxu0 %v4979
    %v6075 = vpop.f32.mrb[0].mxu0
    %v6076 = vadd.f32 %v5146, %v6075
    %v6077 = vpop.f32.mrb[0].mxu0
    %v6078 = vadd.f32 %v5150, %v6077
    %v6079 = vpop.f32.mrb[0].mxu0
    %v6080 = vadd.f32 %v5146, %v6079
    %v6081 = vpop.f32.mrb[0].mxu0
    %v6082 = vadd.f32 %v5150, %v6081
    %6083 = vmatprep.mubr.bf16.mxu0 %v4984
    %6084 = vmatmul.mubr.bf16.gmra.mrb[0].mxu0 %v4983
    %v6085 = vpop.f32.mrb[0].mxu0
    %v6086 = vadd.f32 %v5146, %v6085
    %v6087 = vpop.f32.mrb[0].mxu0
    %v6088 = vadd.f32 %v5150, %v6087
    %v6089 = vpop.f32.mrb[0].mxu0
    %v6090 = vadd.f32 %v5146, %v6089
    %v6091 = vpop.f32.mrb[0].mxu0
    %v6092 = vadd.f32 %v5150, %v6091
    %6093 = vmatprep.mubr.bf16.mxu0 %v4988
    %6094 = vmatmul.mubr.bf16.gmra.mrb[0].mxu0 %v4987
    %v6095 = vpop.f32.mrb[0].mxu0
    %v6096 = vadd.f32 %v5146, %v6095
    %v6097 = vpop.f32.mrb[0].mxu0
    %v6098 = vadd.f32 %v5150, %v6097
    %v6099 = vpop.f32.mrb[0].mxu0
    %v6100 = vadd.f32 %v5146, %v6099
    %v6101 = vpop.f32.mrb[0].mxu0
    %v6102 = vadd.f32 %v5150, %v6101
    %6103 = vmatprep.mubr.bf16.mxu0 %v4992
    %6104 = vmatmul.mubr.bf16.gmra.mrb[0].mxu0 %v4991
    %v6105 = vpop.f32.mrb[0].mxu0
    %v6106 = vadd.f32 %v5146, %v6105
    %v6107 = vpop.f32.mrb[0].mxu0
    %v6108 = vadd.f32 %v5150, %v6107
    %v6109 = vpop.f32.mrb[0].mxu0
    %v6110 = vadd.f32 %v5146, %v6109
    %v6111 = vpop.f32.mrb[0].mxu0
    %v6112 = vadd.f32 %v5150, %v6111
    %6113 = vmatprep.mubr.bf16.mxu0 %v4996
    %6114 = vmatmul.mubr.bf16.gmra.mrb[0].mxu0 %v4995
    %v6115 = vpop.f32.mrb[0].mxu0
    %v6116 = vadd.f32 %v5146, %v6115
    %v6117 = vpop.f32.mrb[0].mxu0
    %v6118 = vadd.f32 %v5150, %v6117
    %v6119 = vpop.f32.mrb[0].mxu0
    %v6120 = vadd.f32 %v5146, %v6119
    %v6121 = vpop.f32.mrb[0].mxu0
    %v6122 = vadd.f32 %v5150, %v6121
    %6123 = vmatprep.mubr.bf16.mxu0 %v5000
    %6124 = vmatmul.mubr.bf16.gmra.mrb[0].mxu0 %v4999
    %v6125 = vpop.f32.mrb[0].mxu0
    %v6126 = vadd.f32 %v5146, %v6125
    %v6127 = vpop.f32.mrb[0].mxu0
    %v6128 = vadd.f32 %v5150, %v6127
    %v6129 = vpop.f32.mrb[0].mxu0
    %v6130 = vadd.f32 %v5146, %v6129
    %v6131 = vpop.f32.mrb[0].mxu0
    %v6132 = vadd.f32 %v5150, %v6131
    %6133 = vdwg.mxu0
    %6134 = vmatprep.subr.bf16.mxu0 %v5606
    %6135 = vmatpush1.bf16.msra.mxu0 %v5605
    %6136 = vmatprep.subr.bf16.mxu0 %v5610
    %6137 = vmatpush1.bf16.msra.mxu0 %v5609
    %6138 = vmatprep.subr.bf16.mxu0 %v5614
    %6139 = vmatpush1.bf16.msra.mxu0 %v5613
    %6140 = vmatprep.subr.bf16.mxu0 %v5618
    %6141 = vmatpush1.bf16.msra.mxu0 %v5617
    %6142 = vmatprep.subr.bf16.mxu0 %v5622
    %6143 = vmatpush1.bf16.msra.mxu0 %v5621
    %6144 = vmatprep.subr.bf16.mxu0 %v5626
    %6145 = vmatpush1.bf16.msra.mxu0 %v5625
    %6146 = vmatprep.subr.bf16.mxu0 %v5630
    %6147 = vmatpush1.bf16.msra.mxu0 %v5629
    %6148 = vmatprep.subr.bf16.mxu0 %v5634
    %6149 = vmatpush1.bf16.msra.mxu0 %v5633
    %6150 = vmatprep.subr.bf16.mxu0 %v5638
    %6151 = vmatpush1.bf16.msra.mxu0 %v5637
    %6152 = vmatprep.subr.bf16.mxu0 %v5642
    %6153 = vmatpush1.bf16.msra.mxu0 %v5641
    %6154 = vmatprep.subr.bf16.mxu0 %v5646
    %6155 = vmatpush1.bf16.msra.mxu0 %v5645
    %6156 = vmatprep.subr.bf16.mxu0 %v5650
    %6157 = vmatpush1.bf16.msra.mxu0 %v5649
    %6158 = vmatprep.subr.bf16.mxu0 %v5654
    %6159 = vmatpush1.bf16.msra.mxu0 %v5653
    %6160 = vmatprep.subr.bf16.mxu0 %v5658
    %6161 = vmatpush1.bf16.msra.mxu0 %v5657
    %6162 = vmatprep.subr.bf16.mxu0 %v5662
    %6163 = vmatpush1.bf16.msra.mxu0 %v5661
    %6164 = vmatprep.subr.bf16.mxu0 %v5666
    %6165 = vmatpush1.bf16.msra.mxu0 %v5665
    %6166 = vmatprep.mubr.bf16.mxu0 %v4974
    %6167 = vmatmul.mubr.bf16.gmra.mrb[0].mxu0 %v4973
    %v6168 = vpop.f32.mrb[0].mxu0
    %v6169 = vadd.f32 %v6056, %v6168
    %v6170 = vpop.f32.mrb[0].mxu0
    %v6171 = vadd.f32 %v6058, %v6170
    %v6172 = vpop.f32.mrb[0].mxu0
    %v6173 = vadd.f32 %v6060, %v6172
    %v6174 = vpop.f32.mrb[0].mxu0
    %v6175 = vadd.f32 %v6062, %v6174
    %6176 = vmatprep.mubr.bf16.mxu0 %v4978
    %6177 = vmatmul.mubr.bf16.gmra.mrb[0].mxu0 %v4977
    %v6178 = vpop.f32.mrb[0].mxu0
    %v6179 = vadd.f32 %v6066, %v6178
    %v6180 = vpop.f32.mrb[0].mxu0
    %v6181 = vadd.f32 %v6068, %v6180
    %v6182 = vpop.f32.mrb[0].mxu0
    %v6183 = vadd.f32 %v6070, %v6182
    %v6184 = vpop.f32.mrb[0].mxu0
    %v6185 = vadd.f32 %v6072, %v6184
    %6186 = vmatprep.mubr.bf16.mxu0 %v4982
    %6187 = vmatmul.mubr.bf16.gmra.mrb[0].mxu0 %v4981
    %v6188 = vpop.f32.mrb[0].mxu0
    %v6189 = vadd.f32 %v6076, %v6188
    %v6190 = vpop.f32.mrb[0].mxu0
    %v6191 = vadd.f32 %v6078, %v6190
    %v6192 = vpop.f32.mrb[0].mxu0
    %v6193 = vadd.f32 %v6080, %v6192
    %v6194 = vpop.f32.mrb[0].mxu0
    %v6195 = vadd.f32 %v6082, %v6194
    %6196 = vmatprep.mubr.bf16.mxu0 %v4986
    %6197 = vmatmul.mubr.bf16.gmra.mrb[0].mxu0 %v4985
    %v6198 = vpop.f32.mrb[0].mxu0
    %v6199 = vadd.f32 %v6086, %v6198
    %v6200 = vpop.f32.mrb[0].mxu0
    %v6201 = vadd.f32 %v6088, %v6200
    %v6202 = vpop.f32.mrb[0].mxu0
    %v6203 = vadd.f32 %v6090, %v6202
    %v6204 = vpop.f32.mrb[0].mxu0
    %v6205 = vadd.f32 %v6092, %v6204
    %6206 = vmatprep.mubr.bf16.mxu0 %v4990
    %6207 = vmatmul.mubr.bf16.gmra.mrb[0].mxu0 %v4989
    %v6208 = vpop.f32.mrb[0].mxu0
    %v6209 = vadd.f32 %v6096, %v6208
    %v6210 = vpop.f32.mrb[0].mxu0
    %v6211 = vadd.f32 %v6098, %v6210
    %v6212 = vpop.f32.mrb[0].mxu0
    %v6213 = vadd.f32 %v6100, %v6212
    %v6214 = vpop.f32.mrb[0].mxu0
    %v6215 = vadd.f32 %v6102, %v6214
    %6216 = vmatprep.mubr.bf16.mxu0 %v4994
    %6217 = vmatmul.mubr.bf16.gmra.mrb[0].mxu0 %v4993
    %v6218 = vpop.f32.mrb[0].mxu0
    %v6219 = vadd.f32 %v6106, %v6218
    %v6220 = vpop.f32.mrb[0].mxu0
    %v6221 = vadd.f32 %v6108, %v6220
    %v6222 = vpop.f32.mrb[0].mxu0
    %v6223 = vadd.f32 %v6110, %v6222
    %v6224 = vpop.f32.mrb[0].mxu0
    %v6225 = vadd.f32 %v6112, %v6224
    %6226 = vmatprep.mubr.bf16.mxu0 %v4998
    %6227 = vmatmul.mubr.bf16.gmra.mrb[0].mxu0 %v4997
    %v6228 = vpop.f32.mrb[0].mxu0
    %v6229 = vadd.f32 %v6116, %v6228
    %v6230 = vpop.f32.mrb[0].mxu0
    %v6231 = vadd.f32 %v6118, %v6230
    %v6232 = vpop.f32.mrb[0].mxu0
    %v6233 = vadd.f32 %v6120, %v6232
    %v6234 = vpop.f32.mrb[0].mxu0
    %v6235 = vadd.f32 %v6122, %v6234
    %6236 = vmatprep.mubr.bf16.mxu0 %v5002
    %6237 = vmatmul.mubr.bf16.gmra.mrb[0].mxu0 %v5001
    %v6238 = vpop.f32.mrb[0].mxu0
    %v6239 = vadd.f32 %v6126, %v6238
    %v6240 = vpop.f32.mrb[0].mxu0
    %v6241 = vadd.f32 %v6128, %v6240
    %v6242 = vpop.f32.mrb[0].mxu0
    %v6243 = vadd.f32 %v6130, %v6242
    %v6244 = vpop.f32.mrb[0].mxu0
    %v6245 = vadd.f32 %v6132, %v6244
    %6246 = vdwg.mxu0
    %vm6247 = vcmp.ge.f32.partialorder %v5943, 0.0
    %vm6248 = vcmp.ge.f32.partialorder %v5945, 0.0
    %vm6249 = vcmp.ge.f32.partialorder %v6169, 0.0
    %vm6250 = vcmp.ge.f32.partialorder %v6171, 0.0
    %vm6251 = vcmp.ge.f32.partialorder %v5947, 0.0
    %vm6252 = vcmp.ge.f32.partialorder %v5949, 0.0
    %vm6253 = vcmp.ge.f32.partialorder %v6173, 0.0
    %vm6254 = vcmp.ge.f32.partialorder %v6175, 0.0
    %vm6255 = vcmp.ge.f32.partialorder %v5953, 0.0
    %vm6256 = vcmp.ge.f32.partialorder %v5955, 0.0
    %vm6257 = vcmp.ge.f32.partialorder %v6179, 0.0
    %vm6258 = vcmp.ge.f32.partialorder %v6181, 0.0
    %vm6259 = vcmp.ge.f32.partialorder %v5957, 0.0
    %vm6260 = vcmp.ge.f32.partialorder %v5959, 0.0
    %vm6261 = vcmp.ge.f32.partialorder %v6183, 0.0
    %vm6262 = vcmp.ge.f32.partialorder %v6185, 0.0
    %vm6263 = vcmp.ge.f32.partialorder %v5963, 0.0
    %vm6264 = vcmp.ge.f32.partialorder %v5965, 0.0
    %vm6265 = vcmp.ge.f32.partialorder %v6189, 0.0
    %vm6266 = vcmp.ge.f32.partialorder %v6191, 0.0
    %vm6267 = vcmp.ge.f32.partialorder %v5967, 0.0
    %vm6268 = vcmp.ge.f32.partialorder %v5969, 0.0
    %vm6269 = vcmp.ge.f32.partialorder %v6193, 0.0
    %vm6270 = vcmp.ge.f32.partialorder %v6195, 0.0
    %vm6271 = vcmp.ge.f32.partialorder %v5973, 0.0
    %vm6272 = vcmp.ge.f32.partialorder %v5975, 0.0
    %vm6273 = vcmp.ge.f32.partialorder %v6199, 0.0
    %vm6274 = vcmp.ge.f32.partialorder %v6201, 0.0
    %vm6275 = vcmp.ge.f32.partialorder %v5977, 0.0
    %vm6276 = vcmp.ge.f32.partialorder %v5979, 0.0
    %vm6277 = vcmp.ge.f32.partialorder %v6203, 0.0
    %vm6278 = vcmp.ge.f32.partialorder %v6205, 0.0
    %vm6279 = vcmp.ge.f32.partialorder %v5983, 0.0
    %vm6280 = vcmp.ge.f32.partialorder %v5985, 0.0
    %vm6281 = vcmp.ge.f32.partialorder %v6209, 0.0
    %vm6282 = vcmp.ge.f32.partialorder %v6211, 0.0
    %vm6283 = vcmp.ge.f32.partialorder %v5987, 0.0
    %vm6284 = vcmp.ge.f32.partialorder %v5989, 0.0
    %vm6285 = vcmp.ge.f32.partialorder %v6213, 0.0
    %vm6286 = vcmp.ge.f32.partialorder %v6215, 0.0
    %vm6287 = vcmp.ge.f32.partialorder %v5993, 0.0
    %vm6288 = vcmp.ge.f32.partialorder %v5995, 0.0
    %vm6289 = vcmp.ge.f32.partialorder %v6219, 0.0
    %vm6290 = vcmp.ge.f32.partialorder %v6221, 0.0
    %vm6291 = vcmp.ge.f32.partialorder %v5997, 0.0
    %vm6292 = vcmp.ge.f32.partialorder %v5999, 0.0
    %vm6293 = vcmp.ge.f32.partialorder %v6223, 0.0
    %vm6294 = vcmp.ge.f32.partialorder %v6225, 0.0
    %vm6295 = vcmp.ge.f32.partialorder %v6003, 0.0
    %vm6296 = vcmp.ge.f32.partialorder %v6005, 0.0
    %vm6297 = vcmp.ge.f32.partialorder %v6229, 0.0
    %vm6298 = vcmp.ge.f32.partialorder %v6231, 0.0
    %vm6299 = vcmp.ge.f32.partialorder %v6007, 0.0
    %vm6300 = vcmp.ge.f32.partialorder %v6009, 0.0
    %vm6301 = vcmp.ge.f32.partialorder %v6233, 0.0
    %vm6302 = vcmp.ge.f32.partialorder %v6235, 0.0
    %vm6303 = vcmp.ge.f32.partialorder %v6013, 0.0
    %vm6304 = vcmp.ge.f32.partialorder %v6015, 0.0
    %vm6305 = vcmp.ge.f32.partialorder %v6239, 0.0
    %vm6306 = vcmp.ge.f32.partialorder %v6241, 0.0
    %vm6307 = vcmp.ge.f32.partialorder %v6017, 0.0
    %vm6308 = vcmp.ge.f32.partialorder %v6019, 0.0
    %vm6309 = vcmp.ge.f32.partialorder %v6243, 0.0
    %vm6310 = vcmp.ge.f32.partialorder %v6245, 0.0
    %v6311 = vmul.f32 %v5943, 1.4142135
    %v6312 = vmul.f32 %v5945, 1.4142135
    %v6313 = vmul.f32 %v6169, 1.4142135
    %v6314 = vmul.f32 %v6171, 1.4142135
    %v6315 = vmul.f32 %v5947, 1.4142135
    %v6316 = vmul.f32 %v5949, 1.4142135
    %v6317 = vmul.f32 %v6173, 1.4142135
    %v6318 = vmul.f32 %v6175, 1.4142135
    %v6319 = vmul.f32 %v5953, 1.4142135
    %v6320 = vmul.f32 %v5955, 1.4142135
    %v6321 = vmul.f32 %v6179, 1.4142135
    %v6322 = vmul.f32 %v6181, 1.4142135
    %v6323 = vmul.f32 %v5957, 1.4142135
    %v6324 = vmul.f32 %v5959, 1.4142135
    %v6325 = vmul.f32 %v6183, 1.4142135
    %v6326 = vmul.f32 %v6185, 1.4142135
    %v6327 = vmul.f32 %v5963, 1.4142135
    %v6328 = vmul.f32 %v5965, 1.4142135
    %v6329 = vmul.f32 %v6189, 1.4142135
    %v6330 = vmul.f32 %v6191, 1.4142135
    %v6331 = vmul.f32 %v5967, 1.4142135
    %v6332 = vmul.f32 %v5969, 1.4142135
    %v6333 = vmul.f32 %v6193, 1.4142135
    %v6334 = vmul.f32 %v6195, 1.4142135
    %v6335 = vmul.f32 %v5973, 1.4142135
    %v6336 = vmul.f32 %v5975, 1.4142135
    %v6337 = vmul.f32 %v6199, 1.4142135
    %v6338 = vmul.f32 %v6201, 1.4142135
    %v6339 = vmul.f32 %v5977, 1.4142135
    %v6340 = vmul.f32 %v5979, 1.4142135
    %v6341 = vmul.f32 %v6203, 1.4142135
    %v6342 = vmul.f32 %v6205, 1.4142135
    %v6343 = vmul.f32 %v5983, 1.4142135
    %v6344 = vmul.f32 %v5985, 1.4142135
    %v6345 = vmul.f32 %v6209, 1.4142135
    %v6346 = vmul.f32 %v6211, 1.4142135
    %v6347 = vmul.f32 %v5987, 1.4142135
    %v6348 = vmul.f32 %v5989, 1.4142135
    %v6349 = vmul.f32 %v6213, 1.4142135
    %v6350 = vmul.f32 %v6215, 1.4142135
    %v6351 = vmul.f32 %v5993, 1.4142135
    %v6352 = vmul.f32 %v5995, 1.4142135
    %v6353 = vmul.f32 %v6219, 1.4142135
    %v6354 = vmul.f32 %v6221, 1.4142135
    %v6355 = vmul.f32 %v5997, 1.4142135
    %v6356 = vmul.f32 %v5999, 1.4142135
    %v6357 = vmul.f32 %v6223, 1.4142135
    %v6358 = vmul.f32 %v6225, 1.4142135
    %v6359 = vmul.f32 %v6003, 1.4142135
    %v6360 = vmul.f32 %v6005, 1.4142135
    %v6361 = vmul.f32 %v6229, 1.4142135
    %v6362 = vmul.f32 %v6231, 1.4142135
    %v6363 = vmul.f32 %v6007, 1.4142135
    %v6364 = vmul.f32 %v6009, 1.4142135
    %v6365 = vmul.f32 %v6233, 1.4142135
    %v6366 = vmul.f32 %v6235, 1.4142135
    %v6367 = vmul.f32 %v6013, 1.4142135
    %v6368 = vmul.f32 %v6015, 1.4142135
    %v6369 = vmul.f32 %v6239, 1.4142135
    %v6370 = vmul.f32 %v6241, 1.4142135
    %v6371 = vmul.f32 %v6017, 1.4142135
    %v6372 = vmul.f32 %v6019, 1.4142135
    %v6373 = vmul.f32 %v6243, 1.4142135
    %v6374 = vmul.f32 %v6245, 1.4142135
    %v6375 = vmul.f32 %v5943, 0.28284273
    %v6376 = vmul.f32 %v5945, 0.28284273
    %v6377 = vmul.f32 %v6169, 0.28284273
    %v6378 = vmul.f32 %v6171, 0.28284273
    %v6379 = vmul.f32 %v5947, 0.28284273
    %v6380 = vmul.f32 %v5949, 0.28284273
    %v6381 = vmul.f32 %v6173, 0.28284273
    %v6382 = vmul.f32 %v6175, 0.28284273
    %v6383 = vmul.f32 %v5953, 0.28284273
    %v6384 = vmul.f32 %v5955, 0.28284273
    %v6385 = vmul.f32 %v6179, 0.28284273
    %v6386 = vmul.f32 %v6181, 0.28284273
    %v6387 = vmul.f32 %v5957, 0.28284273
    %v6388 = vmul.f32 %v5959, 0.28284273
    %v6389 = vmul.f32 %v6183, 0.28284273
    %v6390 = vmul.f32 %v6185, 0.28284273
    %v6391 = vmul.f32 %v5963, 0.28284273
    %v6392 = vmul.f32 %v5965, 0.28284273
    %v6393 = vmul.f32 %v6189, 0.28284273
    %v6394 = vmul.f32 %v6191, 0.28284273
    %v6395 = vmul.f32 %v5967, 0.28284273
    %v6396 = vmul.f32 %v5969, 0.28284273
    %v6397 = vmul.f32 %v6193, 0.28284273
    %v6398 = vmul.f32 %v6195, 0.28284273
    %v6399 = vmul.f32 %v5973, 0.28284273
    %v6400 = vmul.f32 %v5975, 0.28284273
    %v6401 = vmul.f32 %v6199, 0.28284273
    %v6402 = vmul.f32 %v6201, 0.28284273
    %v6403 = vmul.f32 %v5977, 0.28284273
    %v6404 = vmul.f32 %v5979, 0.28284273
    %v6405 = vmul.f32 %v6203, 0.28284273
    %v6406 = vmul.f32 %v6205, 0.28284273
    %v6407 = vmul.f32 %v5983, 0.28284273
    %v6408 = vmul.f32 %v5985, 0.28284273
    %v6409 = vmul.f32 %v6209, 0.28284273
    %v6410 = vmul.f32 %v6211, 0.28284273
    %v6411 = vmul.f32 %v5987, 0.28284273
    %v6412 = vmul.f32 %v5989, 0.28284273
    %v6413 = vmul.f32 %v6213, 0.28284273
    %v6414 = vmul.f32 %v6215, 0.28284273
    %v6415 = vmul.f32 %v5993, 0.28284273
    %v6416 = vmul.f32 %v5995, 0.28284273
    %v6417 = vmul.f32 %v6219, 0.28284273
    %v6418 = vmul.f32 %v6221, 0.28284273
    %v6419 = vmul.f32 %v5997, 0.28284273
    %v6420 = vmul.f32 %v5999, 0.28284273
    %v6421 = vmul.f32 %v6223, 0.28284273
    %v6422 = vmul.f32 %v6225, 0.28284273
    %v6423 = vmul.f32 %v6003, 0.28284273
    %v6424 = vmul.f32 %v6005, 0.28284273
    %v6425 = vmul.f32 %v6229, 0.28284273
    %v6426 = vmul.f32 %v6231, 0.28284273
    %v6427 = vmul.f32 %v6007, 0.28284273
    %v6428 = vmul.f32 %v6009, 0.28284273
    %v6429 = vmul.f32 %v6233, 0.28284273
    %v6430 = vmul.f32 %v6235, 0.28284273
    %v6431 = vmul.f32 %v6013, 0.28284273
    %v6432 = vmul.f32 %v6015, 0.28284273
    %v6433 = vmul.f32 %v6239, 0.28284273
    %v6434 = vmul.f32 %v6241, 0.28284273
    %v6435 = vmul.f32 %v6017, 0.28284273
    %v6436 = vmul.f32 %v6019, 0.28284273
    %v6437 = vmul.f32 %v6243, 0.28284273
    %v6438 = vmul.f32 %v6245, 0.28284273
    %v6439 = vsel %vm6247, %v6311, %v6375
    %v6440 = vsel %vm6248, %v6312, %v6376
    %v6441 = vsel %vm6249, %v6313, %v6377
    %v6442 = vsel %vm6250, %v6314, %v6378
    %v6443 = vsel %vm6251, %v6315, %v6379
    %v6444 = vsel %vm6252, %v6316, %v6380
    %v6445 = vsel %vm6253, %v6317, %v6381
    %v6446 = vsel %vm6254, %v6318, %v6382
    %v6447 = vsel %vm6255, %v6319, %v6383
    %v6448 = vsel %vm6256, %v6320, %v6384
    %v6449 = vsel %vm6257, %v6321, %v6385
    %v6450 = vsel %vm6258, %v6322, %v6386
    %v6451 = vsel %vm6259, %v6323, %v6387
    %v6452 = vsel %vm6260, %v6324, %v6388
    %v6453 = vsel %vm6261, %v6325, %v6389
    %v6454 = vsel %vm6262, %v6326, %v6390
    %v6455 = vsel %vm6263, %v6327, %v6391
    %v6456 = vsel %vm6264, %v6328, %v6392
    %v6457 = vsel %vm6265, %v6329, %v6393
    %v6458 = vsel %vm6266, %v6330, %v6394
    %v6459 = vsel %vm6267, %v6331, %v6395
    %v6460 = vsel %vm6268, %v6332, %v6396
    %v6461 = vsel %vm6269, %v6333, %v6397
    %v6462 = vsel %vm6270, %v6334, %v6398
    %v6463 = vsel %vm6271, %v6335, %v6399
    %v6464 = vsel %vm6272, %v6336, %v6400
    %v6465 = vsel %vm6273, %v6337, %v6401
    %v6466 = vsel %vm6274, %v6338, %v6402
    %v6467 = vsel %vm6275, %v6339, %v6403
    %v6468 = vsel %vm6276, %v6340, %v6404
    %v6469 = vsel %vm6277, %v6341, %v6405
    %v6470 = vsel %vm6278, %v6342, %v6406
    %v6471 = vsel %vm6279, %v6343, %v6407
    %v6472 = vsel %vm6280, %v6344, %v6408
    %v6473 = vsel %vm6281, %v6345, %v6409
    %v6474 = vsel %vm6282, %v6346, %v6410
    %v6475 = vsel %vm6283, %v6347, %v6411
    %v6476 = vsel %vm6284, %v6348, %v6412
    %v6477 = vsel %vm6285, %v6349, %v6413
    %v6478 = vsel %vm6286, %v6350, %v6414
    %v6479 = vsel %vm6287, %v6351, %v6415
    %v6480 = vsel %vm6288, %v6352, %v6416
    %v6481 = vsel %vm6289, %v6353, %v6417
    %v6482 = vsel %vm6290, %v6354, %v6418
    %v6483 = vsel %vm6291, %v6355, %v6419
    %v6484 = vsel %vm6292, %v6356, %v6420
    %v6485 = vsel %vm6293, %v6357, %v6421
    %v6486 = vsel %vm6294, %v6358, %v6422
    %v6487 = vsel %vm6295, %v6359, %v6423
    %v6488 = vsel %vm6296, %v6360, %v6424
    %v6489 = vsel %vm6297, %v6361, %v6425
    %v6490 = vsel %vm6298, %v6362, %v6426
    %v6491 = vsel %vm6299, %v6363, %v6427
    %v6492 = vsel %vm6300, %v6364, %v6428
    %v6493 = vsel %vm6301, %v6365, %v6429
    %v6494 = vsel %vm6302, %v6366, %v6430
    %v6495 = vsel %vm6303, %v6367, %v6431
    %v6496 = vsel %vm6304, %v6368, %v6432
    %v6497 = vsel %vm6305, %v6369, %v6433
    %v6498 = vsel %vm6306, %v6370, %v6434
    %v6499 = vsel %vm6307, %v6371, %v6435
    %v6500 = vsel %vm6308, %v6372, %v6436
    %v6501 = vsel %vm6309, %v6373, %v6437
    %v6502 = vsel %vm6310, %v6374, %v6438
    %6503 = vst [vmem:[#allocation8] sm:$0xff] %v6439
    %6504 = vst [vmem:[#allocation8 + $0x8] sm:$0xff] %v6440
    %6505 = vst [vmem:[#allocation8 + $0x10] sm:$0xff] %v6441
    %6506 = vst [vmem:[#allocation8 + $0x18] sm:$0xff] %v6442
    %6507 = vst [vmem:[#allocation8 + $0x20] sm:$0xff] %v6443
    %6508 = vst [vmem:[#allocation8 + $0x28] sm:$0xff] %v6444
    %6509 = vst [vmem:[#allocation8 + $0x30] sm:$0xff] %v6445
    %6510 = vst [vmem:[#allocation8 + $0x38] sm:$0xff] %v6446
    %6511 = vst [vmem:[#allocation8 + $0x40] sm:$0xff] %v6447
    %6512 = vst [vmem:[#allocation8 + $0x48] sm:$0xff] %v6448
    %6513 = vst [vmem:[#allocation8 + $0x50] sm:$0xff] %v6449
    %6514 = vst [vmem:[#allocation8 + $0x58] sm:$0xff] %v6450
    %6515 = vst [vmem:[#allocation8 + $0x60] sm:$0xff] %v6451
    %6516 = vst [vmem:[#allocation8 + $0x68] sm:$0xff] %v6452
    %6517 = vst [vmem:[#allocation8 + $0x70] sm:$0xff] %v6453
    %6518 = vst [vmem:[#allocation8 + $0x78] sm:$0xff] %v6454
    %6519 = vst [vmem:[#allocation8 + $0x80] sm:$0xff] %v6455
    %6520 = vst [vmem:[#allocation8 + $0x88] sm:$0xff] %v6456
    %6521 = vst [vmem:[#allocation8 + $0x90] sm:$0xff] %v6457
    %6522 = vst [vmem:[#allocation8 + $0x98] sm:$0xff] %v6458
    %6523 = vst [vmem:[#allocation8 + $0xa0] sm:$0xff] %v6459
    %6524 = vst [vmem:[#allocation8 + $0xa8] sm:$0xff] %v6460
    %6525 = vst [vmem:[#allocation8 + $0xb0] sm:$0xff] %v6461
    %6526 = vst [vmem:[#allocation8 + $0xb8] sm:$0xff] %v6462
    %6527 = vst [vmem:[#allocation8 + $0xc0] sm:$0xff] %v6463
    %6528 = vst [vmem:[#allocation8 + $0xc8] sm:$0xff] %v6464
    %6529 = vst [vmem:[#allocation8 + $0xd0] sm:$0xff] %v6465
    %6530 = vst [vmem:[#allocation8 + $0xd8] sm:$0xff] %v6466
    %6531 = vst [vmem:[#allocation8 + $0xe0] sm:$0xff] %v6467
    %6532 = vst [vmem:[#allocation8 + $0xe8] sm:$0xff] %v6468
    %6533 = vst [vmem:[#allocation8 + $0xf0] sm:$0xff] %v6469
    %6534 = vst [vmem:[#allocation8 + $0xf8] sm:$0xff] %v6470
    %6535 = vst [vmem:[#allocation8 + $0x100] sm:$0xff] %v6471
    %6536 = vst [vmem:[#allocation8 + $0x108] sm:$0xff] %v6472
    %6537 = vst [vmem:[#allocation8 + $0x110] sm:$0xff] %v6473
    %6538 = vst [vmem:[#allocation8 + $0x118] sm:$0xff] %v6474
    %6539 = vst [vmem:[#allocation8 + $0x120] sm:$0xff] %v6475
    %6540 = vst [vmem:[#allocation8 + $0x128] sm:$0xff] %v6476
    %6541 = vst [vmem:[#allocation8 + $0x130] sm:$0xff] %v6477
    %6542 = vst [vmem:[#allocation8 + $0x138] sm:$0xff] %v6478
    %6543 = vst [vmem:[#allocation8 + $0x140] sm:$0xff] %v6479
    %6544 = vst [vmem:[#allocation8 + $0x148] sm:$0xff] %v6480
    %6545 = vst [vmem:[#allocation8 + $0x150] sm:$0xff] %v6481
    %6546 = vst [vmem:[#allocation8 + $0x158] sm:$0xff] %v6482
    %6547 = vst [vmem:[#allocation8 + $0x160] sm:$0xff] %v6483
    %6548 = vst [vmem:[#allocation8 + $0x168] sm:$0xff] %v6484
    %6549 = vst [vmem:[#allocation8 + $0x170] sm:$0xff] %v6485
    %6550 = vst [vmem:[#allocation8 + $0x178] sm:$0xff] %v6486
    %6551 = vst [vmem:[#allocation8 + $0x180] sm:$0xff] %v6487
    %6552 = vst [vmem:[#allocation8 + $0x188] sm:$0xff] %v6488
    %6553 = vst [vmem:[#allocation8 + $0x190] sm:$0xff] %v6489
    %6554 = vst [vmem:[#allocation8 + $0x198] sm:$0xff] %v6490
    %6555 = vst [vmem:[#allocation8 + $0x1a0] sm:$0xff] %v6491
    %6556 = vst [vmem:[#allocation8 + $0x1a8] sm:$0xff] %v6492
    %6557 = vst [vmem:[#allocation8 + $0x1b0] sm:$0xff] %v6493
    %6558 = vst [vmem:[#allocation8 + $0x1b8] sm:$0xff] %v6494
    %6559 = vst [vmem:[#allocation8 + $0x1c0] sm:$0xff] %v6495
    %6560 = vst [vmem:[#allocation8 + $0x1c8] sm:$0xff] %v6496
    %6561 = vst [vmem:[#allocation8 + $0x1d0] sm:$0xff] %v6497
    %6562 = vst [vmem:[#allocation8 + $0x1d8] sm:$0xff] %v6498
    %6563 = vst [vmem:[#allocation8 + $0x1e0] sm:$0xff] %v6499
    %6564 = vst [vmem:[#allocation8 + $0x1e8] sm:$0xff] %v6500
    %6565 = vst [vmem:[#allocation8 + $0x1f0] sm:$0xff] %v6501
    %6566 = vst [vmem:[#allocation8 + $0x1f8] sm:$0xff] %v6502
    // Predicated region
    $region26: #{tpu_custom_call.1} parent=1 // pred_check
      _
    $region27: #{tpu_custom_call.1} parent=1 // pred_check_branch
      %6568 = sbr.rel (0) target = $region29
    $region28: #{tpu_custom_call.1} parent=1 // pred_region
      %s6570 = ssub.s32 8192, 8192
      %6571 = vsyncadd [#allocation4], %s6570
      %s6572 = sshll.u32 [#allocation8], 4
      %s6573 = int_to_ptr.vmem [resolvable:$true] %s6572
      %6578 = dma.vmem_to_hbm [thread:$0]  %s6573, 8192, %s3, [#allocation4], 512, 512, 32
    $region29: #{tpu_custom_call.1} parent=1 // pred_fallthru
      _
    // Predicated region
    $region30: #{tpu_custom_call.1} parent=1 // pred_check
      _
    $region31: #{tpu_custom_call.1} parent=1 // pred_check_branch
      %6580 = sbr.rel (0) target = $region33
    $region32: #{tpu_custom_call.1} parent=1 // pred_region
      %6581 = dma.done [#allocation4], 8192
    $region33: #{tpu_custom_call.1} parent=1 // pred_fallthru
      _
    %6582 = vsyncpa [#allocation3], 1
    %6583 = vsyncpa [#allocation6], 1
    %6584 = vsyncpa [#allocation4], 1

</llo_original>
